<compile_context>
chip_gen: v5e
topology: v5e:2x2
jax: 0.10.0
libtpu: 0.0.40
codegen_flags: <defaults>
</compile_context>

<pallas_src>
import jax
import jax.numpy as jnp
from jax.experimental import pallas as pl
from jax.experimental.pallas import tpu as pltpu

IN_CHANNELS = 8
DIMS = (IN_CHANNELS, 32, 64, 128, 256)   # fc3layer: in -> 32 -> 64 -> 128 -> 256
TILE_M = 1024                            # rows per grid step


def _silu_f32(v):
    # SiLU(v) = v * sigmoid(v) = 0.5 * v * (1 + tanh(v/2)).
    # One EUP op (tanh); the rest is VALU. Mathematically identical to the
    # sigmoid form but avoids exp-overflow and the extra reciprocal.
    return 0.5 * v * (1.0 + jnp.tanh(0.5 * v))


def _layer(h_bf16, w_ref, b_ref):
    # bf16 x bf16 MXU matmul, f32 accumulate; bias add + SiLU in f32.
    acc = jnp.dot(h_bf16, w_ref[...], preferred_element_type=jnp.float32)
    return _silu_f32(acc + b_ref[...])


def fc3layer_kernel(x_ref,
                    w1_ref, b1_ref,
                    w2_ref, b2_ref,
                    w3_ref, b3_ref,
                    w4_ref, b4_ref,
                    o_ref):
    # In-kernel cast of the streamed f32 input to bf16 (cheap VPU work).
    h = _layer(x_ref[...].astype(jnp.bfloat16), w1_ref, b1_ref)   # (TILE_M, 32)  f32
    h = _layer(h.astype(jnp.bfloat16), w2_ref, b2_ref)            # (TILE_M, 64)  f32
    h = _layer(h.astype(jnp.bfloat16), w3_ref, b3_ref)            # (TILE_M, 128) f32
    h = _layer(h.astype(jnp.bfloat16), w4_ref, b4_ref)            # (TILE_M, 256) f32
    o_ref[...] = h.astype(o_ref.dtype)


def init_params(key):
    """PyTorch nn.Linear-style init: U(-1/sqrt(fan_in), 1/sqrt(fan_in)); f32."""
    params = []
    for d_in, d_out in zip(DIMS[:-1], DIMS[1:]):
        key, kw, kb = jax.random.split(key, 3)
        bound = 1.0 / jnp.sqrt(jnp.float32(d_in))
        # Stored as (in, out): kernel computes x @ W + b == torch's x @ W.T + b.
        w = jax.random.uniform(kw, (d_in, d_out), jnp.float32, -bound, bound)
        b = jax.random.uniform(kb, (1, d_out), jnp.float32, -bound, bound)
        params += [w, b]
    return tuple(params)


@jax.jit
def fc3layer_forward(x, params):
    """fc3layer.forward: Linear/SiLU x4 over the last dim; leading dims kept."""
    lead = x.shape[:-1]
    assert x.shape[-1] == IN_CHANNELS
    xf = x.reshape(-1, IN_CHANNELS).astype(jnp.float32)   # no wrapper bf16 cast
    n = xf.shape[0]
    pad = (-n) % TILE_M
    if pad:
        # Ragged tail: pad rows (compute on pad rows is discarded below).
        xf = jnp.pad(xf, ((0, pad), (0, 0)))
    n_pad = xf.shape[0]

    w1, b1, w2, b2, w3, b3, w4, b4 = params
    wc = lambda w: w.astype(jnp.bfloat16)          # bf16 weights for the MXU (~45 KiB total)
    full = lambda a: pl.BlockSpec(a.shape, lambda i: (0, 0))

    out = pl.pallas_call(
        fc3layer_kernel,
        out_shape=jax.ShapeDtypeStruct((n_pad, DIMS[-1]), jnp.float32),
        grid=(n_pad // TILE_M,),
        in_specs=[
            pl.BlockSpec((TILE_M, IN_CHANNELS), lambda i: (i, 0)),
            full(w1), full(b1),
            full(w2), full(b2),
            full(w3), full(b3),
            full(w4), full(b4),
        ],
        out_specs=pl.BlockSpec((TILE_M, DIMS[-1]), lambda i: (i, 0)),
        compiler_params=pltpu.CompilerParams(
            dimension_semantics=("parallel",),
            vmem_limit_bytes=32 * 1024 * 1024),
    )(xf, wc(w1), b1, wc(w2), b2, wc(w3), b3, wc(w4), b4)

    return out[:n].reshape(*lead, DIMS[-1])


def fc3layer_ref(x, params):
    """Pure-JAX f32 reference for correctness check."""
    h = x.reshape(-1, IN_CHANNELS).astype(jnp.float32)
    w1, b1, w2, b2, w3, b3, w4, b4 = params
    for w, b in ((w1, b1), (w2, b2), (w3, b3), (w4, b4)):
        h = jax.nn.silu(h @ w + b)
    return h.reshape(*x.shape[:-1], DIMS[-1])


if __name__ == "__main__":
    key = jax.random.PRNGKey(0)
    kx, kp = jax.random.split(key)
    # Demo: (2, 8, 128, 8) -> 2048 rows of 8 features -> 2 parallel grid steps
    # of TILE_M=1024 (keeps both v7x TensorCores busy; no pad round-trip).
    x = jax.random.normal(kx, (2, 8, 128, IN_CHANNELS), jnp.float32)
    params = init_params(kp)

    out = fc3layer_forward(x, params)
    jax.block_until_ready(out)

    ref = fc3layer_ref(x, params)
    assert out.shape == (2, 8, 128, DIMS[-1]), out.shape
    # Tolerance loosened for bf16 MXU inputs (f32 accumulate / f32 SiLU).
    max_err = float(jnp.max(jnp.abs(out - ref)))
    assert jnp.allclose(out, ref, atol=5e-2, rtol=5e-2), max_err
    print("KERNEL_OK")
</pallas_src>

<mosaic_0001>
module attributes {stable_mosaic.version = 11 : i64} {
  func.func @fc3layer_kernel(%arg0: i32, %arg1: memref<1024x8xf32, #tpu.memory_space<vmem>>, %arg2: memref<8x32xbf16, #tpu.memory_space<vmem>>, %arg3: memref<1x32xf32, #tpu.memory_space<vmem>>, %arg4: memref<32x64xbf16, #tpu.memory_space<vmem>>, %arg5: memref<1x64xf32, #tpu.memory_space<vmem>>, %arg6: memref<64x128xbf16, #tpu.memory_space<vmem>>, %arg7: memref<1x128xf32, #tpu.memory_space<vmem>>, %arg8: memref<128x256xbf16, #tpu.memory_space<vmem>>, %arg9: memref<1x256xf32, #tpu.memory_space<vmem>>, %arg10: memref<1024x256xf32, #tpu.memory_space<vmem>>) attributes {dimension_semantics = [#tpu.dimension_semantics<parallel>], iteration_bounds = array<i64: 2>, scalar_prefetch = 0 : i64, scratch_operands = 0 : i64, tpu.core_type = #tpu.core_type<tc>, window_params = [{transform_indices = @transform_0, window_bounds = array<i64: 1024, 8>}, {pipeline_mode = #tpu.pipeline_mode<synchronous>, transform_indices = @transform_1, window_bounds = array<i64: 8, 32>}, {pipeline_mode = #tpu.pipeline_mode<synchronous>, transform_indices = @transform_2, window_bounds = array<i64: 1, 32>}, {pipeline_mode = #tpu.pipeline_mode<synchronous>, transform_indices = @transform_3, window_bounds = array<i64: 32, 64>}, {pipeline_mode = #tpu.pipeline_mode<synchronous>, transform_indices = @transform_4, window_bounds = array<i64: 1, 64>}, {pipeline_mode = #tpu.pipeline_mode<synchronous>, transform_indices = @transform_5, window_bounds = array<i64: 64, 128>}, {pipeline_mode = #tpu.pipeline_mode<synchronous>, transform_indices = @transform_6, window_bounds = array<i64: 1, 128>}, {pipeline_mode = #tpu.pipeline_mode<synchronous>, transform_indices = @transform_7, window_bounds = array<i64: 128, 256>}, {pipeline_mode = #tpu.pipeline_mode<synchronous>, transform_indices = @transform_8, window_bounds = array<i64: 1, 256>}, {transform_indices = @transform_9, window_bounds = array<i64: 1024, 256>}]} {
    %c0 = arith.constant 0 : index
    %c0_0 = arith.constant 0 : index
    %0 = vector.load %arg1[%c0, %c0_0] : memref<1024x8xf32, #tpu.memory_space<vmem>>, vector<1024x8xf32>
    %1 = arith.truncf %0 : vector<1024x8xf32> to vector<1024x8xbf16>
    %c0_1 = arith.constant 0 : index
    %c0_2 = arith.constant 0 : index
    %2 = vector.load %arg2[%c0_1, %c0_2] : memref<8x32xbf16, #tpu.memory_space<vmem>>, vector<8x32xbf16>
    %cst = arith.constant dense<0.000000e+00> : vector<1024x32xf32>
    %3 = tpu.matmul %1, %2, %cst {dimension_numbers = #tpu.dot_dimension_numbers<[1], [0], [0], [1], [0, 0, 1, 1], [], []>} : vector<1024x8xbf16>, vector<8x32xbf16>, vector<1024x32xf32> -> vector<1024x32xf32>
    %c0_3 = arith.constant 0 : index
    %c0_4 = arith.constant 0 : index
    %4 = vector.load %arg3[%c0_3, %c0_4] : memref<1x32xf32, #tpu.memory_space<vmem>>, vector<1x32xf32>
    %5 = vector.broadcast %4 : vector<1x32xf32> to vector<1024x32xf32>
    %6 = arith.addf %3, %5 : vector<1024x32xf32>
    %cst_5 = arith.constant 5.000000e-01 : f32
    %7 = vector.broadcast %cst_5 : f32 to vector<1024x32xf32>
    %8 = arith.mulf %7, %6 : vector<1024x32xf32>
    %cst_6 = arith.constant 5.000000e-01 : f32
    %9 = vector.broadcast %cst_6 : f32 to vector<1024x32xf32>
    %10 = arith.mulf %9, %6 : vector<1024x32xf32>
    %11 = math.tanh %10 : vector<1024x32xf32>
    %cst_7 = arith.constant 1.000000e+00 : f32
    %12 = vector.broadcast %cst_7 : f32 to vector<1024x32xf32>
    %13 = arith.addf %12, %11 : vector<1024x32xf32>
    %14 = arith.mulf %8, %13 : vector<1024x32xf32>
    %15 = arith.truncf %14 : vector<1024x32xf32> to vector<1024x32xbf16>
    %c0_8 = arith.constant 0 : index
    %c0_9 = arith.constant 0 : index
    %16 = vector.load %arg4[%c0_8, %c0_9] : memref<32x64xbf16, #tpu.memory_space<vmem>>, vector<32x64xbf16>
    %cst_10 = arith.constant dense<0.000000e+00> : vector<1024x64xf32>
    %17 = tpu.matmul %15, %16, %cst_10 {dimension_numbers = #tpu.dot_dimension_numbers<[1], [0], [0], [1], [0, 0, 1, 1], [], []>} : vector<1024x32xbf16>, vector<32x64xbf16>, vector<1024x64xf32> -> vector<1024x64xf32>
    %c0_11 = arith.constant 0 : index
    %c0_12 = arith.constant 0 : index
    %18 = vector.load %arg5[%c0_11, %c0_12] : memref<1x64xf32, #tpu.memory_space<vmem>>, vector<1x64xf32>
    %19 = vector.broadcast %18 : vector<1x64xf32> to vector<1024x64xf32>
    %20 = arith.addf %17, %19 : vector<1024x64xf32>
    %cst_13 = arith.constant 5.000000e-01 : f32
    %21 = vector.broadcast %cst_13 : f32 to vector<1024x64xf32>
    %22 = arith.mulf %21, %20 : vector<1024x64xf32>
    %cst_14 = arith.constant 5.000000e-01 : f32
    %23 = vector.broadcast %cst_14 : f32 to vector<1024x64xf32>
    %24 = arith.mulf %23, %20 : vector<1024x64xf32>
    %25 = math.tanh %24 : vector<1024x64xf32>
    %cst_15 = arith.constant 1.000000e+00 : f32
    %26 = vector.broadcast %cst_15 : f32 to vector<1024x64xf32>
    %27 = arith.addf %26, %25 : vector<1024x64xf32>
    %28 = arith.mulf %22, %27 : vector<1024x64xf32>
    %29 = arith.truncf %28 : vector<1024x64xf32> to vector<1024x64xbf16>
    %c0_16 = arith.constant 0 : index
    %c0_17 = arith.constant 0 : index
    %30 = vector.load %arg6[%c0_16, %c0_17] : memref<64x128xbf16, #tpu.memory_space<vmem>>, vector<64x128xbf16>
    %cst_18 = arith.constant dense<0.000000e+00> : vector<1024x128xf32>
    %31 = tpu.matmul %29, %30, %cst_18 {dimension_numbers = #tpu.dot_dimension_numbers<[1], [0], [0], [1], [0, 0, 1, 1], [], []>} : vector<1024x64xbf16>, vector<64x128xbf16>, vector<1024x128xf32> -> vector<1024x128xf32>
    %c0_19 = arith.constant 0 : index
    %c0_20 = arith.constant 0 : index
    %32 = vector.load %arg7[%c0_19, %c0_20] : memref<1x128xf32, #tpu.memory_space<vmem>>, vector<1x128xf32>
    %33 = vector.broadcast %32 : vector<1x128xf32> to vector<1024x128xf32>
    %34 = arith.addf %31, %33 : vector<1024x128xf32>
    %cst_21 = arith.constant 5.000000e-01 : f32
    %35 = vector.broadcast %cst_21 : f32 to vector<1024x128xf32>
    %36 = arith.mulf %35, %34 : vector<1024x128xf32>
    %cst_22 = arith.constant 5.000000e-01 : f32
    %37 = vector.broadcast %cst_22 : f32 to vector<1024x128xf32>
    %38 = arith.mulf %37, %34 : vector<1024x128xf32>
    %39 = math.tanh %38 : vector<1024x128xf32>
    %cst_23 = arith.constant 1.000000e+00 : f32
    %40 = vector.broadcast %cst_23 : f32 to vector<1024x128xf32>
    %41 = arith.addf %40, %39 : vector<1024x128xf32>
    %42 = arith.mulf %36, %41 : vector<1024x128xf32>
    %43 = arith.truncf %42 : vector<1024x128xf32> to vector<1024x128xbf16>
    %c0_24 = arith.constant 0 : index
    %c0_25 = arith.constant 0 : index
    %44 = vector.load %arg8[%c0_24, %c0_25] : memref<128x256xbf16, #tpu.memory_space<vmem>>, vector<128x256xbf16>
    %cst_26 = arith.constant dense<0.000000e+00> : vector<1024x256xf32>
    %45 = tpu.matmul %43, %44, %cst_26 {dimension_numbers = #tpu.dot_dimension_numbers<[1], [0], [0], [1], [0, 0, 1, 1], [], []>} : vector<1024x128xbf16>, vector<128x256xbf16>, vector<1024x256xf32> -> vector<1024x256xf32>
    %c0_27 = arith.constant 0 : index
    %c0_28 = arith.constant 0 : index
    %46 = vector.load %arg9[%c0_27, %c0_28] : memref<1x256xf32, #tpu.memory_space<vmem>>, vector<1x256xf32>
    %47 = vector.broadcast %46 : vector<1x256xf32> to vector<1024x256xf32>
    %48 = arith.addf %45, %47 : vector<1024x256xf32>
    %cst_29 = arith.constant 5.000000e-01 : f32
    %49 = vector.broadcast %cst_29 : f32 to vector<1024x256xf32>
    %50 = arith.mulf %49, %48 : vector<1024x256xf32>
    %cst_30 = arith.constant 5.000000e-01 : f32
    %51 = vector.broadcast %cst_30 : f32 to vector<1024x256xf32>
    %52 = arith.mulf %51, %48 : vector<1024x256xf32>
    %53 = math.tanh %52 : vector<1024x256xf32>
    %cst_31 = arith.constant 1.000000e+00 : f32
    %54 = vector.broadcast %cst_31 : f32 to vector<1024x256xf32>
    %55 = arith.addf %54, %53 : vector<1024x256xf32>
    %56 = arith.mulf %50, %55 : vector<1024x256xf32>
    %c0_32 = arith.constant 0 : index
    %c0_33 = arith.constant 0 : index
    %57 = vector.load %arg10[%c0_32, %c0_33] : memref<1024x256xf32, #tpu.memory_space<vmem>>, vector<1024x256xf32>
    tpu.vector_store %arg10[%c0_32, %c0_33], %56 {strides = array<i32>} : memref<1024x256xf32, #tpu.memory_space<vmem>>, vector<1024x256xf32>,
    return
  }
  func.func @transform_0(%arg0: i32) -> (i32, i32) {
    %c0_i32 = arith.constant 0 : i32
    %c0_i32_0 = arith.constant 0 : i32
    return %arg0, %c0_i32 : i32, i32
  }
  func.func @transform_1(%arg0: i32) -> (i32, i32) {
    %c0_i32 = arith.constant 0 : i32
    %c0_i32_0 = arith.constant 0 : i32
    %c0_i32_1 = arith.constant 0 : i32
    return %c0_i32, %c0_i32_0 : i32, i32
  }
  func.func @transform_2(%arg0: i32) -> (i32, i32) {
    %c0_i32 = arith.constant 0 : i32
    %c0_i32_0 = arith.constant 0 : i32
    %c0_i32_1 = arith.constant 0 : i32
    return %c0_i32, %c0_i32_0 : i32, i32
  }
  func.func @transform_3(%arg0: i32) -> (i32, i32) {
    %c0_i32 = arith.constant 0 : i32
    %c0_i32_0 = arith.constant 0 : i32
    %c0_i32_1 = arith.constant 0 : i32
    return %c0_i32, %c0_i32_0 : i32, i32
  }
  func.func @transform_4(%arg0: i32) -> (i32, i32) {
    %c0_i32 = arith.constant 0 : i32
    %c0_i32_0 = arith.constant 0 : i32
    %c0_i32_1 = arith.constant 0 : i32
    return %c0_i32, %c0_i32_0 : i32, i32
  }
  func.func @transform_5(%arg0: i32) -> (i32, i32) {
    %c0_i32 = arith.constant 0 : i32
    %c0_i32_0 = arith.constant 0 : i32
    %c0_i32_1 = arith.constant 0 : i32
    return %c0_i32, %c0_i32_0 : i32, i32
  }
  func.func @transform_6(%arg0: i32) -> (i32, i32) {
    %c0_i32 = arith.constant 0 : i32
    %c0_i32_0 = arith.constant 0 : i32
    %c0_i32_1 = arith.constant 0 : i32
    return %c0_i32, %c0_i32_0 : i32, i32
  }
  func.func @transform_7(%arg0: i32) -> (i32, i32) {
    %c0_i32 = arith.constant 0 : i32
    %c0_i32_0 = arith.constant 0 : i32
    %c0_i32_1 = arith.constant 0 : i32
    return %c0_i32, %c0_i32_0 : i32, i32
  }
  func.func @transform_8(%arg0: i32) -> (i32, i32) {
    %c0_i32 = arith.constant 0 : i32
    %c0_i32_0 = arith.constant 0 : i32
    %c0_i32_1 = arith.constant 0 : i32
    return %c0_i32, %c0_i32_0 : i32, i32
  }
  func.func @transform_9(%arg0: i32) -> (i32, i32) {
    %c0_i32 = arith.constant 0 : i32
    %c0_i32_0 = arith.constant 0 : i32
    return %arg0, %c0_i32 : i32, i32
  }
}

</mosaic_0001>

<llo_original>
// kernel: fc3layer_forward.1
$region0: #{fc3layer_forward.1}
  #allocation0 [shape = 'u32[]', space=smem, size = 0x4, offset = 0x4, fixed_abs, tag = 'smem constant byte address 0x4 - core index']
  #allocation1 [shape = 'u32[72,128]{1,0:T(1,128)}', space=vmem, size = 0x9000, scoped, tag = 'internal scratch']
  %s0 = inlined_call_operand.vmem [shape: f32[2048,8], index: 0, kind: input, shape index: {}]
  %s1 = inlined_call_operand.vmem [shape: bf16[8,32], index: 1, kind: input, shape index: {}]
  %s2 = inlined_call_operand.hbm [shape: f32[1,32], index: 2, kind: input, shape index: {}]
  %s3 = inlined_call_operand.vmem [shape: bf16[32,64], index: 3, kind: input, shape index: {}]
  %s4 = inlined_call_operand.hbm [shape: f32[1,64], index: 4, kind: input, shape index: {}]
  %s5 = inlined_call_operand.vmem [shape: bf16[64,128], index: 5, kind: input, shape index: {}]
  %s6 = inlined_call_operand.hbm [shape: f32[1,128], index: 6, kind: input, shape index: {}]
  %s7 = inlined_call_operand.vmem [shape: bf16[128,256], index: 7, kind: input, shape index: {}]
  %s8 = inlined_call_operand.hbm [shape: f32[1,256], index: 8, kind: input, shape index: {}]
  %s9 = inlined_call_operand.hbm [shape: f32[2048,256], index: 9, kind: output, shape index: {}]
  %s10 = sld [smem:[#allocation0]]
  $region85: #{fc3layer_forward.1} parent=0
    _
  %s12 = ssub.s32 1, %s10
  %s13 = scalar_select 0, %s12, %s10
  $region1: #{fc3layer_forward.1} parent=0
    #allocation2 [shape = 'u8[512]{0}', space=vmem, size = 0x400, scoped, tag = 'input window, operand 2, single buffered']
    #allocation3 [shape = 's32[2]{0}', space=sflag, size = 0x8, scoped, tag = 'scoped memory for fc3layer_forward.1']
    #allocation4 [shape = 's32[2]{0}', space=sflag, size = 0x8, scoped, tag = 'scoped memory for fc3layer_forward.1']
    #allocation5 [shape = 'u8[512]{0}', space=vmem, size = 0x400, scoped, tag = 'input window, operand 4, single buffered']
    #allocation6 [shape = 's32[1]{0}', space=sflag, size = 0x4, scoped, tag = 'scoped memory for fc3layer_forward.1']
    #allocation7 [shape = 'u8[512]{0}', space=vmem, size = 0x400, scoped, tag = 'input window, operand 6, single buffered']
    #allocation8 [shape = 'u8[1024]{0}', space=vmem, size = 0x400, scoped, tag = 'input window, operand 8, single buffered']
    #allocation9 [shape = 's32[1]{0}', space=sflag, size = 0x4, scoped, tag = 'scoped memory for fc3layer_forward.1']
    #allocation10 [shape = 'u8[2097152]{0}', space=vmem, size = 0x200000, scoped, tag = 'output window, operand 0']
    %14 = vsyncpa [#allocation3], 0
    %15 = vsyncpa [#allocation6], 0
    %16 = vsyncpa [#allocation9], 0
    %17 = vsyncpa [#allocation4], 0
    %s18 = scalar_lea.sflag [#allocation4], 1
    %19 = vsyncpa %s18, 0
    loop: start=0, step=1, limit=4
    $region2: #{fc3layer_forward.1} parent=1 // loop_pre_header
      _
    $region3: #{fc3layer_forward.1} parent=1 // loop_header
      %s21 = sphi 0, %s25
      %p22 = scmp.ge.s32.totalorder %s21, 4
      %s31 = sphi 0, %s33
      %s34 = sphi 0, %s31
      %s35 = sphi 0, %s34
      %s51 = sphi 0, %s35
      %s55 = sphi 0, %s55
      %s57 = sphi 0, %s55
      %s58 = sphi 0, %s57
      %s72 = sphi 0, %s58
      %s76 = sphi 0, %s76
      %s78 = sphi 0, %s76
      %s79 = sphi 0, %s78
      %s93 = sphi 0, %s79
      %s97 = sphi 0, %s97
      %s99 = sphi 0, %s97
      %s100 = sphi 0, %s99
      %s114 = sphi 0, %s100
      %s118 = sphi 0, %s118
      %s120 = sphi 0, %s118
      %s121 = sphi 0, %s120
      %s135 = sphi 0, %s121
      %s139 = sphi 0, %s139
      %s141 = sphi 0, %s139
      %s142 = sphi 0, %s141
      %s156 = sphi 0, %s142
      %s160 = sphi 0, %s160
      %s162 = sphi 0, %s160
      %s163 = sphi 0, %s162
      %s177 = sphi 0, %s163
      %s181 = sphi 0, %s181
      %s183 = sphi 0, %s181
      %s184 = sphi 0, %s183
      %s198 = sphi 0, %s184
      %s202 = sphi 0, %s202
      %s204 = sphi 0, %s202
      %s205 = sphi 0, %s204
      %s219 = sphi 0, %s205
      %s225 = sphi 0, %s227
      %s228 = sphi 0, %s225
      %s229 = sphi 0, %s228
      %s245 = sphi 0, %s229
    $region4: #{fc3layer_forward.1} parent=1 // loop_header_branch
      %24 = sbr.rel (%p22) target = $region8
    $region5: #{fc3layer_forward.1} parent=1 // loop_body
      %s26 = ssub.s32 %s21, 1
      %s27 = ssub.s32 %s21, 2
      %s28 = sadd.s32 %s21, 1
      %s29 = ssub.s32 %s21, %s28
      %p30 = scmp.eq.s32.totalorder %s29, 0
      %s32 = sadd.s32 %s31, 1
      %s33 = scalar_select %p30, %s31, %s32
      %p36 = pneg %p30
      %p37 = scmp.eq.s32.totalorder %s21, 1
      %p38 = por %p36, %p37
      %p39 = scmp.ne.s32.totalorder %s31, %s34
      %p40 = scmp.eq.s32.totalorder %s21, 0
      %p41 = por %p39, %p40
      %p42 = scmp.ne.s32.totalorder %s31, %s34
      %p43 = scmp.eq.s32.totalorder %s26, 1
      %p44 = por %p42, %p43
      %p45 = scmp.ne.s32.totalorder %s34, %s35
      %p46 = scmp.eq.s32.totalorder %s26, 0
      %p47 = por %p45, %p46
      %p48 = scmp.ne.s32.totalorder %s34, %s35
      %p49 = scmp.eq.s32.totalorder %s27, 1
      %p50 = por %p48, %p49
      %p52 = scmp.ne.s32.totalorder %s35, %s51
      %p53 = scmp.eq.s32.totalorder %s27, 0
      %p54 = por %p52, %p53
      %s56 = sadd.s32 %s55, 1
      %p59 = scmp.eq.s32.totalorder %s21, 1
      %p60 = scmp.ne.s32.totalorder %s55, %s57
      %p61 = scmp.eq.s32.totalorder %s21, 0
      %p62 = por %p60, %p61
      %p63 = scmp.ne.s32.totalorder %s55, %s57
      %p64 = scmp.eq.s32.totalorder %s26, 1
      %p65 = por %p63, %p64
      %p66 = scmp.ne.s32.totalorder %s57, %s58
      %p67 = scmp.eq.s32.totalorder %s26, 0
      %p68 = por %p66, %p67
      %p69 = scmp.ne.s32.totalorder %s57, %s58
      %p70 = scmp.eq.s32.totalorder %s27, 1
      %p71 = por %p69, %p70
      %p73 = scmp.ne.s32.totalorder %s58, %s72
      %p74 = scmp.eq.s32.totalorder %s27, 0
      %p75 = por %p73, %p74
      %s77 = sadd.s32 %s76, 1
      %p80 = scmp.eq.s32.totalorder %s21, 1
      %p81 = scmp.ne.s32.totalorder %s76, %s78
      %p82 = scmp.eq.s32.totalorder %s21, 0
      %p83 = por %p81, %p82
      %p84 = scmp.ne.s32.totalorder %s76, %s78
      %p85 = scmp.eq.s32.totalorder %s26, 1
      %p86 = por %p84, %p85
      %p87 = scmp.ne.s32.totalorder %s78, %s79
      %p88 = scmp.eq.s32.totalorder %s26, 0
      %p89 = por %p87, %p88
      %p90 = scmp.ne.s32.totalorder %s78, %s79
      %p91 = scmp.eq.s32.totalorder %s27, 1
      %p92 = por %p90, %p91
      %p94 = scmp.ne.s32.totalorder %s79, %s93
      %p95 = scmp.eq.s32.totalorder %s27, 0
      %p96 = por %p94, %p95
      %s98 = sadd.s32 %s97, 1
      %p101 = scmp.eq.s32.totalorder %s21, 1
      %p102 = scmp.ne.s32.totalorder %s97, %s99
      %p103 = scmp.eq.s32.totalorder %s21, 0
      %p104 = por %p102, %p103
      %p105 = scmp.ne.s32.totalorder %s97, %s99
      %p106 = scmp.eq.s32.totalorder %s26, 1
      %p107 = por %p105, %p106
      %p108 = scmp.ne.s32.totalorder %s99, %s100
      %p109 = scmp.eq.s32.totalorder %s26, 0
      %p110 = por %p108, %p109
      %p111 = scmp.ne.s32.totalorder %s99, %s100
      %p112 = scmp.eq.s32.totalorder %s27, 1
      %p113 = por %p111, %p112
      %p115 = scmp.ne.s32.totalorder %s100, %s114
      %p116 = scmp.eq.s32.totalorder %s27, 0
      %p117 = por %p115, %p116
      %s119 = sadd.s32 %s118, 1
      %p122 = scmp.eq.s32.totalorder %s21, 1
      %p123 = scmp.ne.s32.totalorder %s118, %s120
      %p124 = scmp.eq.s32.totalorder %s21, 0
      %p125 = por %p123, %p124
      %p126 = scmp.ne.s32.totalorder %s118, %s120
      %p127 = scmp.eq.s32.totalorder %s26, 1
      %p128 = por %p126, %p127
      %p129 = scmp.ne.s32.totalorder %s120, %s121
      %p130 = scmp.eq.s32.totalorder %s26, 0
      %p131 = por %p129, %p130
      %p132 = scmp.ne.s32.totalorder %s120, %s121
      %p133 = scmp.eq.s32.totalorder %s27, 1
      %p134 = por %p132, %p133
      %p136 = scmp.ne.s32.totalorder %s121, %s135
      %p137 = scmp.eq.s32.totalorder %s27, 0
      %p138 = por %p136, %p137
      %s140 = sadd.s32 %s139, 1
      %p143 = scmp.eq.s32.totalorder %s21, 1
      %p144 = scmp.ne.s32.totalorder %s139, %s141
      %p145 = scmp.eq.s32.totalorder %s21, 0
      %p146 = por %p144, %p145
      %p147 = scmp.ne.s32.totalorder %s139, %s141
      %p148 = scmp.eq.s32.totalorder %s26, 1
      %p149 = por %p147, %p148
      %p150 = scmp.ne.s32.totalorder %s141, %s142
      %p151 = scmp.eq.s32.totalorder %s26, 0
      %p152 = por %p150, %p151
      %p153 = scmp.ne.s32.totalorder %s141, %s142
      %p154 = scmp.eq.s32.totalorder %s27, 1
      %p155 = por %p153, %p154
      %p157 = scmp.ne.s32.totalorder %s142, %s156
      %p158 = scmp.eq.s32.totalorder %s27, 0
      %p159 = por %p157, %p158
      %s161 = sadd.s32 %s160, 1
      %p164 = scmp.eq.s32.totalorder %s21, 1
      %p165 = scmp.ne.s32.totalorder %s160, %s162
      %p166 = scmp.eq.s32.totalorder %s21, 0
      %p167 = por %p165, %p166
      %p168 = scmp.ne.s32.totalorder %s160, %s162
      %p169 = scmp.eq.s32.totalorder %s26, 1
      %p170 = por %p168, %p169
      %p171 = scmp.ne.s32.totalorder %s162, %s163
      %p172 = scmp.eq.s32.totalorder %s26, 0
      %p173 = por %p171, %p172
      %p174 = scmp.ne.s32.totalorder %s162, %s163
      %p175 = scmp.eq.s32.totalorder %s27, 1
      %p176 = por %p174, %p175
      %p178 = scmp.ne.s32.totalorder %s163, %s177
      %p179 = scmp.eq.s32.totalorder %s27, 0
      %p180 = por %p178, %p179
      %s182 = sadd.s32 %s181, 1
      %p185 = scmp.eq.s32.totalorder %s21, 1
      %p186 = scmp.ne.s32.totalorder %s181, %s183
      %p187 = scmp.eq.s32.totalorder %s21, 0
      %p188 = por %p186, %p187
      %p189 = scmp.ne.s32.totalorder %s181, %s183
      %p190 = scmp.eq.s32.totalorder %s26, 1
      %p191 = por %p189, %p190
      %p192 = scmp.ne.s32.totalorder %s183, %s184
      %p193 = scmp.eq.s32.totalorder %s26, 0
      %p194 = por %p192, %p193
      %p195 = scmp.ne.s32.totalorder %s183, %s184
      %p196 = scmp.eq.s32.totalorder %s27, 1
      %p197 = por %p195, %p196
      %p199 = scmp.ne.s32.totalorder %s184, %s198
      %p200 = scmp.eq.s32.totalorder %s27, 0
      %p201 = por %p199, %p200
      %s203 = sadd.s32 %s202, 1
      %p206 = scmp.eq.s32.totalorder %s21, 1
      %p207 = scmp.ne.s32.totalorder %s202, %s204
      %p208 = scmp.eq.s32.totalorder %s21, 0
      %p209 = por %p207, %p208
      %p210 = scmp.ne.s32.totalorder %s202, %s204
      %p211 = scmp.eq.s32.totalorder %s26, 1
      %p212 = por %p210, %p211
      %p213 = scmp.ne.s32.totalorder %s204, %s205
      %p214 = scmp.eq.s32.totalorder %s26, 0
      %p215 = por %p213, %p214
      %p216 = scmp.ne.s32.totalorder %s204, %s205
      %p217 = scmp.eq.s32.totalorder %s27, 1
      %p218 = por %p216, %p217
      %p220 = scmp.ne.s32.totalorder %s205, %s219
      %p221 = scmp.eq.s32.totalorder %s27, 0
      %p222 = por %p220, %p221
      %s223 = ssub.s32 %s21, %s28
      %p224 = scmp.eq.s32.totalorder %s223, 0
      %s226 = sadd.s32 %s225, 1
      %s227 = scalar_select %p224, %s225, %s226
      %p230 = pneg %p224
      %p231 = scmp.eq.s32.totalorder %s21, 1
      %p232 = por %p230, %p231
      %p233 = scmp.ne.s32.totalorder %s225, %s228
      %p234 = scmp.eq.s32.totalorder %s21, 0
      %p235 = por %p233, %p234
      %p236 = scmp.ne.s32.totalorder %s225, %s228
      %p237 = scmp.eq.s32.totalorder %s26, 1
      %p238 = por %p236, %p237
      %p239 = scmp.ne.s32.totalorder %s228, %s229
      %p240 = scmp.eq.s32.totalorder %s26, 0
      %p241 = por %p239, %p240
      %p242 = scmp.ne.s32.totalorder %s228, %s229
      %p243 = scmp.eq.s32.totalorder %s27, 1
      %p244 = por %p242, %p243
      %p246 = scmp.ne.s32.totalorder %s229, %s245
      %p247 = scmp.eq.s32.totalorder %s27, 0
      %p248 = por %p246, %p247
      %p249 = scmp.le.s32.totalorder 1, %s21
      %p250 = scmp.lt.s32.totalorder %s21, 3
      %p251 = pnand %p249, %p250
      %p252 = pneg %p251
      // Predicated region
      $region9: #{fc3layer_forward.1} parent=5 // pred_check
        _
      $region10: #{fc3layer_forward.1} parent=5 // pred_check_branch
        %254 = sbr.rel (%p251) target = $region12
      $region11: #{fc3layer_forward.1} parent=5 // pred_region
        %s255 = ssub.s32 %s21, 1
        // Predicated region
        $region13: #{fc3layer_forward.1} parent=11 // pred_check
          %p256 = pneg %p68
        $region14: #{fc3layer_forward.1} parent=11 // pred_check_branch
          %258 = sbr.rel (%p256) target = $region16
        $region15: #{fc3layer_forward.1} parent=11 // pred_region
          _
        $region16: #{fc3layer_forward.1} parent=11 // pred_fallthru
          _
        // Predicated region
        $region17: #{fc3layer_forward.1} parent=11 // pred_check
          %p259 = pneg %p89
        $region18: #{fc3layer_forward.1} parent=11 // pred_check_branch
          %261 = sbr.rel (%p259) target = $region20
        $region19: #{fc3layer_forward.1} parent=11 // pred_region
          %263 = vsyncadd [#allocation3], 0
          %s265 = sshll.u32 %s2, 4
          %s266 = int_to_ptr.hbm [resolvable:$true] %s265
          %s267 = sshll.u32 [#allocation2], 4
          %s268 = int_to_ptr.vmem [resolvable:$true] %s267
          %270 = dma.hbm_to_vmem [thread:$0]  %s266, 16, %s268, [#allocation3]
        $region20: #{fc3layer_forward.1} parent=11 // pred_fallthru
          _
        // Predicated region
        $region21: #{fc3layer_forward.1} parent=11 // pred_check
          %p271 = pneg %p110
        $region22: #{fc3layer_forward.1} parent=11 // pred_check_branch
          %273 = sbr.rel (%p271) target = $region24
        $region23: #{fc3layer_forward.1} parent=11 // pred_region
          _
        $region24: #{fc3layer_forward.1} parent=11 // pred_fallthru
          _
        // Predicated region
        $region25: #{fc3layer_forward.1} parent=11 // pred_check
          %p274 = pneg %p131
        $region26: #{fc3layer_forward.1} parent=11 // pred_check_branch
          %276 = sbr.rel (%p274) target = $region28
        $region27: #{fc3layer_forward.1} parent=11 // pred_region
          %278 = vsyncadd [#allocation6], 0
          %s280 = sshll.u32 %s4, 4
          %s281 = int_to_ptr.hbm [resolvable:$true] %s280
          %s282 = sshll.u32 [#allocation5], 4
          %s283 = int_to_ptr.vmem [resolvable:$true] %s282
          %285 = dma.hbm_to_vmem [thread:$0]  %s281, 16, %s283, [#allocation6]
        $region28: #{fc3layer_forward.1} parent=11 // pred_fallthru
          _
        // Predicated region
        $region29: #{fc3layer_forward.1} parent=11 // pred_check
          %p286 = pneg %p152
        $region30: #{fc3layer_forward.1} parent=11 // pred_check_branch
          %288 = sbr.rel (%p286) target = $region32
        $region31: #{fc3layer_forward.1} parent=11 // pred_region
          _
        $region32: #{fc3layer_forward.1} parent=11 // pred_fallthru
          _
        // Predicated region
        $region33: #{fc3layer_forward.1} parent=11 // pred_check
          %p289 = pneg %p173
        $region34: #{fc3layer_forward.1} parent=11 // pred_check_branch
          %291 = sbr.rel (%p289) target = $region36
        $region35: #{fc3layer_forward.1} parent=11 // pred_region
          %293 = vsyncadd [#allocation6], 0
          %s295 = sshll.u32 %s6, 4
          %s296 = int_to_ptr.hbm [resolvable:$true] %s295
          %s297 = sshll.u32 [#allocation7], 4
          %s298 = int_to_ptr.vmem [resolvable:$true] %s297
          %300 = dma.hbm_to_vmem [thread:$0]  %s296, 16, %s298, [#allocation6]
        $region36: #{fc3layer_forward.1} parent=11 // pred_fallthru
          _
        // Predicated region
        $region37: #{fc3layer_forward.1} parent=11 // pred_check
          %p301 = pneg %p194
        $region38: #{fc3layer_forward.1} parent=11 // pred_check_branch
          %303 = sbr.rel (%p301) target = $region40
        $region39: #{fc3layer_forward.1} parent=11 // pred_region
          _
        $region40: #{fc3layer_forward.1} parent=11 // pred_fallthru
          _
        // Predicated region
        $region41: #{fc3layer_forward.1} parent=11 // pred_check
          %p304 = pneg %p215
        $region42: #{fc3layer_forward.1} parent=11 // pred_check_branch
          %306 = sbr.rel (%p304) target = $region44
        $region43: #{fc3layer_forward.1} parent=11 // pred_region
          %308 = vsyncadd [#allocation9], 0
          %s310 = sshll.u32 %s8, 4
          %s311 = int_to_ptr.hbm [resolvable:$true] %s310
          %s312 = sshll.u32 [#allocation8], 4
          %s313 = int_to_ptr.vmem [resolvable:$true] %s312
          %315 = dma.hbm_to_vmem [thread:$0]  %s311, 32, %s313, [#allocation9]
        $region44: #{fc3layer_forward.1} parent=11 // pred_fallthru
          _
      $region12: #{fc3layer_forward.1} parent=5 // pred_fallthru
        _
      %p316 = scmp.lt.s32.totalorder %s21, 2
      // Predicated region
      $region45: #{fc3layer_forward.1} parent=5 // pred_check
        %p317 = pneg %p316
      $region46: #{fc3layer_forward.1} parent=5 // pred_check_branch
        %319 = sbr.rel (%p317) target = $region48
      $region47: #{fc3layer_forward.1} parent=5 // pred_region
        // Predicated region
        $region49: #{fc3layer_forward.1} parent=47 // pred_check
          %p320 = pneg %p41
        $region50: #{fc3layer_forward.1} parent=47 // pred_check_branch
          %322 = sbr.rel (%p320) target = $region52
        $region51: #{fc3layer_forward.1} parent=47 // pred_region
          %s323 = smul.u32 128, %s21
          %p324 = scmp.lt.s32.totalorder %s323, 255
          %s325 = scalar_select %p324, %s323, 255
          %s326 = smul.addr %s325, 8
          %s327 = scalar_lea.vmem %s0, %s326
          %s328 = smul.u32 128, %s21
        $region52: #{fc3layer_forward.1} parent=47 // pred_fallthru
          _
      $region48: #{fc3layer_forward.1} parent=5 // pred_fallthru
        _
      %p329 = scmp.le.s32.totalorder 1, %s21
      %p330 = scmp.lt.s32.totalorder %s21, 3
      %p331 = pnand %p329, %p330
      %p332 = pneg %p331
      // Predicated region
      $region53: #{fc3layer_forward.1} parent=5 // pred_check
        _
      $region54: #{fc3layer_forward.1} parent=5 // pred_check_branch
        %334 = sbr.rel (%p331) target = $region56
      $region55: #{fc3layer_forward.1} parent=5 // pred_region
        %s335 = ssub.s32 %s21, 1
        // Predicated region
        $region57: #{fc3layer_forward.1} parent=55 // pred_check
          %p336 = pneg %p89
        $region58: #{fc3layer_forward.1} parent=55 // pred_check_branch
          %338 = sbr.rel (%p336) target = $region60
        $region59: #{fc3layer_forward.1} parent=55 // pred_region
          %340 = dma.done [#allocation3], 16
        $region60: #{fc3layer_forward.1} parent=55 // pred_fallthru
          _
        // Predicated region
        $region61: #{fc3layer_forward.1} parent=55 // pred_check
          %p341 = pneg %p131
        $region62: #{fc3layer_forward.1} parent=55 // pred_check_branch
          %343 = sbr.rel (%p341) target = $region64
        $region63: #{fc3layer_forward.1} parent=55 // pred_region
          %345 = dma.done [#allocation6], 16
        $region64: #{fc3layer_forward.1} parent=55 // pred_fallthru
          _
        // Predicated region
        $region65: #{fc3layer_forward.1} parent=55 // pred_check
          %p346 = pneg %p173
        $region66: #{fc3layer_forward.1} parent=55 // pred_check_branch
          %348 = sbr.rel (%p346) target = $region68
        $region67: #{fc3layer_forward.1} parent=55 // pred_region
          %350 = dma.done [#allocation6], 16
        $region68: #{fc3layer_forward.1} parent=55 // pred_fallthru
          _
        // Predicated region
        $region69: #{fc3layer_forward.1} parent=55 // pred_check
          %p351 = pneg %p215
        $region70: #{fc3layer_forward.1} parent=55 // pred_check_branch
          %353 = sbr.rel (%p351) target = $region72
        $region71: #{fc3layer_forward.1} parent=55 // pred_region
          %355 = dma.done [#allocation9], 32
        $region72: #{fc3layer_forward.1} parent=55 // pred_fallthru
          _
        %s356 = smul.u32 128, %s26
        %p357 = scmp.lt.s32.totalorder %s356, 255
        %s358 = scalar_select %p357, %s356, 255
        %s359 = smul.addr %s358, 8
        %s360 = scalar_lea.vmem %s0, %s359
        %p361 = pneg %p47
        %p362 = pneg %p44
        %p363 = pneg %p68
        %p364 = pneg %p65
        %p365 = pneg %p89
        %p366 = pneg %p86
        %p367 = pneg %p110
        %p368 = pneg %p107
        %p369 = pneg %p131
        %p370 = pneg %p128
        %p371 = pneg %p152
        %p372 = pneg %p149
        %p373 = pneg %p173
        %p374 = pneg %p170
        %p375 = pneg %p194
        %p376 = pneg %p191
        %p377 = pneg %p215
        %p378 = pneg %p212
        %p379 = pneg %p241
        %p380 = pneg %p238
        %s381 = sand.u32 %s228, 1
        %s382 = scalar_lea.sflag [#allocation4], %s381
        %s383 = sand.u32 %s228, 1
        %s384 = smul.addr %s383, 2048
        %s385 = scalar_lea.vmem [#allocation10], %s384
        %s386 = smul.u32 128, %s26
        %p387 = scmp.lt.s32.totalorder %s386, 255
        %s388 = scalar_select %p387, %s386, 255
        %s389 = smul.addr %s388, 8
        %s390 = scalar_lea.vmem %s0, %s389
        %s391 = smul.u32 128, %s26
        %s392 = smul.u32 128, %s26
        %v394 = vld [vmem:[%s390] sm:$0xff]
        %v395 = vld [vmem:[%s390 + $0x8] sm:$0xff]
        %v396 = vld [vmem:[%s390 + $0x10] sm:$0xff]
        %v397 = vld [vmem:[%s390 + $0x18] sm:$0xff]
        %v398 = vld [vmem:[%s390 + $0x20] sm:$0xff]
        %v399 = vld [vmem:[%s390 + $0x28] sm:$0xff]
        %v400 = vld [vmem:[%s390 + $0x30] sm:$0xff]
        %v401 = vld [vmem:[%s390 + $0x38] sm:$0xff]
        %v402 = vld [vmem:[%s390 + $0x40] sm:$0xff]
        %v403 = vld [vmem:[%s390 + $0x48] sm:$0xff]
        %v404 = vld [vmem:[%s390 + $0x50] sm:$0xff]
        %v405 = vld [vmem:[%s390 + $0x58] sm:$0xff]
        %v406 = vld [vmem:[%s390 + $0x60] sm:$0xff]
        %v407 = vld [vmem:[%s390 + $0x68] sm:$0xff]
        %v408 = vld [vmem:[%s390 + $0x70] sm:$0xff]
        %v409 = vld [vmem:[%s390 + $0x78] sm:$0xff]
        %v410 = vld [vmem:[%s390 + $0x80] sm:$0xff]
        %v411 = vld [vmem:[%s390 + $0x88] sm:$0xff]
        %v412 = vld [vmem:[%s390 + $0x90] sm:$0xff]
        %v413 = vld [vmem:[%s390 + $0x98] sm:$0xff]
        %v414 = vld [vmem:[%s390 + $0xa0] sm:$0xff]
        %v415 = vld [vmem:[%s390 + $0xa8] sm:$0xff]
        %v416 = vld [vmem:[%s390 + $0xb0] sm:$0xff]
        %v417 = vld [vmem:[%s390 + $0xb8] sm:$0xff]
        %v418 = vld [vmem:[%s390 + $0xc0] sm:$0xff]
        %v419 = vld [vmem:[%s390 + $0xc8] sm:$0xff]
        %v420 = vld [vmem:[%s390 + $0xd0] sm:$0xff]
        %v421 = vld [vmem:[%s390 + $0xd8] sm:$0xff]
        %v422 = vld [vmem:[%s390 + $0xe0] sm:$0xff]
        %v423 = vld [vmem:[%s390 + $0xe8] sm:$0xff]
        %v424 = vld [vmem:[%s390 + $0xf0] sm:$0xff]
        %v425 = vld [vmem:[%s390 + $0xf8] sm:$0xff]
        %v426 = vld [vmem:[%s390 + $0x100] sm:$0xff]
        %v427 = vld [vmem:[%s390 + $0x108] sm:$0xff]
        %v428 = vld [vmem:[%s390 + $0x110] sm:$0xff]
        %v429 = vld [vmem:[%s390 + $0x118] sm:$0xff]
        %v430 = vld [vmem:[%s390 + $0x120] sm:$0xff]
        %v431 = vld [vmem:[%s390 + $0x128] sm:$0xff]
        %v432 = vld [vmem:[%s390 + $0x130] sm:$0xff]
        %v433 = vld [vmem:[%s390 + $0x138] sm:$0xff]
        %v434 = vld [vmem:[%s390 + $0x140] sm:$0xff]
        %v435 = vld [vmem:[%s390 + $0x148] sm:$0xff]
        %v436 = vld [vmem:[%s390 + $0x150] sm:$0xff]
        %v437 = vld [vmem:[%s390 + $0x158] sm:$0xff]
        %v438 = vld [vmem:[%s390 + $0x160] sm:$0xff]
        %v439 = vld [vmem:[%s390 + $0x168] sm:$0xff]
        %v440 = vld [vmem:[%s390 + $0x170] sm:$0xff]
        %v441 = vld [vmem:[%s390 + $0x178] sm:$0xff]
        %v442 = vld [vmem:[%s390 + $0x180] sm:$0xff]
        %v443 = vld [vmem:[%s390 + $0x188] sm:$0xff]
        %v444 = vld [vmem:[%s390 + $0x190] sm:$0xff]
        %v445 = vld [vmem:[%s390 + $0x198] sm:$0xff]
        %v446 = vld [vmem:[%s390 + $0x1a0] sm:$0xff]
        %v447 = vld [vmem:[%s390 + $0x1a8] sm:$0xff]
        %v448 = vld [vmem:[%s390 + $0x1b0] sm:$0xff]
        %v449 = vld [vmem:[%s390 + $0x1b8] sm:$0xff]
        %v450 = vld [vmem:[%s390 + $0x1c0] sm:$0xff]
        %v451 = vld [vmem:[%s390 + $0x1c8] sm:$0xff]
        %v452 = vld [vmem:[%s390 + $0x1d0] sm:$0xff]
        %v453 = vld [vmem:[%s390 + $0x1d8] sm:$0xff]
        %v454 = vld [vmem:[%s390 + $0x1e0] sm:$0xff]
        %v455 = vld [vmem:[%s390 + $0x1e8] sm:$0xff]
        %v456 = vld [vmem:[%s390 + $0x1f0] sm:$0xff]
        %v457 = vld [vmem:[%s390 + $0x1f8] sm:$0xff]
        %v458 = vld [vmem:[%s390 + $0x200] sm:$0xff]
        %v459 = vld [vmem:[%s390 + $0x208] sm:$0xff]
        %v460 = vld [vmem:[%s390 + $0x210] sm:$0xff]
        %v461 = vld [vmem:[%s390 + $0x218] sm:$0xff]
        %v462 = vld [vmem:[%s390 + $0x220] sm:$0xff]
        %v463 = vld [vmem:[%s390 + $0x228] sm:$0xff]
        %v464 = vld [vmem:[%s390 + $0x230] sm:$0xff]
        %v465 = vld [vmem:[%s390 + $0x238] sm:$0xff]
        %v466 = vld [vmem:[%s390 + $0x240] sm:$0xff]
        %v467 = vld [vmem:[%s390 + $0x248] sm:$0xff]
        %v468 = vld [vmem:[%s390 + $0x250] sm:$0xff]
        %v469 = vld [vmem:[%s390 + $0x258] sm:$0xff]
        %v470 = vld [vmem:[%s390 + $0x260] sm:$0xff]
        %v471 = vld [vmem:[%s390 + $0x268] sm:$0xff]
        %v472 = vld [vmem:[%s390 + $0x270] sm:$0xff]
        %v473 = vld [vmem:[%s390 + $0x278] sm:$0xff]
        %v474 = vld [vmem:[%s390 + $0x280] sm:$0xff]
        %v475 = vld [vmem:[%s390 + $0x288] sm:$0xff]
        %v476 = vld [vmem:[%s390 + $0x290] sm:$0xff]
        %v477 = vld [vmem:[%s390 + $0x298] sm:$0xff]
        %v478 = vld [vmem:[%s390 + $0x2a0] sm:$0xff]
        %v479 = vld [vmem:[%s390 + $0x2a8] sm:$0xff]
        %v480 = vld [vmem:[%s390 + $0x2b0] sm:$0xff]
        %v481 = vld [vmem:[%s390 + $0x2b8] sm:$0xff]
        %v482 = vld [vmem:[%s390 + $0x2c0] sm:$0xff]
        %v483 = vld [vmem:[%s390 + $0x2c8] sm:$0xff]
        %v484 = vld [vmem:[%s390 + $0x2d0] sm:$0xff]
        %v485 = vld [vmem:[%s390 + $0x2d8] sm:$0xff]
        %v486 = vld [vmem:[%s390 + $0x2e0] sm:$0xff]
        %v487 = vld [vmem:[%s390 + $0x2e8] sm:$0xff]
        %v488 = vld [vmem:[%s390 + $0x2f0] sm:$0xff]
        %v489 = vld [vmem:[%s390 + $0x2f8] sm:$0xff]
        %v490 = vld [vmem:[%s390 + $0x300] sm:$0xff]
        %v491 = vld [vmem:[%s390 + $0x308] sm:$0xff]
        %v492 = vld [vmem:[%s390 + $0x310] sm:$0xff]
        %v493 = vld [vmem:[%s390 + $0x318] sm:$0xff]
        %v494 = vld [vmem:[%s390 + $0x320] sm:$0xff]
        %v495 = vld [vmem:[%s390 + $0x328] sm:$0xff]
        %v496 = vld [vmem:[%s390 + $0x330] sm:$0xff]
        %v497 = vld [vmem:[%s390 + $0x338] sm:$0xff]
        %v498 = vld [vmem:[%s390 + $0x340] sm:$0xff]
        %v499 = vld [vmem:[%s390 + $0x348] sm:$0xff]
        %v500 = vld [vmem:[%s390 + $0x350] sm:$0xff]
        %v501 = vld [vmem:[%s390 + $0x358] sm:$0xff]
        %v502 = vld [vmem:[%s390 + $0x360] sm:$0xff]
        %v503 = vld [vmem:[%s390 + $0x368] sm:$0xff]
        %v504 = vld [vmem:[%s390 + $0x370] sm:$0xff]
        %v505 = vld [vmem:[%s390 + $0x378] sm:$0xff]
        %v506 = vld [vmem:[%s390 + $0x380] sm:$0xff]
        %v507 = vld [vmem:[%s390 + $0x388] sm:$0xff]
        %v508 = vld [vmem:[%s390 + $0x390] sm:$0xff]
        %v509 = vld [vmem:[%s390 + $0x398] sm:$0xff]
        %v510 = vld [vmem:[%s390 + $0x3a0] sm:$0xff]
        %v511 = vld [vmem:[%s390 + $0x3a8] sm:$0xff]
        %v512 = vld [vmem:[%s390 + $0x3b0] sm:$0xff]
        %v513 = vld [vmem:[%s390 + $0x3b8] sm:$0xff]
        %v514 = vld [vmem:[%s390 + $0x3c0] sm:$0xff]
        %v515 = vld [vmem:[%s390 + $0x3c8] sm:$0xff]
        %v516 = vld [vmem:[%s390 + $0x3d0] sm:$0xff]
        %v517 = vld [vmem:[%s390 + $0x3d8] sm:$0xff]
        %v518 = vld [vmem:[%s390 + $0x3e0] sm:$0xff]
        %v519 = vld [vmem:[%s390 + $0x3e8] sm:$0xff]
        %v520 = vld [vmem:[%s390 + $0x3f0] sm:$0xff]
        %v521 = vld [vmem:[%s390 + $0x3f8] sm:$0xff]
        %v522 = vpack.c.bf16 %v395, %v394
        %v523 = vpack.c.bf16 %v397, %v396
        %v524 = vpack.c.bf16 %v399, %v398
        %v525 = vpack.c.bf16 %v401, %v400
        %v526 = vpack.c.bf16 %v403, %v402
        %v527 = vpack.c.bf16 %v405, %v404
        %v528 = vpack.c.bf16 %v407, %v406
        %v529 = vpack.c.bf16 %v409, %v408
        %v530 = vpack.c.bf16 %v411, %v410
        %v531 = vpack.c.bf16 %v413, %v412
        %v532 = vpack.c.bf16 %v415, %v414
        %v533 = vpack.c.bf16 %v417, %v416
        %v534 = vpack.c.bf16 %v419, %v418
        %v535 = vpack.c.bf16 %v421, %v420
        %v536 = vpack.c.bf16 %v423, %v422
        %v537 = vpack.c.bf16 %v425, %v424
        %v538 = vpack.c.bf16 %v427, %v426
        %v539 = vpack.c.bf16 %v429, %v428
        %v540 = vpack.c.bf16 %v431, %v430
        %v541 = vpack.c.bf16 %v433, %v432
        %v542 = vpack.c.bf16 %v435, %v434
        %v543 = vpack.c.bf16 %v437, %v436
        %v544 = vpack.c.bf16 %v439, %v438
        %v545 = vpack.c.bf16 %v441, %v440
        %v546 = vpack.c.bf16 %v443, %v442
        %v547 = vpack.c.bf16 %v445, %v444
        %v548 = vpack.c.bf16 %v447, %v446
        %v549 = vpack.c.bf16 %v449, %v448
        %v550 = vpack.c.bf16 %v451, %v450
        %v551 = vpack.c.bf16 %v453, %v452
        %v552 = vpack.c.bf16 %v455, %v454
        %v553 = vpack.c.bf16 %v457, %v456
        %v554 = vpack.c.bf16 %v459, %v458
        %v555 = vpack.c.bf16 %v461, %v460
        %v556 = vpack.c.bf16 %v463, %v462
        %v557 = vpack.c.bf16 %v465, %v464
        %v558 = vpack.c.bf16 %v467, %v466
        %v559 = vpack.c.bf16 %v469, %v468
        %v560 = vpack.c.bf16 %v471, %v470
        %v561 = vpack.c.bf16 %v473, %v472
        %v562 = vpack.c.bf16 %v475, %v474
        %v563 = vpack.c.bf16 %v477, %v476
        %v564 = vpack.c.bf16 %v479, %v478
        %v565 = vpack.c.bf16 %v481, %v480
        %v566 = vpack.c.bf16 %v483, %v482
        %v567 = vpack.c.bf16 %v485, %v484
        %v568 = vpack.c.bf16 %v487, %v486
        %v569 = vpack.c.bf16 %v489, %v488
        %v570 = vpack.c.bf16 %v491, %v490
        %v571 = vpack.c.bf16 %v493, %v492
        %v572 = vpack.c.bf16 %v495, %v494
        %v573 = vpack.c.bf16 %v497, %v496
        %v574 = vpack.c.bf16 %v499, %v498
        %v575 = vpack.c.bf16 %v501, %v500
        %v576 = vpack.c.bf16 %v503, %v502
        %v577 = vpack.c.bf16 %v505, %v504
        %v578 = vpack.c.bf16 %v507, %v506
        %v579 = vpack.c.bf16 %v509, %v508
        %v580 = vpack.c.bf16 %v511, %v510
        %v581 = vpack.c.bf16 %v513, %v512
        %v582 = vpack.c.bf16 %v515, %v514
        %v583 = vpack.c.bf16 %v517, %v516
        %v584 = vpack.c.bf16 %v519, %v518
        %v585 = vpack.c.bf16 %v521, %v520
        %v586 = vld [vmem:[%s1] sm:$0xf]
        %v587 = vld [vmem:[#allocation2] sm:$0x1]
        %v589 = vperm.slane %v587, 0
        %vm591 = vcmask 64512
        %v593 = vsel %vm591, %v522, 0
        %v596 = vsel %vm591, %v523, 0
        %v599 = vsel %vm591, %v524, 0
        %v602 = vsel %vm591, %v525, 0
        %v605 = vsel %vm591, %v526, 0
        %v608 = vsel %vm591, %v527, 0
        %v611 = vsel %vm591, %v528, 0
        %v614 = vsel %vm591, %v529, 0
        %v617 = vsel %vm591, %v530, 0
        %v620 = vsel %vm591, %v531, 0
        %v623 = vsel %vm591, %v532, 0
        %v626 = vsel %vm591, %v533, 0
        %v629 = vsel %vm591, %v534, 0
        %v632 = vsel %vm591, %v535, 0
        %v635 = vsel %vm591, %v536, 0
        %v638 = vsel %vm591, %v537, 0
        %v641 = vsel %vm591, %v538, 0
        %v644 = vsel %vm591, %v539, 0
        %v647 = vsel %vm591, %v540, 0
        %v650 = vsel %vm591, %v541, 0
        %v653 = vsel %vm591, %v542, 0
        %v656 = vsel %vm591, %v543, 0
        %v659 = vsel %vm591, %v544, 0
        %v662 = vsel %vm591, %v545, 0
        %v665 = vsel %vm591, %v546, 0
        %v668 = vsel %vm591, %v547, 0
        %v671 = vsel %vm591, %v548, 0
        %v674 = vsel %vm591, %v549, 0
        %v677 = vsel %vm591, %v550, 0
        %v680 = vsel %vm591, %v551, 0
        %v683 = vsel %vm591, %v552, 0
        %v686 = vsel %vm591, %v553, 0
        %v689 = vsel %vm591, %v554, 0
        %v692 = vsel %vm591, %v555, 0
        %v695 = vsel %vm591, %v556, 0
        %v698 = vsel %vm591, %v557, 0
        %v701 = vsel %vm591, %v558, 0
        %v704 = vsel %vm591, %v559, 0
        %v707 = vsel %vm591, %v560, 0
        %v710 = vsel %vm591, %v561, 0
        %v713 = vsel %vm591, %v562, 0
        %v716 = vsel %vm591, %v563, 0
        %v719 = vsel %vm591, %v564, 0
        %v722 = vsel %vm591, %v565, 0
        %v725 = vsel %vm591, %v566, 0
        %v728 = vsel %vm591, %v567, 0
        %v731 = vsel %vm591, %v568, 0
        %v734 = vsel %vm591, %v569, 0
        %v737 = vsel %vm591, %v570, 0
        %v740 = vsel %vm591, %v571, 0
        %v743 = vsel %vm591, %v572, 0
        %v746 = vsel %vm591, %v573, 0
        %v749 = vsel %vm591, %v574, 0
        %v752 = vsel %vm591, %v575, 0
        %v755 = vsel %vm591, %v576, 0
        %v758 = vsel %vm591, %v577, 0
        %v761 = vsel %vm591, %v578, 0
        %v764 = vsel %vm591, %v579, 0
        %v767 = vsel %vm591, %v580, 0
        %v770 = vsel %vm591, %v581, 0
        %v773 = vsel %vm591, %v582, 0
        %v776 = vsel %vm591, %v583, 0
        %v779 = vsel %vm591, %v584, 0
        %v782 = vsel %vm591, %v585, 0
        %vm784 = vcmask 1043456
        %v786 = vsel %vm784, %v586, 0
        %788 = vmatpush.bf16.msra.mxu0 0
        %789 = vmatpush.bf16.msra.mxu0 0
        %790 = vmatpush.bf16.msra.mxu0 0
        %791 = vmatpush.bf16.msra.mxu0 0
        %792 = vmatpush.bf16.msra.mxu0 0
        %793 = vmatpush.bf16.msra.mxu0 0
        %794 = vmatpush.bf16.msra.mxu0 0
        %795 = vmatpush.bf16.msra.mxu0 %v786
        %796 = vmatmul.bf16.gmra.mxu0 %v593
        %v797 = vpop.f32.mrf.mxu0
        %v798 = vadd.f32 %v589, %v797
        %v799 = vpop.f32.mrf.mxu0
        %v800 = vadd.f32 %v589, %v799
        %801 = vmatmul.bf16.gmra.mxu0 %v596
        %v802 = vpop.f32.mrf.mxu0
        %v803 = vadd.f32 %v589, %v802
        %v804 = vpop.f32.mrf.mxu0
        %v805 = vadd.f32 %v589, %v804
        %806 = vmatmul.bf16.gmra.mxu0 %v599
        %v807 = vpop.f32.mrf.mxu0
        %v808 = vadd.f32 %v589, %v807
        %v809 = vpop.f32.mrf.mxu0
        %v810 = vadd.f32 %v589, %v809
        %811 = vmatmul.bf16.gmra.mxu0 %v602
        %v812 = vpop.f32.mrf.mxu0
        %v813 = vadd.f32 %v589, %v812
        %v814 = vpop.f32.mrf.mxu0
        %v815 = vadd.f32 %v589, %v814
        %816 = vmatmul.bf16.gmra.mxu0 %v605
        %v817 = vpop.f32.mrf.mxu0
        %v818 = vadd.f32 %v589, %v817
        %v819 = vpop.f32.mrf.mxu0
        %v820 = vadd.f32 %v589, %v819
        %821 = vmatmul.bf16.gmra.mxu0 %v608
        %v822 = vpop.f32.mrf.mxu0
        %v823 = vadd.f32 %v589, %v822
        %v824 = vpop.f32.mrf.mxu0
        %v825 = vadd.f32 %v589, %v824
        %826 = vmatmul.bf16.gmra.mxu0 %v611
        %v827 = vpop.f32.mrf.mxu0
        %v828 = vadd.f32 %v589, %v827
        %v829 = vpop.f32.mrf.mxu0
        %v830 = vadd.f32 %v589, %v829
        %831 = vmatmul.bf16.gmra.mxu0 %v614
        %v832 = vpop.f32.mrf.mxu0
        %v833 = vadd.f32 %v589, %v832
        %v834 = vpop.f32.mrf.mxu0
        %v835 = vadd.f32 %v589, %v834
        %836 = vmatmul.bf16.gmra.mxu0 %v617
        %v837 = vpop.f32.mrf.mxu0
        %v838 = vadd.f32 %v589, %v837
        %v839 = vpop.f32.mrf.mxu0
        %v840 = vadd.f32 %v589, %v839
        %841 = vmatmul.bf16.gmra.mxu0 %v620
        %v842 = vpop.f32.mrf.mxu0
        %v843 = vadd.f32 %v589, %v842
        %v844 = vpop.f32.mrf.mxu0
        %v845 = vadd.f32 %v589, %v844
        %846 = vmatmul.bf16.gmra.mxu0 %v623
        %v847 = vpop.f32.mrf.mxu0
        %v848 = vadd.f32 %v589, %v847
        %v849 = vpop.f32.mrf.mxu0
        %v850 = vadd.f32 %v589, %v849
        %851 = vmatmul.bf16.gmra.mxu0 %v626
        %v852 = vpop.f32.mrf.mxu0
        %v853 = vadd.f32 %v589, %v852
        %v854 = vpop.f32.mrf.mxu0
        %v855 = vadd.f32 %v589, %v854
        %856 = vmatmul.bf16.gmra.mxu0 %v629
        %v857 = vpop.f32.mrf.mxu0
        %v858 = vadd.f32 %v589, %v857
        %v859 = vpop.f32.mrf.mxu0
        %v860 = vadd.f32 %v589, %v859
        %861 = vmatmul.bf16.gmra.mxu0 %v632
        %v862 = vpop.f32.mrf.mxu0
        %v863 = vadd.f32 %v589, %v862
        %v864 = vpop.f32.mrf.mxu0
        %v865 = vadd.f32 %v589, %v864
        %866 = vmatmul.bf16.gmra.mxu0 %v635
        %v867 = vpop.f32.mrf.mxu0
        %v868 = vadd.f32 %v589, %v867
        %v869 = vpop.f32.mrf.mxu0
        %v870 = vadd.f32 %v589, %v869
        %871 = vmatmul.bf16.gmra.mxu0 %v638
        %v872 = vpop.f32.mrf.mxu0
        %v873 = vadd.f32 %v589, %v872
        %v874 = vpop.f32.mrf.mxu0
        %v875 = vadd.f32 %v589, %v874
        %876 = vmatmul.bf16.gmra.mxu0 %v641
        %v877 = vpop.f32.mrf.mxu0
        %v878 = vadd.f32 %v589, %v877
        %v879 = vpop.f32.mrf.mxu0
        %v880 = vadd.f32 %v589, %v879
        %881 = vmatmul.bf16.gmra.mxu0 %v644
        %v882 = vpop.f32.mrf.mxu0
        %v883 = vadd.f32 %v589, %v882
        %v884 = vpop.f32.mrf.mxu0
        %v885 = vadd.f32 %v589, %v884
        %886 = vmatmul.bf16.gmra.mxu0 %v647
        %v887 = vpop.f32.mrf.mxu0
        %v888 = vadd.f32 %v589, %v887
        %v889 = vpop.f32.mrf.mxu0
        %v890 = vadd.f32 %v589, %v889
        %891 = vmatmul.bf16.gmra.mxu0 %v650
        %v892 = vpop.f32.mrf.mxu0
        %v893 = vadd.f32 %v589, %v892
        %v894 = vpop.f32.mrf.mxu0
        %v895 = vadd.f32 %v589, %v894
        %896 = vmatmul.bf16.gmra.mxu0 %v653
        %v897 = vpop.f32.mrf.mxu0
        %v898 = vadd.f32 %v589, %v897
        %v899 = vpop.f32.mrf.mxu0
        %v900 = vadd.f32 %v589, %v899
        %901 = vmatmul.bf16.gmra.mxu0 %v656
        %v902 = vpop.f32.mrf.mxu0
        %v903 = vadd.f32 %v589, %v902
        %v904 = vpop.f32.mrf.mxu0
        %v905 = vadd.f32 %v589, %v904
        %906 = vmatmul.bf16.gmra.mxu0 %v659
        %v907 = vpop.f32.mrf.mxu0
        %v908 = vadd.f32 %v589, %v907
        %v909 = vpop.f32.mrf.mxu0
        %v910 = vadd.f32 %v589, %v909
        %911 = vmatmul.bf16.gmra.mxu0 %v662
        %v912 = vpop.f32.mrf.mxu0
        %v913 = vadd.f32 %v589, %v912
        %v914 = vpop.f32.mrf.mxu0
        %v915 = vadd.f32 %v589, %v914
        %916 = vmatmul.bf16.gmra.mxu0 %v665
        %v917 = vpop.f32.mrf.mxu0
        %v918 = vadd.f32 %v589, %v917
        %v919 = vpop.f32.mrf.mxu0
        %v920 = vadd.f32 %v589, %v919
        %921 = vmatmul.bf16.gmra.mxu0 %v668
        %v922 = vpop.f32.mrf.mxu0
        %v923 = vadd.f32 %v589, %v922
        %v924 = vpop.f32.mrf.mxu0
        %v925 = vadd.f32 %v589, %v924
        %926 = vmatmul.bf16.gmra.mxu0 %v671
        %v927 = vpop.f32.mrf.mxu0
        %v928 = vadd.f32 %v589, %v927
        %v929 = vpop.f32.mrf.mxu0
        %v930 = vadd.f32 %v589, %v929
        %931 = vmatmul.bf16.gmra.mxu0 %v674
        %v932 = vpop.f32.mrf.mxu0
        %v933 = vadd.f32 %v589, %v932
        %v934 = vpop.f32.mrf.mxu0
        %v935 = vadd.f32 %v589, %v934
        %936 = vmatmul.bf16.gmra.mxu0 %v677
        %v937 = vpop.f32.mrf.mxu0
        %v938 = vadd.f32 %v589, %v937
        %v939 = vpop.f32.mrf.mxu0
        %v940 = vadd.f32 %v589, %v939
        %941 = vmatmul.bf16.gmra.mxu0 %v680
        %v942 = vpop.f32.mrf.mxu0
        %v943 = vadd.f32 %v589, %v942
        %v944 = vpop.f32.mrf.mxu0
        %v945 = vadd.f32 %v589, %v944
        %946 = vmatmul.bf16.gmra.mxu0 %v683
        %v947 = vpop.f32.mrf.mxu0
        %v948 = vadd.f32 %v589, %v947
        %v949 = vpop.f32.mrf.mxu0
        %v950 = vadd.f32 %v589, %v949
        %951 = vmatmul.bf16.gmra.mxu0 %v686
        %v952 = vpop.f32.mrf.mxu0
        %v953 = vadd.f32 %v589, %v952
        %v954 = vpop.f32.mrf.mxu0
        %v955 = vadd.f32 %v589, %v954
        %956 = vmatmul.bf16.gmra.mxu0 %v689
        %v957 = vpop.f32.mrf.mxu0
        %v958 = vadd.f32 %v589, %v957
        %v959 = vpop.f32.mrf.mxu0
        %v960 = vadd.f32 %v589, %v959
        %961 = vmatmul.bf16.gmra.mxu0 %v692
        %v962 = vpop.f32.mrf.mxu0
        %v963 = vadd.f32 %v589, %v962
        %v964 = vpop.f32.mrf.mxu0
        %v965 = vadd.f32 %v589, %v964
        %966 = vmatmul.bf16.gmra.mxu0 %v695
        %v967 = vpop.f32.mrf.mxu0
        %v968 = vadd.f32 %v589, %v967
        %v969 = vpop.f32.mrf.mxu0
        %v970 = vadd.f32 %v589, %v969
        %971 = vmatmul.bf16.gmra.mxu0 %v698
        %v972 = vpop.f32.mrf.mxu0
        %v973 = vadd.f32 %v589, %v972
        %v974 = vpop.f32.mrf.mxu0
        %v975 = vadd.f32 %v589, %v974
        %976 = vmatmul.bf16.gmra.mxu0 %v701
        %v977 = vpop.f32.mrf.mxu0
        %v978 = vadd.f32 %v589, %v977
        %v979 = vpop.f32.mrf.mxu0
        %v980 = vadd.f32 %v589, %v979
        %981 = vmatmul.bf16.gmra.mxu0 %v704
        %v982 = vpop.f32.mrf.mxu0
        %v983 = vadd.f32 %v589, %v982
        %v984 = vpop.f32.mrf.mxu0
        %v985 = vadd.f32 %v589, %v984
        %986 = vmatmul.bf16.gmra.mxu0 %v707
        %v987 = vpop.f32.mrf.mxu0
        %v988 = vadd.f32 %v589, %v987
        %v989 = vpop.f32.mrf.mxu0
        %v990 = vadd.f32 %v589, %v989
        %991 = vmatmul.bf16.gmra.mxu0 %v710
        %v992 = vpop.f32.mrf.mxu0
        %v993 = vadd.f32 %v589, %v992
        %v994 = vpop.f32.mrf.mxu0
        %v995 = vadd.f32 %v589, %v994
        %996 = vmatmul.bf16.gmra.mxu0 %v713
        %v997 = vpop.f32.mrf.mxu0
        %v998 = vadd.f32 %v589, %v997
        %v999 = vpop.f32.mrf.mxu0
        %v1000 = vadd.f32 %v589, %v999
        %1001 = vmatmul.bf16.gmra.mxu0 %v716
        %v1002 = vpop.f32.mrf.mxu0
        %v1003 = vadd.f32 %v589, %v1002
        %v1004 = vpop.f32.mrf.mxu0
        %v1005 = vadd.f32 %v589, %v1004
        %1006 = vmatmul.bf16.gmra.mxu0 %v719
        %v1007 = vpop.f32.mrf.mxu0
        %v1008 = vadd.f32 %v589, %v1007
        %v1009 = vpop.f32.mrf.mxu0
        %v1010 = vadd.f32 %v589, %v1009
        %1011 = vmatmul.bf16.gmra.mxu0 %v722
        %v1012 = vpop.f32.mrf.mxu0
        %v1013 = vadd.f32 %v589, %v1012
        %v1014 = vpop.f32.mrf.mxu0
        %v1015 = vadd.f32 %v589, %v1014
        %1016 = vmatmul.bf16.gmra.mxu0 %v725
        %v1017 = vpop.f32.mrf.mxu0
        %v1018 = vadd.f32 %v589, %v1017
        %v1019 = vpop.f32.mrf.mxu0
        %v1020 = vadd.f32 %v589, %v1019
        %1021 = vmatmul.bf16.gmra.mxu0 %v728
        %v1022 = vpop.f32.mrf.mxu0
        %v1023 = vadd.f32 %v589, %v1022
        %v1024 = vpop.f32.mrf.mxu0
        %v1025 = vadd.f32 %v589, %v1024
        %1026 = vmatmul.bf16.gmra.mxu0 %v731
        %v1027 = vpop.f32.mrf.mxu0
        %v1028 = vadd.f32 %v589, %v1027
        %v1029 = vpop.f32.mrf.mxu0
        %v1030 = vadd.f32 %v589, %v1029
        %1031 = vmatmul.bf16.gmra.mxu0 %v734
        %v1032 = vpop.f32.mrf.mxu0
        %v1033 = vadd.f32 %v589, %v1032
        %v1034 = vpop.f32.mrf.mxu0
        %v1035 = vadd.f32 %v589, %v1034
        %1036 = vmatmul.bf16.gmra.mxu0 %v737
        %v1037 = vpop.f32.mrf.mxu0
        %v1038 = vadd.f32 %v589, %v1037
        %v1039 = vpop.f32.mrf.mxu0
        %v1040 = vadd.f32 %v589, %v1039
        %1041 = vmatmul.bf16.gmra.mxu0 %v740
        %v1042 = vpop.f32.mrf.mxu0
        %v1043 = vadd.f32 %v589, %v1042
        %v1044 = vpop.f32.mrf.mxu0
        %v1045 = vadd.f32 %v589, %v1044
        %1046 = vmatmul.bf16.gmra.mxu0 %v743
        %v1047 = vpop.f32.mrf.mxu0
        %v1048 = vadd.f32 %v589, %v1047
        %v1049 = vpop.f32.mrf.mxu0
        %v1050 = vadd.f32 %v589, %v1049
        %1051 = vmatmul.bf16.gmra.mxu0 %v746
        %v1052 = vpop.f32.mrf.mxu0
        %v1053 = vadd.f32 %v589, %v1052
        %v1054 = vpop.f32.mrf.mxu0
        %v1055 = vadd.f32 %v589, %v1054
        %1056 = vmatmul.bf16.gmra.mxu0 %v749
        %v1057 = vpop.f32.mrf.mxu0
        %v1058 = vadd.f32 %v589, %v1057
        %v1059 = vpop.f32.mrf.mxu0
        %v1060 = vadd.f32 %v589, %v1059
        %1061 = vmatmul.bf16.gmra.mxu0 %v752
        %v1062 = vpop.f32.mrf.mxu0
        %v1063 = vadd.f32 %v589, %v1062
        %v1064 = vpop.f32.mrf.mxu0
        %v1065 = vadd.f32 %v589, %v1064
        %1066 = vmatmul.bf16.gmra.mxu0 %v755
        %v1067 = vpop.f32.mrf.mxu0
        %v1068 = vadd.f32 %v589, %v1067
        %v1069 = vpop.f32.mrf.mxu0
        %v1070 = vadd.f32 %v589, %v1069
        %1071 = vmatmul.bf16.gmra.mxu0 %v758
        %v1072 = vpop.f32.mrf.mxu0
        %v1073 = vadd.f32 %v589, %v1072
        %v1074 = vpop.f32.mrf.mxu0
        %v1075 = vadd.f32 %v589, %v1074
        %1076 = vmatmul.bf16.gmra.mxu0 %v761
        %v1077 = vpop.f32.mrf.mxu0
        %v1078 = vadd.f32 %v589, %v1077
        %v1079 = vpop.f32.mrf.mxu0
        %v1080 = vadd.f32 %v589, %v1079
        %1081 = vmatmul.bf16.gmra.mxu0 %v764
        %v1082 = vpop.f32.mrf.mxu0
        %v1083 = vadd.f32 %v589, %v1082
        %v1084 = vpop.f32.mrf.mxu0
        %v1085 = vadd.f32 %v589, %v1084
        %1086 = vmatmul.bf16.gmra.mxu0 %v767
        %v1087 = vpop.f32.mrf.mxu0
        %v1088 = vadd.f32 %v589, %v1087
        %v1089 = vpop.f32.mrf.mxu0
        %v1090 = vadd.f32 %v589, %v1089
        %1091 = vmatmul.bf16.gmra.mxu0 %v770
        %v1092 = vpop.f32.mrf.mxu0
        %v1093 = vadd.f32 %v589, %v1092
        %v1094 = vpop.f32.mrf.mxu0
        %v1095 = vadd.f32 %v589, %v1094
        %1096 = vmatmul.bf16.gmra.mxu0 %v773
        %v1097 = vpop.f32.mrf.mxu0
        %v1098 = vadd.f32 %v589, %v1097
        %v1099 = vpop.f32.mrf.mxu0
        %v1100 = vadd.f32 %v589, %v1099
        %1101 = vmatmul.bf16.gmra.mxu0 %v776
        %v1102 = vpop.f32.mrf.mxu0
        %v1103 = vadd.f32 %v589, %v1102
        %v1104 = vpop.f32.mrf.mxu0
        %v1105 = vadd.f32 %v589, %v1104
        %1106 = vmatmul.bf16.gmra.mxu0 %v779
        %v1107 = vpop.f32.mrf.mxu0
        %v1108 = vadd.f32 %v589, %v1107
        %v1109 = vpop.f32.mrf.mxu0
        %v1110 = vadd.f32 %v589, %v1109
        %1111 = vmatmul.bf16.gmra.mxu0 %v782
        %v1112 = vpop.f32.mrf.mxu0
        %v1113 = vadd.f32 %v589, %v1112
        %v1114 = vpop.f32.mrf.mxu0
        %v1115 = vadd.f32 %v589, %v1114
        %1116 = vdwg.mxu0
        %v1117 = vmul.f32 %v798, 0.5
        %v1118 = vmul.f32 %v800, 0.5
        %v1119 = vmul.f32 %v803, 0.5
        %v1120 = vmul.f32 %v805, 0.5
        %v1121 = vmul.f32 %v808, 0.5
        %v1122 = vmul.f32 %v810, 0.5
        %v1123 = vmul.f32 %v813, 0.5
        %v1124 = vmul.f32 %v815, 0.5
        %v1125 = vmul.f32 %v818, 0.5
        %v1126 = vmul.f32 %v820, 0.5
        %v1127 = vmul.f32 %v823, 0.5
        %v1128 = vmul.f32 %v825, 0.5
        %v1129 = vmul.f32 %v828, 0.5
        %v1130 = vmul.f32 %v830, 0.5
        %v1131 = vmul.f32 %v833, 0.5
        %v1132 = vmul.f32 %v835, 0.5
        %v1133 = vmul.f32 %v838, 0.5
        %v1134 = vmul.f32 %v840, 0.5
        %v1135 = vmul.f32 %v843, 0.5
        %v1136 = vmul.f32 %v845, 0.5
        %v1137 = vmul.f32 %v848, 0.5
        %v1138 = vmul.f32 %v850, 0.5
        %v1139 = vmul.f32 %v853, 0.5
        %v1140 = vmul.f32 %v855, 0.5
        %v1141 = vmul.f32 %v858, 0.5
        %v1142 = vmul.f32 %v860, 0.5
        %v1143 = vmul.f32 %v863, 0.5
        %v1144 = vmul.f32 %v865, 0.5
        %v1145 = vmul.f32 %v868, 0.5
        %v1146 = vmul.f32 %v870, 0.5
        %v1147 = vmul.f32 %v873, 0.5
        %v1148 = vmul.f32 %v875, 0.5
        %v1149 = vmul.f32 %v878, 0.5
        %v1150 = vmul.f32 %v880, 0.5
        %v1151 = vmul.f32 %v883, 0.5
        %v1152 = vmul.f32 %v885, 0.5
        %v1153 = vmul.f32 %v888, 0.5
        %v1154 = vmul.f32 %v890, 0.5
        %v1155 = vmul.f32 %v893, 0.5
        %v1156 = vmul.f32 %v895, 0.5
        %v1157 = vmul.f32 %v898, 0.5
        %v1158 = vmul.f32 %v900, 0.5
        %v1159 = vmul.f32 %v903, 0.5
        %v1160 = vmul.f32 %v905, 0.5
        %v1161 = vmul.f32 %v908, 0.5
        %v1162 = vmul.f32 %v910, 0.5
        %v1163 = vmul.f32 %v913, 0.5
        %v1164 = vmul.f32 %v915, 0.5
        %v1165 = vmul.f32 %v918, 0.5
        %v1166 = vmul.f32 %v920, 0.5
        %v1167 = vmul.f32 %v923, 0.5
        %v1168 = vmul.f32 %v925, 0.5
        %v1169 = vmul.f32 %v928, 0.5
        %v1170 = vmul.f32 %v930, 0.5
        %v1171 = vmul.f32 %v933, 0.5
        %v1172 = vmul.f32 %v935, 0.5
        %v1173 = vmul.f32 %v938, 0.5
        %v1174 = vmul.f32 %v940, 0.5
        %v1175 = vmul.f32 %v943, 0.5
        %v1176 = vmul.f32 %v945, 0.5
        %v1177 = vmul.f32 %v948, 0.5
        %v1178 = vmul.f32 %v950, 0.5
        %v1179 = vmul.f32 %v953, 0.5
        %v1180 = vmul.f32 %v955, 0.5
        %v1181 = vmul.f32 %v958, 0.5
        %v1182 = vmul.f32 %v960, 0.5
        %v1183 = vmul.f32 %v963, 0.5
        %v1184 = vmul.f32 %v965, 0.5
        %v1185 = vmul.f32 %v968, 0.5
        %v1186 = vmul.f32 %v970, 0.5
        %v1187 = vmul.f32 %v973, 0.5
        %v1188 = vmul.f32 %v975, 0.5
        %v1189 = vmul.f32 %v978, 0.5
        %v1190 = vmul.f32 %v980, 0.5
        %v1191 = vmul.f32 %v983, 0.5
        %v1192 = vmul.f32 %v985, 0.5
        %v1193 = vmul.f32 %v988, 0.5
        %v1194 = vmul.f32 %v990, 0.5
        %v1195 = vmul.f32 %v993, 0.5
        %v1196 = vmul.f32 %v995, 0.5
        %v1197 = vmul.f32 %v998, 0.5
        %v1198 = vmul.f32 %v1000, 0.5
        %v1199 = vmul.f32 %v1003, 0.5
        %v1200 = vmul.f32 %v1005, 0.5
        %v1201 = vmul.f32 %v1008, 0.5
        %v1202 = vmul.f32 %v1010, 0.5
        %v1203 = vmul.f32 %v1013, 0.5
        %v1204 = vmul.f32 %v1015, 0.5
        %v1205 = vmul.f32 %v1018, 0.5
        %v1206 = vmul.f32 %v1020, 0.5
        %v1207 = vmul.f32 %v1023, 0.5
        %v1208 = vmul.f32 %v1025, 0.5
        %v1209 = vmul.f32 %v1028, 0.5
        %v1210 = vmul.f32 %v1030, 0.5
        %v1211 = vmul.f32 %v1033, 0.5
        %v1212 = vmul.f32 %v1035, 0.5
        %v1213 = vmul.f32 %v1038, 0.5
        %v1214 = vmul.f32 %v1040, 0.5
        %v1215 = vmul.f32 %v1043, 0.5
        %v1216 = vmul.f32 %v1045, 0.5
        %v1217 = vmul.f32 %v1048, 0.5
        %v1218 = vmul.f32 %v1050, 0.5
        %v1219 = vmul.f32 %v1053, 0.5
        %v1220 = vmul.f32 %v1055, 0.5
        %v1221 = vmul.f32 %v1058, 0.5
        %v1222 = vmul.f32 %v1060, 0.5
        %v1223 = vmul.f32 %v1063, 0.5
        %v1224 = vmul.f32 %v1065, 0.5
        %v1225 = vmul.f32 %v1068, 0.5
        %v1226 = vmul.f32 %v1070, 0.5
        %v1227 = vmul.f32 %v1073, 0.5
        %v1228 = vmul.f32 %v1075, 0.5
        %v1229 = vmul.f32 %v1078, 0.5
        %v1230 = vmul.f32 %v1080, 0.5
        %v1231 = vmul.f32 %v1083, 0.5
        %v1232 = vmul.f32 %v1085, 0.5
        %v1233 = vmul.f32 %v1088, 0.5
        %v1234 = vmul.f32 %v1090, 0.5
        %v1235 = vmul.f32 %v1093, 0.5
        %v1236 = vmul.f32 %v1095, 0.5
        %v1237 = vmul.f32 %v1098, 0.5
        %v1238 = vmul.f32 %v1100, 0.5
        %v1239 = vmul.f32 %v1103, 0.5
        %v1240 = vmul.f32 %v1105, 0.5
        %v1241 = vmul.f32 %v1108, 0.5
        %v1242 = vmul.f32 %v1110, 0.5
        %v1243 = vmul.f32 %v1113, 0.5
        %v1244 = vmul.f32 %v1115, 0.5
        %v1245 = vtanh.pop %v1117
        %v1246 = vtanh.pop %v1118
        %v1247 = vtanh.pop %v1119
        %v1248 = vtanh.pop %v1120
        %v1249 = vtanh.pop %v1121
        %v1250 = vtanh.pop %v1122
        %v1251 = vtanh.pop %v1123
        %v1252 = vtanh.pop %v1124
        %v1253 = vtanh.pop %v1125
        %v1254 = vtanh.pop %v1126
        %v1255 = vtanh.pop %v1127
        %v1256 = vtanh.pop %v1128
        %v1257 = vtanh.pop %v1129
        %v1258 = vtanh.pop %v1130
        %v1259 = vtanh.pop %v1131
        %v1260 = vtanh.pop %v1132
        %v1261 = vtanh.pop %v1133
        %v1262 = vtanh.pop %v1134
        %v1263 = vtanh.pop %v1135
        %v1264 = vtanh.pop %v1136
        %v1265 = vtanh.pop %v1137
        %v1266 = vtanh.pop %v1138
        %v1267 = vtanh.pop %v1139
        %v1268 = vtanh.pop %v1140
        %v1269 = vtanh.pop %v1141
        %v1270 = vtanh.pop %v1142
        %v1271 = vtanh.pop %v1143
        %v1272 = vtanh.pop %v1144
        %v1273 = vtanh.pop %v1145
        %v1274 = vtanh.pop %v1146
        %v1275 = vtanh.pop %v1147
        %v1276 = vtanh.pop %v1148
        %v1277 = vtanh.pop %v1149
        %v1278 = vtanh.pop %v1150
        %v1279 = vtanh.pop %v1151
        %v1280 = vtanh.pop %v1152
        %v1281 = vtanh.pop %v1153
        %v1282 = vtanh.pop %v1154
        %v1283 = vtanh.pop %v1155
        %v1284 = vtanh.pop %v1156
        %v1285 = vtanh.pop %v1157
        %v1286 = vtanh.pop %v1158
        %v1287 = vtanh.pop %v1159
        %v1288 = vtanh.pop %v1160
        %v1289 = vtanh.pop %v1161
        %v1290 = vtanh.pop %v1162
        %v1291 = vtanh.pop %v1163
        %v1292 = vtanh.pop %v1164
        %v1293 = vtanh.pop %v1165
        %v1294 = vtanh.pop %v1166
        %v1295 = vtanh.pop %v1167
        %v1296 = vtanh.pop %v1168
        %v1297 = vtanh.pop %v1169
        %v1298 = vtanh.pop %v1170
        %v1299 = vtanh.pop %v1171
        %v1300 = vtanh.pop %v1172
        %v1301 = vtanh.pop %v1173
        %v1302 = vtanh.pop %v1174
        %v1303 = vtanh.pop %v1175
        %v1304 = vtanh.pop %v1176
        %v1305 = vtanh.pop %v1177
        %v1306 = vtanh.pop %v1178
        %v1307 = vtanh.pop %v1179
        %v1308 = vtanh.pop %v1180
        %v1309 = vtanh.pop %v1181
        %v1310 = vtanh.pop %v1182
        %v1311 = vtanh.pop %v1183
        %v1312 = vtanh.pop %v1184
        %v1313 = vtanh.pop %v1185
        %v1314 = vtanh.pop %v1186
        %v1315 = vtanh.pop %v1187
        %v1316 = vtanh.pop %v1188
        %v1317 = vtanh.pop %v1189
        %v1318 = vtanh.pop %v1190
        %v1319 = vtanh.pop %v1191
        %v1320 = vtanh.pop %v1192
        %v1321 = vtanh.pop %v1193
        %v1322 = vtanh.pop %v1194
        %v1323 = vtanh.pop %v1195
        %v1324 = vtanh.pop %v1196
        %v1325 = vtanh.pop %v1197
        %v1326 = vtanh.pop %v1198
        %v1327 = vtanh.pop %v1199
        %v1328 = vtanh.pop %v1200
        %v1329 = vtanh.pop %v1201
        %v1330 = vtanh.pop %v1202
        %v1331 = vtanh.pop %v1203
        %v1332 = vtanh.pop %v1204
        %v1333 = vtanh.pop %v1205
        %v1334 = vtanh.pop %v1206
        %v1335 = vtanh.pop %v1207
        %v1336 = vtanh.pop %v1208
        %v1337 = vtanh.pop %v1209
        %v1338 = vtanh.pop %v1210
        %v1339 = vtanh.pop %v1211
        %v1340 = vtanh.pop %v1212
        %v1341 = vtanh.pop %v1213
        %v1342 = vtanh.pop %v1214
        %v1343 = vtanh.pop %v1215
        %v1344 = vtanh.pop %v1216
        %v1345 = vtanh.pop %v1217
        %v1346 = vtanh.pop %v1218
        %v1347 = vtanh.pop %v1219
        %v1348 = vtanh.pop %v1220
        %v1349 = vtanh.pop %v1221
        %v1350 = vtanh.pop %v1222
        %v1351 = vtanh.pop %v1223
        %v1352 = vtanh.pop %v1224
        %v1353 = vtanh.pop %v1225
        %v1354 = vtanh.pop %v1226
        %v1355 = vtanh.pop %v1227
        %v1356 = vtanh.pop %v1228
        %v1357 = vtanh.pop %v1229
        %v1358 = vtanh.pop %v1230
        %v1359 = vtanh.pop %v1231
        %v1360 = vtanh.pop %v1232
        %v1361 = vtanh.pop %v1233
        %v1362 = vtanh.pop %v1234
        %v1363 = vtanh.pop %v1235
        %v1364 = vtanh.pop %v1236
        %v1365 = vtanh.pop %v1237
        %v1366 = vtanh.pop %v1238
        %v1367 = vtanh.pop %v1239
        %v1368 = vtanh.pop %v1240
        %v1369 = vtanh.pop %v1241
        %v1370 = vtanh.pop %v1242
        %v1371 = vtanh.pop %v1243
        %v1372 = vtanh.pop %v1244
        %v1373 = vadd.f32 %v1245, 1.0
        %v1374 = vadd.f32 %v1246, 1.0
        %v1375 = vadd.f32 %v1247, 1.0
        %v1376 = vadd.f32 %v1248, 1.0
        %v1377 = vadd.f32 %v1249, 1.0
        %v1378 = vadd.f32 %v1250, 1.0
        %v1379 = vadd.f32 %v1251, 1.0
        %v1380 = vadd.f32 %v1252, 1.0
        %v1381 = vadd.f32 %v1253, 1.0
        %v1382 = vadd.f32 %v1254, 1.0
        %v1383 = vadd.f32 %v1255, 1.0
        %v1384 = vadd.f32 %v1256, 1.0
        %v1385 = vadd.f32 %v1257, 1.0
        %v1386 = vadd.f32 %v1258, 1.0
        %v1387 = vadd.f32 %v1259, 1.0
        %v1388 = vadd.f32 %v1260, 1.0
        %v1389 = vadd.f32 %v1261, 1.0
        %v1390 = vadd.f32 %v1262, 1.0
        %v1391 = vadd.f32 %v1263, 1.0
        %v1392 = vadd.f32 %v1264, 1.0
        %v1393 = vadd.f32 %v1265, 1.0
        %v1394 = vadd.f32 %v1266, 1.0
        %v1395 = vadd.f32 %v1267, 1.0
        %v1396 = vadd.f32 %v1268, 1.0
        %v1397 = vadd.f32 %v1269, 1.0
        %v1398 = vadd.f32 %v1270, 1.0
        %v1399 = vadd.f32 %v1271, 1.0
        %v1400 = vadd.f32 %v1272, 1.0
        %v1401 = vadd.f32 %v1273, 1.0
        %v1402 = vadd.f32 %v1274, 1.0
        %v1403 = vadd.f32 %v1275, 1.0
        %v1404 = vadd.f32 %v1276, 1.0
        %v1405 = vadd.f32 %v1277, 1.0
        %v1406 = vadd.f32 %v1278, 1.0
        %v1407 = vadd.f32 %v1279, 1.0
        %v1408 = vadd.f32 %v1280, 1.0
        %v1409 = vadd.f32 %v1281, 1.0
        %v1410 = vadd.f32 %v1282, 1.0
        %v1411 = vadd.f32 %v1283, 1.0
        %v1412 = vadd.f32 %v1284, 1.0
        %v1413 = vadd.f32 %v1285, 1.0
        %v1414 = vadd.f32 %v1286, 1.0
        %v1415 = vadd.f32 %v1287, 1.0
        %v1416 = vadd.f32 %v1288, 1.0
        %v1417 = vadd.f32 %v1289, 1.0
        %v1418 = vadd.f32 %v1290, 1.0
        %v1419 = vadd.f32 %v1291, 1.0
        %v1420 = vadd.f32 %v1292, 1.0
        %v1421 = vadd.f32 %v1293, 1.0
        %v1422 = vadd.f32 %v1294, 1.0
        %v1423 = vadd.f32 %v1295, 1.0
        %v1424 = vadd.f32 %v1296, 1.0
        %v1425 = vadd.f32 %v1297, 1.0
        %v1426 = vadd.f32 %v1298, 1.0
        %v1427 = vadd.f32 %v1299, 1.0
        %v1428 = vadd.f32 %v1300, 1.0
        %v1429 = vadd.f32 %v1301, 1.0
        %v1430 = vadd.f32 %v1302, 1.0
        %v1431 = vadd.f32 %v1303, 1.0
        %v1432 = vadd.f32 %v1304, 1.0
        %v1433 = vadd.f32 %v1305, 1.0
        %v1434 = vadd.f32 %v1306, 1.0
        %v1435 = vadd.f32 %v1307, 1.0
        %v1436 = vadd.f32 %v1308, 1.0
        %v1437 = vadd.f32 %v1309, 1.0
        %v1438 = vadd.f32 %v1310, 1.0
        %v1439 = vadd.f32 %v1311, 1.0
        %v1440 = vadd.f32 %v1312, 1.0
        %v1441 = vadd.f32 %v1313, 1.0
        %v1442 = vadd.f32 %v1314, 1.0
        %v1443 = vadd.f32 %v1315, 1.0
        %v1444 = vadd.f32 %v1316, 1.0
        %v1445 = vadd.f32 %v1317, 1.0
        %v1446 = vadd.f32 %v1318, 1.0
        %v1447 = vadd.f32 %v1319, 1.0
        %v1448 = vadd.f32 %v1320, 1.0
        %v1449 = vadd.f32 %v1321, 1.0
        %v1450 = vadd.f32 %v1322, 1.0
        %v1451 = vadd.f32 %v1323, 1.0
        %v1452 = vadd.f32 %v1324, 1.0
        %v1453 = vadd.f32 %v1325, 1.0
        %v1454 = vadd.f32 %v1326, 1.0
        %v1455 = vadd.f32 %v1327, 1.0
        %v1456 = vadd.f32 %v1328, 1.0
        %v1457 = vadd.f32 %v1329, 1.0
        %v1458 = vadd.f32 %v1330, 1.0
        %v1459 = vadd.f32 %v1331, 1.0
        %v1460 = vadd.f32 %v1332, 1.0
        %v1461 = vadd.f32 %v1333, 1.0
        %v1462 = vadd.f32 %v1334, 1.0
        %v1463 = vadd.f32 %v1335, 1.0
        %v1464 = vadd.f32 %v1336, 1.0
        %v1465 = vadd.f32 %v1337, 1.0
        %v1466 = vadd.f32 %v1338, 1.0
        %v1467 = vadd.f32 %v1339, 1.0
        %v1468 = vadd.f32 %v1340, 1.0
        %v1469 = vadd.f32 %v1341, 1.0
        %v1470 = vadd.f32 %v1342, 1.0
        %v1471 = vadd.f32 %v1343, 1.0
        %v1472 = vadd.f32 %v1344, 1.0
        %v1473 = vadd.f32 %v1345, 1.0
        %v1474 = vadd.f32 %v1346, 1.0
        %v1475 = vadd.f32 %v1347, 1.0
        %v1476 = vadd.f32 %v1348, 1.0
        %v1477 = vadd.f32 %v1349, 1.0
        %v1478 = vadd.f32 %v1350, 1.0
        %v1479 = vadd.f32 %v1351, 1.0
        %v1480 = vadd.f32 %v1352, 1.0
        %v1481 = vadd.f32 %v1353, 1.0
        %v1482 = vadd.f32 %v1354, 1.0
        %v1483 = vadd.f32 %v1355, 1.0
        %v1484 = vadd.f32 %v1356, 1.0
        %v1485 = vadd.f32 %v1357, 1.0
        %v1486 = vadd.f32 %v1358, 1.0
        %v1487 = vadd.f32 %v1359, 1.0
        %v1488 = vadd.f32 %v1360, 1.0
        %v1489 = vadd.f32 %v1361, 1.0
        %v1490 = vadd.f32 %v1362, 1.0
        %v1491 = vadd.f32 %v1363, 1.0
        %v1492 = vadd.f32 %v1364, 1.0
        %v1493 = vadd.f32 %v1365, 1.0
        %v1494 = vadd.f32 %v1366, 1.0
        %v1495 = vadd.f32 %v1367, 1.0
        %v1496 = vadd.f32 %v1368, 1.0
        %v1497 = vadd.f32 %v1369, 1.0
        %v1498 = vadd.f32 %v1370, 1.0
        %v1499 = vadd.f32 %v1371, 1.0
        %v1500 = vadd.f32 %v1372, 1.0
        %v1501 = vmul.f32 %v1117, %v1373
        %v1502 = vmul.f32 %v1118, %v1374
        %v1503 = vmul.f32 %v1119, %v1375
        %v1504 = vmul.f32 %v1120, %v1376
        %v1505 = vmul.f32 %v1121, %v1377
        %v1506 = vmul.f32 %v1122, %v1378
        %v1507 = vmul.f32 %v1123, %v1379
        %v1508 = vmul.f32 %v1124, %v1380
        %v1509 = vmul.f32 %v1125, %v1381
        %v1510 = vmul.f32 %v1126, %v1382
        %v1511 = vmul.f32 %v1127, %v1383
        %v1512 = vmul.f32 %v1128, %v1384
        %v1513 = vmul.f32 %v1129, %v1385
        %v1514 = vmul.f32 %v1130, %v1386
        %v1515 = vmul.f32 %v1131, %v1387
        %v1516 = vmul.f32 %v1132, %v1388
        %v1517 = vmul.f32 %v1133, %v1389
        %v1518 = vmul.f32 %v1134, %v1390
        %v1519 = vmul.f32 %v1135, %v1391
        %v1520 = vmul.f32 %v1136, %v1392
        %v1521 = vmul.f32 %v1137, %v1393
        %v1522 = vmul.f32 %v1138, %v1394
        %v1523 = vmul.f32 %v1139, %v1395
        %v1524 = vmul.f32 %v1140, %v1396
        %v1525 = vmul.f32 %v1141, %v1397
        %v1526 = vmul.f32 %v1142, %v1398
        %v1527 = vmul.f32 %v1143, %v1399
        %v1528 = vmul.f32 %v1144, %v1400
        %v1529 = vmul.f32 %v1145, %v1401
        %v1530 = vmul.f32 %v1146, %v1402
        %v1531 = vmul.f32 %v1147, %v1403
        %v1532 = vmul.f32 %v1148, %v1404
        %v1533 = vmul.f32 %v1149, %v1405
        %v1534 = vmul.f32 %v1150, %v1406
        %v1535 = vmul.f32 %v1151, %v1407
        %v1536 = vmul.f32 %v1152, %v1408
        %v1537 = vmul.f32 %v1153, %v1409
        %v1538 = vmul.f32 %v1154, %v1410
        %v1539 = vmul.f32 %v1155, %v1411
        %v1540 = vmul.f32 %v1156, %v1412
        %v1541 = vmul.f32 %v1157, %v1413
        %v1542 = vmul.f32 %v1158, %v1414
        %v1543 = vmul.f32 %v1159, %v1415
        %v1544 = vmul.f32 %v1160, %v1416
        %v1545 = vmul.f32 %v1161, %v1417
        %v1546 = vmul.f32 %v1162, %v1418
        %v1547 = vmul.f32 %v1163, %v1419
        %v1548 = vmul.f32 %v1164, %v1420
        %v1549 = vmul.f32 %v1165, %v1421
        %v1550 = vmul.f32 %v1166, %v1422
        %v1551 = vmul.f32 %v1167, %v1423
        %v1552 = vmul.f32 %v1168, %v1424
        %v1553 = vmul.f32 %v1169, %v1425
        %v1554 = vmul.f32 %v1170, %v1426
        %v1555 = vmul.f32 %v1171, %v1427
        %v1556 = vmul.f32 %v1172, %v1428
        %v1557 = vmul.f32 %v1173, %v1429
        %v1558 = vmul.f32 %v1174, %v1430
        %v1559 = vmul.f32 %v1175, %v1431
        %v1560 = vmul.f32 %v1176, %v1432
        %v1561 = vmul.f32 %v1177, %v1433
        %v1562 = vmul.f32 %v1178, %v1434
        %v1563 = vmul.f32 %v1179, %v1435
        %v1564 = vmul.f32 %v1180, %v1436
        %v1565 = vmul.f32 %v1181, %v1437
        %v1566 = vmul.f32 %v1182, %v1438
        %v1567 = vmul.f32 %v1183, %v1439
        %v1568 = vmul.f32 %v1184, %v1440
        %v1569 = vmul.f32 %v1185, %v1441
        %v1570 = vmul.f32 %v1186, %v1442
        %v1571 = vmul.f32 %v1187, %v1443
        %v1572 = vmul.f32 %v1188, %v1444
        %v1573 = vmul.f32 %v1189, %v1445
        %v1574 = vmul.f32 %v1190, %v1446
        %v1575 = vmul.f32 %v1191, %v1447
        %v1576 = vmul.f32 %v1192, %v1448
        %v1577 = vmul.f32 %v1193, %v1449
        %v1578 = vmul.f32 %v1194, %v1450
        %v1579 = vmul.f32 %v1195, %v1451
        %v1580 = vmul.f32 %v1196, %v1452
        %v1581 = vmul.f32 %v1197, %v1453
        %v1582 = vmul.f32 %v1198, %v1454
        %v1583 = vmul.f32 %v1199, %v1455
        %v1584 = vmul.f32 %v1200, %v1456
        %v1585 = vmul.f32 %v1201, %v1457
        %v1586 = vmul.f32 %v1202, %v1458
        %v1587 = vmul.f32 %v1203, %v1459
        %v1588 = vmul.f32 %v1204, %v1460
        %v1589 = vmul.f32 %v1205, %v1461
        %v1590 = vmul.f32 %v1206, %v1462
        %v1591 = vmul.f32 %v1207, %v1463
        %v1592 = vmul.f32 %v1208, %v1464
        %v1593 = vmul.f32 %v1209, %v1465
        %v1594 = vmul.f32 %v1210, %v1466
        %v1595 = vmul.f32 %v1211, %v1467
        %v1596 = vmul.f32 %v1212, %v1468
        %v1597 = vmul.f32 %v1213, %v1469
        %v1598 = vmul.f32 %v1214, %v1470
        %v1599 = vmul.f32 %v1215, %v1471
        %v1600 = vmul.f32 %v1216, %v1472
        %v1601 = vmul.f32 %v1217, %v1473
        %v1602 = vmul.f32 %v1218, %v1474
        %v1603 = vmul.f32 %v1219, %v1475
        %v1604 = vmul.f32 %v1220, %v1476
        %v1605 = vmul.f32 %v1221, %v1477
        %v1606 = vmul.f32 %v1222, %v1478
        %v1607 = vmul.f32 %v1223, %v1479
        %v1608 = vmul.f32 %v1224, %v1480
        %v1609 = vmul.f32 %v1225, %v1481
        %v1610 = vmul.f32 %v1226, %v1482
        %v1611 = vmul.f32 %v1227, %v1483
        %v1612 = vmul.f32 %v1228, %v1484
        %v1613 = vmul.f32 %v1229, %v1485
        %v1614 = vmul.f32 %v1230, %v1486
        %v1615 = vmul.f32 %v1231, %v1487
        %v1616 = vmul.f32 %v1232, %v1488
        %v1617 = vmul.f32 %v1233, %v1489
        %v1618 = vmul.f32 %v1234, %v1490
        %v1619 = vmul.f32 %v1235, %v1491
        %v1620 = vmul.f32 %v1236, %v1492
        %v1621 = vmul.f32 %v1237, %v1493
        %v1622 = vmul.f32 %v1238, %v1494
        %v1623 = vmul.f32 %v1239, %v1495
        %v1624 = vmul.f32 %v1240, %v1496
        %v1625 = vmul.f32 %v1241, %v1497
        %v1626 = vmul.f32 %v1242, %v1498
        %v1627 = vmul.f32 %v1243, %v1499
        %v1628 = vmul.f32 %v1244, %v1500
        %v1629 = vpack.c.bf16 %v1502, %v1501
        %v1630 = vpack.c.bf16 %v1504, %v1503
        %v1631 = vpack.c.bf16 %v1506, %v1505
        %v1632 = vpack.c.bf16 %v1508, %v1507
        %v1633 = vpack.c.bf16 %v1510, %v1509
        %v1634 = vpack.c.bf16 %v1512, %v1511
        %v1635 = vpack.c.bf16 %v1514, %v1513
        %v1636 = vpack.c.bf16 %v1516, %v1515
        %v1637 = vpack.c.bf16 %v1518, %v1517
        %v1638 = vpack.c.bf16 %v1520, %v1519
        %v1639 = vpack.c.bf16 %v1522, %v1521
        %v1640 = vpack.c.bf16 %v1524, %v1523
        %v1641 = vpack.c.bf16 %v1526, %v1525
        %v1642 = vpack.c.bf16 %v1528, %v1527
        %v1643 = vpack.c.bf16 %v1530, %v1529
        %v1644 = vpack.c.bf16 %v1532, %v1531
        %v1645 = vpack.c.bf16 %v1534, %v1533
        %v1646 = vpack.c.bf16 %v1536, %v1535
        %v1647 = vpack.c.bf16 %v1538, %v1537
        %v1648 = vpack.c.bf16 %v1540, %v1539
        %v1649 = vpack.c.bf16 %v1542, %v1541
        %v1650 = vpack.c.bf16 %v1544, %v1543
        %v1651 = vpack.c.bf16 %v1546, %v1545
        %v1652 = vpack.c.bf16 %v1548, %v1547
        %v1653 = vpack.c.bf16 %v1550, %v1549
        %v1654 = vpack.c.bf16 %v1552, %v1551
        %v1655 = vpack.c.bf16 %v1554, %v1553
        %v1656 = vpack.c.bf16 %v1556, %v1555
        %v1657 = vpack.c.bf16 %v1558, %v1557
        %v1658 = vpack.c.bf16 %v1560, %v1559
        %v1659 = vpack.c.bf16 %v1562, %v1561
        %v1660 = vpack.c.bf16 %v1564, %v1563
        %v1661 = vpack.c.bf16 %v1566, %v1565
        %v1662 = vpack.c.bf16 %v1568, %v1567
        %v1663 = vpack.c.bf16 %v1570, %v1569
        %v1664 = vpack.c.bf16 %v1572, %v1571
        %v1665 = vpack.c.bf16 %v1574, %v1573
        %v1666 = vpack.c.bf16 %v1576, %v1575
        %v1667 = vpack.c.bf16 %v1578, %v1577
        %v1668 = vpack.c.bf16 %v1580, %v1579
        %v1669 = vpack.c.bf16 %v1582, %v1581
        %v1670 = vpack.c.bf16 %v1584, %v1583
        %v1671 = vpack.c.bf16 %v1586, %v1585
        %v1672 = vpack.c.bf16 %v1588, %v1587
        %v1673 = vpack.c.bf16 %v1590, %v1589
        %v1674 = vpack.c.bf16 %v1592, %v1591
        %v1675 = vpack.c.bf16 %v1594, %v1593
        %v1676 = vpack.c.bf16 %v1596, %v1595
        %v1677 = vpack.c.bf16 %v1598, %v1597
        %v1678 = vpack.c.bf16 %v1600, %v1599
        %v1679 = vpack.c.bf16 %v1602, %v1601
        %v1680 = vpack.c.bf16 %v1604, %v1603
        %v1681 = vpack.c.bf16 %v1606, %v1605
        %v1682 = vpack.c.bf16 %v1608, %v1607
        %v1683 = vpack.c.bf16 %v1610, %v1609
        %v1684 = vpack.c.bf16 %v1612, %v1611
        %v1685 = vpack.c.bf16 %v1614, %v1613
        %v1686 = vpack.c.bf16 %v1616, %v1615
        %v1687 = vpack.c.bf16 %v1618, %v1617
        %v1688 = vpack.c.bf16 %v1620, %v1619
        %v1689 = vpack.c.bf16 %v1622, %v1621
        %v1690 = vpack.c.bf16 %v1624, %v1623
        %v1691 = vpack.c.bf16 %v1626, %v1625
        %v1692 = vpack.c.bf16 %v1628, %v1627
        %v1693 = vld [vmem:[%s3] sm:$0xf]
        %v1694 = vld [vmem:[%s3 + $0x4] sm:$0xf]
        %v1695 = vld [vmem:[%s3 + $0x8] sm:$0xf]
        %v1696 = vld [vmem:[%s3 + $0xc] sm:$0xf]
        %v1697 = vld [vmem:[#allocation5] sm:$0x1]
        %v1699 = vperm.slane %v1697, 0
        %v1705 = vunpack.c.l.b16 %v1693
        %v1706 = vunpack.c.l.b16 %v1694
        %v1707 = vunpack.c.l.b16 %v1695
        %v1708 = vunpack.c.l.b16 %v1696
        %v1709 = vpack.c.b16 %v1706, %v1705
        %v1710 = vpack.c.b16 %v1708, %v1707
        %vm1713 = vcmask 261120
        %v1715 = vsel %vm1713, %v1629, 0
        %v1718 = vsel %vm1713, %v1630, 0
        %v1721 = vsel %vm1713, %v1631, 0
        %v1724 = vsel %vm1713, %v1632, 0
        %v1727 = vsel %vm1713, %v1633, 0
        %v1730 = vsel %vm1713, %v1634, 0
        %v1733 = vsel %vm1713, %v1635, 0
        %v1736 = vsel %vm1713, %v1636, 0
        %v1739 = vsel %vm1713, %v1637, 0
        %v1742 = vsel %vm1713, %v1638, 0
        %v1745 = vsel %vm1713, %v1639, 0
        %v1748 = vsel %vm1713, %v1640, 0
        %v1751 = vsel %vm1713, %v1641, 0
        %v1754 = vsel %vm1713, %v1642, 0
        %v1757 = vsel %vm1713, %v1643, 0
        %v1760 = vsel %vm1713, %v1644, 0
        %v1763 = vsel %vm1713, %v1645, 0
        %v1766 = vsel %vm1713, %v1646, 0
        %v1769 = vsel %vm1713, %v1647, 0
        %v1772 = vsel %vm1713, %v1648, 0
        %v1775 = vsel %vm1713, %v1649, 0
        %v1778 = vsel %vm1713, %v1650, 0
        %v1781 = vsel %vm1713, %v1651, 0
        %v1784 = vsel %vm1713, %v1652, 0
        %v1787 = vsel %vm1713, %v1653, 0
        %v1790 = vsel %vm1713, %v1654, 0
        %v1793 = vsel %vm1713, %v1655, 0
        %v1796 = vsel %vm1713, %v1656, 0
        %v1799 = vsel %vm1713, %v1657, 0
        %v1802 = vsel %vm1713, %v1658, 0
        %v1805 = vsel %vm1713, %v1659, 0
        %v1808 = vsel %vm1713, %v1660, 0
        %v1811 = vsel %vm1713, %v1661, 0
        %v1814 = vsel %vm1713, %v1662, 0
        %v1817 = vsel %vm1713, %v1663, 0
        %v1820 = vsel %vm1713, %v1664, 0
        %v1823 = vsel %vm1713, %v1665, 0
        %v1826 = vsel %vm1713, %v1666, 0
        %v1829 = vsel %vm1713, %v1667, 0
        %v1832 = vsel %vm1713, %v1668, 0
        %v1835 = vsel %vm1713, %v1669, 0
        %v1838 = vsel %vm1713, %v1670, 0
        %v1841 = vsel %vm1713, %v1671, 0
        %v1844 = vsel %vm1713, %v1672, 0
        %v1847 = vsel %vm1713, %v1673, 0
        %v1850 = vsel %vm1713, %v1674, 0
        %v1853 = vsel %vm1713, %v1675, 0
        %v1856 = vsel %vm1713, %v1676, 0
        %v1859 = vsel %vm1713, %v1677, 0
        %v1862 = vsel %vm1713, %v1678, 0
        %v1865 = vsel %vm1713, %v1679, 0
        %v1868 = vsel %vm1713, %v1680, 0
        %v1871 = vsel %vm1713, %v1681, 0
        %v1874 = vsel %vm1713, %v1682, 0
        %v1877 = vsel %vm1713, %v1683, 0
        %v1880 = vsel %vm1713, %v1684, 0
        %v1883 = vsel %vm1713, %v1685, 0
        %v1886 = vsel %vm1713, %v1686, 0
        %v1889 = vsel %vm1713, %v1687, 0
        %v1892 = vsel %vm1713, %v1688, 0
        %v1895 = vsel %vm1713, %v1689, 0
        %v1898 = vsel %vm1713, %v1690, 0
        %v1901 = vsel %vm1713, %v1691, 0
        %v1904 = vsel %vm1713, %v1692, 0
        %1906 = vmatpush.bf16.msra.mxu0 0
        %1907 = vmatpush.bf16.msra.mxu0 0
        %1908 = vmatpush.bf16.msra.mxu0 0
        %1909 = vmatpush.bf16.msra.mxu0 0
        %1910 = vmatpush.bf16.msra.mxu0 0
        %1911 = vmatpush.bf16.msra.mxu0 0
        %1912 = vmatpush.bf16.msra.mxu0 %v1710
        %1913 = vmatpush.bf16.msra.mxu0 %v1709
        %1914 = vmatmul.bf16.gmra.mxu0 %v1715
        %v1915 = vpop.f32.mrf.mxu0
        %v1916 = vadd.f32 %v1699, %v1915
        %v1917 = vpop.f32.mrf.mxu0
        %v1918 = vadd.f32 %v1699, %v1917
        %1919 = vmatmul.bf16.gmra.mxu0 %v1718
        %v1920 = vpop.f32.mrf.mxu0
        %v1921 = vadd.f32 %v1699, %v1920
        %v1922 = vpop.f32.mrf.mxu0
        %v1923 = vadd.f32 %v1699, %v1922
        %1924 = vmatmul.bf16.gmra.mxu0 %v1721
        %v1925 = vpop.f32.mrf.mxu0
        %v1926 = vadd.f32 %v1699, %v1925
        %v1927 = vpop.f32.mrf.mxu0
        %v1928 = vadd.f32 %v1699, %v1927
        %1929 = vmatmul.bf16.gmra.mxu0 %v1724
        %v1930 = vpop.f32.mrf.mxu0
        %v1931 = vadd.f32 %v1699, %v1930
        %v1932 = vpop.f32.mrf.mxu0
        %v1933 = vadd.f32 %v1699, %v1932
        %1934 = vmatmul.bf16.gmra.mxu0 %v1727
        %v1935 = vpop.f32.mrf.mxu0
        %v1936 = vadd.f32 %v1699, %v1935
        %v1937 = vpop.f32.mrf.mxu0
        %v1938 = vadd.f32 %v1699, %v1937
        %1939 = vmatmul.bf16.gmra.mxu0 %v1730
        %v1940 = vpop.f32.mrf.mxu0
        %v1941 = vadd.f32 %v1699, %v1940
        %v1942 = vpop.f32.mrf.mxu0
        %v1943 = vadd.f32 %v1699, %v1942
        %1944 = vmatmul.bf16.gmra.mxu0 %v1733
        %v1945 = vpop.f32.mrf.mxu0
        %v1946 = vadd.f32 %v1699, %v1945
        %v1947 = vpop.f32.mrf.mxu0
        %v1948 = vadd.f32 %v1699, %v1947
        %1949 = vmatmul.bf16.gmra.mxu0 %v1736
        %v1950 = vpop.f32.mrf.mxu0
        %v1951 = vadd.f32 %v1699, %v1950
        %v1952 = vpop.f32.mrf.mxu0
        %v1953 = vadd.f32 %v1699, %v1952
        %1954 = vmatmul.bf16.gmra.mxu0 %v1739
        %v1955 = vpop.f32.mrf.mxu0
        %v1956 = vadd.f32 %v1699, %v1955
        %v1957 = vpop.f32.mrf.mxu0
        %v1958 = vadd.f32 %v1699, %v1957
        %1959 = vmatmul.bf16.gmra.mxu0 %v1742
        %v1960 = vpop.f32.mrf.mxu0
        %v1961 = vadd.f32 %v1699, %v1960
        %v1962 = vpop.f32.mrf.mxu0
        %v1963 = vadd.f32 %v1699, %v1962
        %1964 = vmatmul.bf16.gmra.mxu0 %v1745
        %v1965 = vpop.f32.mrf.mxu0
        %v1966 = vadd.f32 %v1699, %v1965
        %v1967 = vpop.f32.mrf.mxu0
        %v1968 = vadd.f32 %v1699, %v1967
        %1969 = vmatmul.bf16.gmra.mxu0 %v1748
        %v1970 = vpop.f32.mrf.mxu0
        %v1971 = vadd.f32 %v1699, %v1970
        %v1972 = vpop.f32.mrf.mxu0
        %v1973 = vadd.f32 %v1699, %v1972
        %1974 = vmatmul.bf16.gmra.mxu0 %v1751
        %v1975 = vpop.f32.mrf.mxu0
        %v1976 = vadd.f32 %v1699, %v1975
        %v1977 = vpop.f32.mrf.mxu0
        %v1978 = vadd.f32 %v1699, %v1977
        %1979 = vmatmul.bf16.gmra.mxu0 %v1754
        %v1980 = vpop.f32.mrf.mxu0
        %v1981 = vadd.f32 %v1699, %v1980
        %v1982 = vpop.f32.mrf.mxu0
        %v1983 = vadd.f32 %v1699, %v1982
        %1984 = vmatmul.bf16.gmra.mxu0 %v1757
        %v1985 = vpop.f32.mrf.mxu0
        %v1986 = vadd.f32 %v1699, %v1985
        %v1987 = vpop.f32.mrf.mxu0
        %v1988 = vadd.f32 %v1699, %v1987
        %1989 = vmatmul.bf16.gmra.mxu0 %v1760
        %v1990 = vpop.f32.mrf.mxu0
        %v1991 = vadd.f32 %v1699, %v1990
        %v1992 = vpop.f32.mrf.mxu0
        %v1993 = vadd.f32 %v1699, %v1992
        %1994 = vmatmul.bf16.gmra.mxu0 %v1763
        %v1995 = vpop.f32.mrf.mxu0
        %v1996 = vadd.f32 %v1699, %v1995
        %v1997 = vpop.f32.mrf.mxu0
        %v1998 = vadd.f32 %v1699, %v1997
        %1999 = vmatmul.bf16.gmra.mxu0 %v1766
        %v2000 = vpop.f32.mrf.mxu0
        %v2001 = vadd.f32 %v1699, %v2000
        %v2002 = vpop.f32.mrf.mxu0
        %v2003 = vadd.f32 %v1699, %v2002
        %2004 = vmatmul.bf16.gmra.mxu0 %v1769
        %v2005 = vpop.f32.mrf.mxu0
        %v2006 = vadd.f32 %v1699, %v2005
        %v2007 = vpop.f32.mrf.mxu0
        %v2008 = vadd.f32 %v1699, %v2007
        %2009 = vmatmul.bf16.gmra.mxu0 %v1772
        %v2010 = vpop.f32.mrf.mxu0
        %v2011 = vadd.f32 %v1699, %v2010
        %v2012 = vpop.f32.mrf.mxu0
        %v2013 = vadd.f32 %v1699, %v2012
        %2014 = vmatmul.bf16.gmra.mxu0 %v1775
        %v2015 = vpop.f32.mrf.mxu0
        %v2016 = vadd.f32 %v1699, %v2015
        %v2017 = vpop.f32.mrf.mxu0
        %v2018 = vadd.f32 %v1699, %v2017
        %2019 = vmatmul.bf16.gmra.mxu0 %v1778
        %v2020 = vpop.f32.mrf.mxu0
        %v2021 = vadd.f32 %v1699, %v2020
        %v2022 = vpop.f32.mrf.mxu0
        %v2023 = vadd.f32 %v1699, %v2022
        %2024 = vmatmul.bf16.gmra.mxu0 %v1781
        %v2025 = vpop.f32.mrf.mxu0
        %v2026 = vadd.f32 %v1699, %v2025
        %v2027 = vpop.f32.mrf.mxu0
        %v2028 = vadd.f32 %v1699, %v2027
        %2029 = vmatmul.bf16.gmra.mxu0 %v1784
        %v2030 = vpop.f32.mrf.mxu0
        %v2031 = vadd.f32 %v1699, %v2030
        %v2032 = vpop.f32.mrf.mxu0
        %v2033 = vadd.f32 %v1699, %v2032
        %2034 = vmatmul.bf16.gmra.mxu0 %v1787
        %v2035 = vpop.f32.mrf.mxu0
        %v2036 = vadd.f32 %v1699, %v2035
        %v2037 = vpop.f32.mrf.mxu0
        %v2038 = vadd.f32 %v1699, %v2037
        %2039 = vmatmul.bf16.gmra.mxu0 %v1790
        %v2040 = vpop.f32.mrf.mxu0
        %v2041 = vadd.f32 %v1699, %v2040
        %v2042 = vpop.f32.mrf.mxu0
        %v2043 = vadd.f32 %v1699, %v2042
        %2044 = vmatmul.bf16.gmra.mxu0 %v1793
        %v2045 = vpop.f32.mrf.mxu0
        %v2046 = vadd.f32 %v1699, %v2045
        %v2047 = vpop.f32.mrf.mxu0
        %v2048 = vadd.f32 %v1699, %v2047
        %2049 = vmatmul.bf16.gmra.mxu0 %v1796
        %v2050 = vpop.f32.mrf.mxu0
        %v2051 = vadd.f32 %v1699, %v2050
        %v2052 = vpop.f32.mrf.mxu0
        %v2053 = vadd.f32 %v1699, %v2052
        %2054 = vmatmul.bf16.gmra.mxu0 %v1799
        %v2055 = vpop.f32.mrf.mxu0
        %v2056 = vadd.f32 %v1699, %v2055
        %v2057 = vpop.f32.mrf.mxu0
        %v2058 = vadd.f32 %v1699, %v2057
        %2059 = vmatmul.bf16.gmra.mxu0 %v1802
        %v2060 = vpop.f32.mrf.mxu0
        %v2061 = vadd.f32 %v1699, %v2060
        %v2062 = vpop.f32.mrf.mxu0
        %v2063 = vadd.f32 %v1699, %v2062
        %2064 = vmatmul.bf16.gmra.mxu0 %v1805
        %v2065 = vpop.f32.mrf.mxu0
        %v2066 = vadd.f32 %v1699, %v2065
        %v2067 = vpop.f32.mrf.mxu0
        %v2068 = vadd.f32 %v1699, %v2067
        %2069 = vmatmul.bf16.gmra.mxu0 %v1808
        %v2070 = vpop.f32.mrf.mxu0
        %v2071 = vadd.f32 %v1699, %v2070
        %v2072 = vpop.f32.mrf.mxu0
        %v2073 = vadd.f32 %v1699, %v2072
        %2074 = vmatmul.bf16.gmra.mxu0 %v1811
        %v2075 = vpop.f32.mrf.mxu0
        %v2076 = vadd.f32 %v1699, %v2075
        %v2077 = vpop.f32.mrf.mxu0
        %v2078 = vadd.f32 %v1699, %v2077
        %2079 = vmatmul.bf16.gmra.mxu0 %v1814
        %v2080 = vpop.f32.mrf.mxu0
        %v2081 = vadd.f32 %v1699, %v2080
        %v2082 = vpop.f32.mrf.mxu0
        %v2083 = vadd.f32 %v1699, %v2082
        %2084 = vmatmul.bf16.gmra.mxu0 %v1817
        %v2085 = vpop.f32.mrf.mxu0
        %v2086 = vadd.f32 %v1699, %v2085
        %v2087 = vpop.f32.mrf.mxu0
        %v2088 = vadd.f32 %v1699, %v2087
        %2089 = vmatmul.bf16.gmra.mxu0 %v1820
        %v2090 = vpop.f32.mrf.mxu0
        %v2091 = vadd.f32 %v1699, %v2090
        %v2092 = vpop.f32.mrf.mxu0
        %v2093 = vadd.f32 %v1699, %v2092
        %2094 = vmatmul.bf16.gmra.mxu0 %v1823
        %v2095 = vpop.f32.mrf.mxu0
        %v2096 = vadd.f32 %v1699, %v2095
        %v2097 = vpop.f32.mrf.mxu0
        %v2098 = vadd.f32 %v1699, %v2097
        %2099 = vmatmul.bf16.gmra.mxu0 %v1826
        %v2100 = vpop.f32.mrf.mxu0
        %v2101 = vadd.f32 %v1699, %v2100
        %v2102 = vpop.f32.mrf.mxu0
        %v2103 = vadd.f32 %v1699, %v2102
        %2104 = vmatmul.bf16.gmra.mxu0 %v1829
        %v2105 = vpop.f32.mrf.mxu0
        %v2106 = vadd.f32 %v1699, %v2105
        %v2107 = vpop.f32.mrf.mxu0
        %v2108 = vadd.f32 %v1699, %v2107
        %2109 = vmatmul.bf16.gmra.mxu0 %v1832
        %v2110 = vpop.f32.mrf.mxu0
        %v2111 = vadd.f32 %v1699, %v2110
        %v2112 = vpop.f32.mrf.mxu0
        %v2113 = vadd.f32 %v1699, %v2112
        %2114 = vmatmul.bf16.gmra.mxu0 %v1835
        %v2115 = vpop.f32.mrf.mxu0
        %v2116 = vadd.f32 %v1699, %v2115
        %v2117 = vpop.f32.mrf.mxu0
        %v2118 = vadd.f32 %v1699, %v2117
        %2119 = vmatmul.bf16.gmra.mxu0 %v1838
        %v2120 = vpop.f32.mrf.mxu0
        %v2121 = vadd.f32 %v1699, %v2120
        %v2122 = vpop.f32.mrf.mxu0
        %v2123 = vadd.f32 %v1699, %v2122
        %2124 = vmatmul.bf16.gmra.mxu0 %v1841
        %v2125 = vpop.f32.mrf.mxu0
        %v2126 = vadd.f32 %v1699, %v2125
        %v2127 = vpop.f32.mrf.mxu0
        %v2128 = vadd.f32 %v1699, %v2127
        %2129 = vmatmul.bf16.gmra.mxu0 %v1844
        %v2130 = vpop.f32.mrf.mxu0
        %v2131 = vadd.f32 %v1699, %v2130
        %v2132 = vpop.f32.mrf.mxu0
        %v2133 = vadd.f32 %v1699, %v2132
        %2134 = vmatmul.bf16.gmra.mxu0 %v1847
        %v2135 = vpop.f32.mrf.mxu0
        %v2136 = vadd.f32 %v1699, %v2135
        %v2137 = vpop.f32.mrf.mxu0
        %v2138 = vadd.f32 %v1699, %v2137
        %2139 = vmatmul.bf16.gmra.mxu0 %v1850
        %v2140 = vpop.f32.mrf.mxu0
        %v2141 = vadd.f32 %v1699, %v2140
        %v2142 = vpop.f32.mrf.mxu0
        %v2143 = vadd.f32 %v1699, %v2142
        %2144 = vmatmul.bf16.gmra.mxu0 %v1853
        %v2145 = vpop.f32.mrf.mxu0
        %v2146 = vadd.f32 %v1699, %v2145
        %v2147 = vpop.f32.mrf.mxu0
        %v2148 = vadd.f32 %v1699, %v2147
        %2149 = vmatmul.bf16.gmra.mxu0 %v1856
        %v2150 = vpop.f32.mrf.mxu0
        %v2151 = vadd.f32 %v1699, %v2150
        %v2152 = vpop.f32.mrf.mxu0
        %v2153 = vadd.f32 %v1699, %v2152
        %2154 = vmatmul.bf16.gmra.mxu0 %v1859
        %v2155 = vpop.f32.mrf.mxu0
        %v2156 = vadd.f32 %v1699, %v2155
        %v2157 = vpop.f32.mrf.mxu0
        %v2158 = vadd.f32 %v1699, %v2157
        %2159 = vmatmul.bf16.gmra.mxu0 %v1862
        %v2160 = vpop.f32.mrf.mxu0
        %v2161 = vadd.f32 %v1699, %v2160
        %v2162 = vpop.f32.mrf.mxu0
        %v2163 = vadd.f32 %v1699, %v2162
        %2164 = vmatmul.bf16.gmra.mxu0 %v1865
        %v2165 = vpop.f32.mrf.mxu0
        %v2166 = vadd.f32 %v1699, %v2165
        %v2167 = vpop.f32.mrf.mxu0
        %v2168 = vadd.f32 %v1699, %v2167
        %2169 = vmatmul.bf16.gmra.mxu0 %v1868
        %v2170 = vpop.f32.mrf.mxu0
        %v2171 = vadd.f32 %v1699, %v2170
        %v2172 = vpop.f32.mrf.mxu0
        %v2173 = vadd.f32 %v1699, %v2172
        %2174 = vmatmul.bf16.gmra.mxu0 %v1871
        %v2175 = vpop.f32.mrf.mxu0
        %v2176 = vadd.f32 %v1699, %v2175
        %v2177 = vpop.f32.mrf.mxu0
        %v2178 = vadd.f32 %v1699, %v2177
        %2179 = vmatmul.bf16.gmra.mxu0 %v1874
        %v2180 = vpop.f32.mrf.mxu0
        %v2181 = vadd.f32 %v1699, %v2180
        %v2182 = vpop.f32.mrf.mxu0
        %v2183 = vadd.f32 %v1699, %v2182
        %2184 = vmatmul.bf16.gmra.mxu0 %v1877
        %v2185 = vpop.f32.mrf.mxu0
        %v2186 = vadd.f32 %v1699, %v2185
        %v2187 = vpop.f32.mrf.mxu0
        %v2188 = vadd.f32 %v1699, %v2187
        %2189 = vmatmul.bf16.gmra.mxu0 %v1880
        %v2190 = vpop.f32.mrf.mxu0
        %v2191 = vadd.f32 %v1699, %v2190
        %v2192 = vpop.f32.mrf.mxu0
        %v2193 = vadd.f32 %v1699, %v2192
        %2194 = vmatmul.bf16.gmra.mxu0 %v1883
        %v2195 = vpop.f32.mrf.mxu0
        %v2196 = vadd.f32 %v1699, %v2195
        %v2197 = vpop.f32.mrf.mxu0
        %v2198 = vadd.f32 %v1699, %v2197
        %2199 = vmatmul.bf16.gmra.mxu0 %v1886
        %v2200 = vpop.f32.mrf.mxu0
        %v2201 = vadd.f32 %v1699, %v2200
        %v2202 = vpop.f32.mrf.mxu0
        %v2203 = vadd.f32 %v1699, %v2202
        %2204 = vmatmul.bf16.gmra.mxu0 %v1889
        %v2205 = vpop.f32.mrf.mxu0
        %v2206 = vadd.f32 %v1699, %v2205
        %v2207 = vpop.f32.mrf.mxu0
        %v2208 = vadd.f32 %v1699, %v2207
        %2209 = vmatmul.bf16.gmra.mxu0 %v1892
        %v2210 = vpop.f32.mrf.mxu0
        %v2211 = vadd.f32 %v1699, %v2210
        %v2212 = vpop.f32.mrf.mxu0
        %v2213 = vadd.f32 %v1699, %v2212
        %2214 = vmatmul.bf16.gmra.mxu0 %v1895
        %v2215 = vpop.f32.mrf.mxu0
        %v2216 = vadd.f32 %v1699, %v2215
        %v2217 = vpop.f32.mrf.mxu0
        %v2218 = vadd.f32 %v1699, %v2217
        %2219 = vmatmul.bf16.gmra.mxu0 %v1898
        %v2220 = vpop.f32.mrf.mxu0
        %v2221 = vadd.f32 %v1699, %v2220
        %v2222 = vpop.f32.mrf.mxu0
        %v2223 = vadd.f32 %v1699, %v2222
        %2224 = vmatmul.bf16.gmra.mxu0 %v1901
        %v2225 = vpop.f32.mrf.mxu0
        %v2226 = vadd.f32 %v1699, %v2225
        %v2227 = vpop.f32.mrf.mxu0
        %v2228 = vadd.f32 %v1699, %v2227
        %2229 = vmatmul.bf16.gmra.mxu0 %v1904
        %v2230 = vpop.f32.mrf.mxu0
        %v2231 = vadd.f32 %v1699, %v2230
        %v2232 = vpop.f32.mrf.mxu0
        %v2233 = vadd.f32 %v1699, %v2232
        %2234 = vdwg.mxu0
        %v2235 = vmul.f32 %v1916, 0.5
        %v2236 = vmul.f32 %v1918, 0.5
        %v2237 = vmul.f32 %v1921, 0.5
        %v2238 = vmul.f32 %v1923, 0.5
        %v2239 = vmul.f32 %v1926, 0.5
        %v2240 = vmul.f32 %v1928, 0.5
        %v2241 = vmul.f32 %v1931, 0.5
        %v2242 = vmul.f32 %v1933, 0.5
        %v2243 = vmul.f32 %v1936, 0.5
        %v2244 = vmul.f32 %v1938, 0.5
        %v2245 = vmul.f32 %v1941, 0.5
        %v2246 = vmul.f32 %v1943, 0.5
        %v2247 = vmul.f32 %v1946, 0.5
        %v2248 = vmul.f32 %v1948, 0.5
        %v2249 = vmul.f32 %v1951, 0.5
        %v2250 = vmul.f32 %v1953, 0.5
        %v2251 = vmul.f32 %v1956, 0.5
        %v2252 = vmul.f32 %v1958, 0.5
        %v2253 = vmul.f32 %v1961, 0.5
        %v2254 = vmul.f32 %v1963, 0.5
        %v2255 = vmul.f32 %v1966, 0.5
        %v2256 = vmul.f32 %v1968, 0.5
        %v2257 = vmul.f32 %v1971, 0.5
        %v2258 = vmul.f32 %v1973, 0.5
        %v2259 = vmul.f32 %v1976, 0.5
        %v2260 = vmul.f32 %v1978, 0.5
        %v2261 = vmul.f32 %v1981, 0.5
        %v2262 = vmul.f32 %v1983, 0.5
        %v2263 = vmul.f32 %v1986, 0.5
        %v2264 = vmul.f32 %v1988, 0.5
        %v2265 = vmul.f32 %v1991, 0.5
        %v2266 = vmul.f32 %v1993, 0.5
        %v2267 = vmul.f32 %v1996, 0.5
        %v2268 = vmul.f32 %v1998, 0.5
        %v2269 = vmul.f32 %v2001, 0.5
        %v2270 = vmul.f32 %v2003, 0.5
        %v2271 = vmul.f32 %v2006, 0.5
        %v2272 = vmul.f32 %v2008, 0.5
        %v2273 = vmul.f32 %v2011, 0.5
        %v2274 = vmul.f32 %v2013, 0.5
        %v2275 = vmul.f32 %v2016, 0.5
        %v2276 = vmul.f32 %v2018, 0.5
        %v2277 = vmul.f32 %v2021, 0.5
        %v2278 = vmul.f32 %v2023, 0.5
        %v2279 = vmul.f32 %v2026, 0.5
        %v2280 = vmul.f32 %v2028, 0.5
        %v2281 = vmul.f32 %v2031, 0.5
        %v2282 = vmul.f32 %v2033, 0.5
        %v2283 = vmul.f32 %v2036, 0.5
        %v2284 = vmul.f32 %v2038, 0.5
        %v2285 = vmul.f32 %v2041, 0.5
        %v2286 = vmul.f32 %v2043, 0.5
        %v2287 = vmul.f32 %v2046, 0.5
        %v2288 = vmul.f32 %v2048, 0.5
        %v2289 = vmul.f32 %v2051, 0.5
        %v2290 = vmul.f32 %v2053, 0.5
        %v2291 = vmul.f32 %v2056, 0.5
        %v2292 = vmul.f32 %v2058, 0.5
        %v2293 = vmul.f32 %v2061, 0.5
        %v2294 = vmul.f32 %v2063, 0.5
        %v2295 = vmul.f32 %v2066, 0.5
        %v2296 = vmul.f32 %v2068, 0.5
        %v2297 = vmul.f32 %v2071, 0.5
        %v2298 = vmul.f32 %v2073, 0.5
        %v2299 = vmul.f32 %v2076, 0.5
        %v2300 = vmul.f32 %v2078, 0.5
        %v2301 = vmul.f32 %v2081, 0.5
        %v2302 = vmul.f32 %v2083, 0.5
        %v2303 = vmul.f32 %v2086, 0.5
        %v2304 = vmul.f32 %v2088, 0.5
        %v2305 = vmul.f32 %v2091, 0.5
        %v2306 = vmul.f32 %v2093, 0.5
        %v2307 = vmul.f32 %v2096, 0.5
        %v2308 = vmul.f32 %v2098, 0.5
        %v2309 = vmul.f32 %v2101, 0.5
        %v2310 = vmul.f32 %v2103, 0.5
        %v2311 = vmul.f32 %v2106, 0.5
        %v2312 = vmul.f32 %v2108, 0.5
        %v2313 = vmul.f32 %v2111, 0.5
        %v2314 = vmul.f32 %v2113, 0.5
        %v2315 = vmul.f32 %v2116, 0.5
        %v2316 = vmul.f32 %v2118, 0.5
        %v2317 = vmul.f32 %v2121, 0.5
        %v2318 = vmul.f32 %v2123, 0.5
        %v2319 = vmul.f32 %v2126, 0.5
        %v2320 = vmul.f32 %v2128, 0.5
        %v2321 = vmul.f32 %v2131, 0.5
        %v2322 = vmul.f32 %v2133, 0.5
        %v2323 = vmul.f32 %v2136, 0.5
        %v2324 = vmul.f32 %v2138, 0.5
        %v2325 = vmul.f32 %v2141, 0.5
        %v2326 = vmul.f32 %v2143, 0.5
        %v2327 = vmul.f32 %v2146, 0.5
        %v2328 = vmul.f32 %v2148, 0.5
        %v2329 = vmul.f32 %v2151, 0.5
        %v2330 = vmul.f32 %v2153, 0.5
        %v2331 = vmul.f32 %v2156, 0.5
        %v2332 = vmul.f32 %v2158, 0.5
        %v2333 = vmul.f32 %v2161, 0.5
        %v2334 = vmul.f32 %v2163, 0.5
        %v2335 = vmul.f32 %v2166, 0.5
        %v2336 = vmul.f32 %v2168, 0.5
        %v2337 = vmul.f32 %v2171, 0.5
        %v2338 = vmul.f32 %v2173, 0.5
        %v2339 = vmul.f32 %v2176, 0.5
        %v2340 = vmul.f32 %v2178, 0.5
        %v2341 = vmul.f32 %v2181, 0.5
        %v2342 = vmul.f32 %v2183, 0.5
        %v2343 = vmul.f32 %v2186, 0.5
        %v2344 = vmul.f32 %v2188, 0.5
        %v2345 = vmul.f32 %v2191, 0.5
        %v2346 = vmul.f32 %v2193, 0.5
        %v2347 = vmul.f32 %v2196, 0.5
        %v2348 = vmul.f32 %v2198, 0.5
        %v2349 = vmul.f32 %v2201, 0.5
        %v2350 = vmul.f32 %v2203, 0.5
        %v2351 = vmul.f32 %v2206, 0.5
        %v2352 = vmul.f32 %v2208, 0.5
        %v2353 = vmul.f32 %v2211, 0.5
        %v2354 = vmul.f32 %v2213, 0.5
        %v2355 = vmul.f32 %v2216, 0.5
        %v2356 = vmul.f32 %v2218, 0.5
        %v2357 = vmul.f32 %v2221, 0.5
        %v2358 = vmul.f32 %v2223, 0.5
        %v2359 = vmul.f32 %v2226, 0.5
        %v2360 = vmul.f32 %v2228, 0.5
        %v2361 = vmul.f32 %v2231, 0.5
        %v2362 = vmul.f32 %v2233, 0.5
        %v2363 = vtanh.pop %v2235
        %v2364 = vtanh.pop %v2236
        %v2365 = vtanh.pop %v2237
        %v2366 = vtanh.pop %v2238
        %v2367 = vtanh.pop %v2239
        %v2368 = vtanh.pop %v2240
        %v2369 = vtanh.pop %v2241
        %v2370 = vtanh.pop %v2242
        %v2371 = vtanh.pop %v2243
        %v2372 = vtanh.pop %v2244
        %v2373 = vtanh.pop %v2245
        %v2374 = vtanh.pop %v2246
        %v2375 = vtanh.pop %v2247
        %v2376 = vtanh.pop %v2248
        %v2377 = vtanh.pop %v2249
        %v2378 = vtanh.pop %v2250
        %v2379 = vtanh.pop %v2251
        %v2380 = vtanh.pop %v2252
        %v2381 = vtanh.pop %v2253
        %v2382 = vtanh.pop %v2254
        %v2383 = vtanh.pop %v2255
        %v2384 = vtanh.pop %v2256
        %v2385 = vtanh.pop %v2257
        %v2386 = vtanh.pop %v2258
        %v2387 = vtanh.pop %v2259
        %v2388 = vtanh.pop %v2260
        %v2389 = vtanh.pop %v2261
        %v2390 = vtanh.pop %v2262
        %v2391 = vtanh.pop %v2263
        %v2392 = vtanh.pop %v2264
        %v2393 = vtanh.pop %v2265
        %v2394 = vtanh.pop %v2266
        %v2395 = vtanh.pop %v2267
        %v2396 = vtanh.pop %v2268
        %v2397 = vtanh.pop %v2269
        %v2398 = vtanh.pop %v2270
        %v2399 = vtanh.pop %v2271
        %v2400 = vtanh.pop %v2272
        %v2401 = vtanh.pop %v2273
        %v2402 = vtanh.pop %v2274
        %v2403 = vtanh.pop %v2275
        %v2404 = vtanh.pop %v2276
        %v2405 = vtanh.pop %v2277
        %v2406 = vtanh.pop %v2278
        %v2407 = vtanh.pop %v2279
        %v2408 = vtanh.pop %v2280
        %v2409 = vtanh.pop %v2281
        %v2410 = vtanh.pop %v2282
        %v2411 = vtanh.pop %v2283
        %v2412 = vtanh.pop %v2284
        %v2413 = vtanh.pop %v2285
        %v2414 = vtanh.pop %v2286
        %v2415 = vtanh.pop %v2287
        %v2416 = vtanh.pop %v2288
        %v2417 = vtanh.pop %v2289
        %v2418 = vtanh.pop %v2290
        %v2419 = vtanh.pop %v2291
        %v2420 = vtanh.pop %v2292
        %v2421 = vtanh.pop %v2293
        %v2422 = vtanh.pop %v2294
        %v2423 = vtanh.pop %v2295
        %v2424 = vtanh.pop %v2296
        %v2425 = vtanh.pop %v2297
        %v2426 = vtanh.pop %v2298
        %v2427 = vtanh.pop %v2299
        %v2428 = vtanh.pop %v2300
        %v2429 = vtanh.pop %v2301
        %v2430 = vtanh.pop %v2302
        %v2431 = vtanh.pop %v2303
        %v2432 = vtanh.pop %v2304
        %v2433 = vtanh.pop %v2305
        %v2434 = vtanh.pop %v2306
        %v2435 = vtanh.pop %v2307
        %v2436 = vtanh.pop %v2308
        %v2437 = vtanh.pop %v2309
        %v2438 = vtanh.pop %v2310
        %v2439 = vtanh.pop %v2311
        %v2440 = vtanh.pop %v2312
        %v2441 = vtanh.pop %v2313
        %v2442 = vtanh.pop %v2314
        %v2443 = vtanh.pop %v2315
        %v2444 = vtanh.pop %v2316
        %v2445 = vtanh.pop %v2317
        %v2446 = vtanh.pop %v2318
        %v2447 = vtanh.pop %v2319
        %v2448 = vtanh.pop %v2320
        %v2449 = vtanh.pop %v2321
        %v2450 = vtanh.pop %v2322
        %v2451 = vtanh.pop %v2323
        %v2452 = vtanh.pop %v2324
        %v2453 = vtanh.pop %v2325
        %v2454 = vtanh.pop %v2326
        %v2455 = vtanh.pop %v2327
        %v2456 = vtanh.pop %v2328
        %v2457 = vtanh.pop %v2329
        %v2458 = vtanh.pop %v2330
        %v2459 = vtanh.pop %v2331
        %v2460 = vtanh.pop %v2332
        %v2461 = vtanh.pop %v2333
        %v2462 = vtanh.pop %v2334
        %v2463 = vtanh.pop %v2335
        %v2464 = vtanh.pop %v2336
        %v2465 = vtanh.pop %v2337
        %v2466 = vtanh.pop %v2338
        %v2467 = vtanh.pop %v2339
        %v2468 = vtanh.pop %v2340
        %v2469 = vtanh.pop %v2341
        %v2470 = vtanh.pop %v2342
        %v2471 = vtanh.pop %v2343
        %v2472 = vtanh.pop %v2344
        %v2473 = vtanh.pop %v2345
        %v2474 = vtanh.pop %v2346
        %v2475 = vtanh.pop %v2347
        %v2476 = vtanh.pop %v2348
        %v2477 = vtanh.pop %v2349
        %v2478 = vtanh.pop %v2350
        %v2479 = vtanh.pop %v2351
        %v2480 = vtanh.pop %v2352
        %v2481 = vtanh.pop %v2353
        %v2482 = vtanh.pop %v2354
        %v2483 = vtanh.pop %v2355
        %v2484 = vtanh.pop %v2356
        %v2485 = vtanh.pop %v2357
        %v2486 = vtanh.pop %v2358
        %v2487 = vtanh.pop %v2359
        %v2488 = vtanh.pop %v2360
        %v2489 = vtanh.pop %v2361
        %v2490 = vtanh.pop %v2362
        %v2491 = vadd.f32 %v2363, 1.0
        %v2492 = vadd.f32 %v2364, 1.0
        %v2493 = vadd.f32 %v2365, 1.0
        %v2494 = vadd.f32 %v2366, 1.0
        %v2495 = vadd.f32 %v2367, 1.0
        %v2496 = vadd.f32 %v2368, 1.0
        %v2497 = vadd.f32 %v2369, 1.0
        %v2498 = vadd.f32 %v2370, 1.0
        %v2499 = vadd.f32 %v2371, 1.0
        %v2500 = vadd.f32 %v2372, 1.0
        %v2501 = vadd.f32 %v2373, 1.0
        %v2502 = vadd.f32 %v2374, 1.0
        %v2503 = vadd.f32 %v2375, 1.0
        %v2504 = vadd.f32 %v2376, 1.0
        %v2505 = vadd.f32 %v2377, 1.0
        %v2506 = vadd.f32 %v2378, 1.0
        %v2507 = vadd.f32 %v2379, 1.0
        %v2508 = vadd.f32 %v2380, 1.0
        %v2509 = vadd.f32 %v2381, 1.0
        %v2510 = vadd.f32 %v2382, 1.0
        %v2511 = vadd.f32 %v2383, 1.0
        %v2512 = vadd.f32 %v2384, 1.0
        %v2513 = vadd.f32 %v2385, 1.0
        %v2514 = vadd.f32 %v2386, 1.0
        %v2515 = vadd.f32 %v2387, 1.0
        %v2516 = vadd.f32 %v2388, 1.0
        %v2517 = vadd.f32 %v2389, 1.0
        %v2518 = vadd.f32 %v2390, 1.0
        %v2519 = vadd.f32 %v2391, 1.0
        %v2520 = vadd.f32 %v2392, 1.0
        %v2521 = vadd.f32 %v2393, 1.0
        %v2522 = vadd.f32 %v2394, 1.0
        %v2523 = vadd.f32 %v2395, 1.0
        %v2524 = vadd.f32 %v2396, 1.0
        %v2525 = vadd.f32 %v2397, 1.0
        %v2526 = vadd.f32 %v2398, 1.0
        %v2527 = vadd.f32 %v2399, 1.0
        %v2528 = vadd.f32 %v2400, 1.0
        %v2529 = vadd.f32 %v2401, 1.0
        %v2530 = vadd.f32 %v2402, 1.0
        %v2531 = vadd.f32 %v2403, 1.0
        %v2532 = vadd.f32 %v2404, 1.0
        %v2533 = vadd.f32 %v2405, 1.0
        %v2534 = vadd.f32 %v2406, 1.0
        %v2535 = vadd.f32 %v2407, 1.0
        %v2536 = vadd.f32 %v2408, 1.0
        %v2537 = vadd.f32 %v2409, 1.0
        %v2538 = vadd.f32 %v2410, 1.0
        %v2539 = vadd.f32 %v2411, 1.0
        %v2540 = vadd.f32 %v2412, 1.0
        %v2541 = vadd.f32 %v2413, 1.0
        %v2542 = vadd.f32 %v2414, 1.0
        %v2543 = vadd.f32 %v2415, 1.0
        %v2544 = vadd.f32 %v2416, 1.0
        %v2545 = vadd.f32 %v2417, 1.0
        %v2546 = vadd.f32 %v2418, 1.0
        %v2547 = vadd.f32 %v2419, 1.0
        %v2548 = vadd.f32 %v2420, 1.0
        %v2549 = vadd.f32 %v2421, 1.0
        %v2550 = vadd.f32 %v2422, 1.0
        %v2551 = vadd.f32 %v2423, 1.0
        %v2552 = vadd.f32 %v2424, 1.0
        %v2553 = vadd.f32 %v2425, 1.0
        %v2554 = vadd.f32 %v2426, 1.0
        %v2555 = vadd.f32 %v2427, 1.0
        %v2556 = vadd.f32 %v2428, 1.0
        %v2557 = vadd.f32 %v2429, 1.0
        %v2558 = vadd.f32 %v2430, 1.0
        %v2559 = vadd.f32 %v2431, 1.0
        %v2560 = vadd.f32 %v2432, 1.0
        %v2561 = vadd.f32 %v2433, 1.0
        %v2562 = vadd.f32 %v2434, 1.0
        %v2563 = vadd.f32 %v2435, 1.0
        %v2564 = vadd.f32 %v2436, 1.0
        %v2565 = vadd.f32 %v2437, 1.0
        %v2566 = vadd.f32 %v2438, 1.0
        %v2567 = vadd.f32 %v2439, 1.0
        %v2568 = vadd.f32 %v2440, 1.0
        %v2569 = vadd.f32 %v2441, 1.0
        %v2570 = vadd.f32 %v2442, 1.0
        %v2571 = vadd.f32 %v2443, 1.0
        %v2572 = vadd.f32 %v2444, 1.0
        %v2573 = vadd.f32 %v2445, 1.0
        %v2574 = vadd.f32 %v2446, 1.0
        %v2575 = vadd.f32 %v2447, 1.0
        %v2576 = vadd.f32 %v2448, 1.0
        %v2577 = vadd.f32 %v2449, 1.0
        %v2578 = vadd.f32 %v2450, 1.0
        %v2579 = vadd.f32 %v2451, 1.0
        %v2580 = vadd.f32 %v2452, 1.0
        %v2581 = vadd.f32 %v2453, 1.0
        %v2582 = vadd.f32 %v2454, 1.0
        %v2583 = vadd.f32 %v2455, 1.0
        %v2584 = vadd.f32 %v2456, 1.0
        %v2585 = vadd.f32 %v2457, 1.0
        %v2586 = vadd.f32 %v2458, 1.0
        %v2587 = vadd.f32 %v2459, 1.0
        %v2588 = vadd.f32 %v2460, 1.0
        %v2589 = vadd.f32 %v2461, 1.0
        %v2590 = vadd.f32 %v2462, 1.0
        %v2591 = vadd.f32 %v2463, 1.0
        %v2592 = vadd.f32 %v2464, 1.0
        %v2593 = vadd.f32 %v2465, 1.0
        %v2594 = vadd.f32 %v2466, 1.0
        %v2595 = vadd.f32 %v2467, 1.0
        %v2596 = vadd.f32 %v2468, 1.0
        %v2597 = vadd.f32 %v2469, 1.0
        %v2598 = vadd.f32 %v2470, 1.0
        %v2599 = vadd.f32 %v2471, 1.0
        %v2600 = vadd.f32 %v2472, 1.0
        %v2601 = vadd.f32 %v2473, 1.0
        %v2602 = vadd.f32 %v2474, 1.0
        %v2603 = vadd.f32 %v2475, 1.0
        %v2604 = vadd.f32 %v2476, 1.0
        %v2605 = vadd.f32 %v2477, 1.0
        %v2606 = vadd.f32 %v2478, 1.0
        %v2607 = vadd.f32 %v2479, 1.0
        %v2608 = vadd.f32 %v2480, 1.0
        %v2609 = vadd.f32 %v2481, 1.0
        %v2610 = vadd.f32 %v2482, 1.0
        %v2611 = vadd.f32 %v2483, 1.0
        %v2612 = vadd.f32 %v2484, 1.0
        %v2613 = vadd.f32 %v2485, 1.0
        %v2614 = vadd.f32 %v2486, 1.0
        %v2615 = vadd.f32 %v2487, 1.0
        %v2616 = vadd.f32 %v2488, 1.0
        %v2617 = vadd.f32 %v2489, 1.0
        %v2618 = vadd.f32 %v2490, 1.0
        %v2619 = vmul.f32 %v2235, %v2491
        %v2620 = vmul.f32 %v2236, %v2492
        %v2621 = vmul.f32 %v2237, %v2493
        %v2622 = vmul.f32 %v2238, %v2494
        %v2623 = vmul.f32 %v2239, %v2495
        %v2624 = vmul.f32 %v2240, %v2496
        %v2625 = vmul.f32 %v2241, %v2497
        %v2626 = vmul.f32 %v2242, %v2498
        %v2627 = vmul.f32 %v2243, %v2499
        %v2628 = vmul.f32 %v2244, %v2500
        %v2629 = vmul.f32 %v2245, %v2501
        %v2630 = vmul.f32 %v2246, %v2502
        %v2631 = vmul.f32 %v2247, %v2503
        %v2632 = vmul.f32 %v2248, %v2504
        %v2633 = vmul.f32 %v2249, %v2505
        %v2634 = vmul.f32 %v2250, %v2506
        %v2635 = vmul.f32 %v2251, %v2507
        %v2636 = vmul.f32 %v2252, %v2508
        %v2637 = vmul.f32 %v2253, %v2509
        %v2638 = vmul.f32 %v2254, %v2510
        %v2639 = vmul.f32 %v2255, %v2511
        %v2640 = vmul.f32 %v2256, %v2512
        %v2641 = vmul.f32 %v2257, %v2513
        %v2642 = vmul.f32 %v2258, %v2514
        %v2643 = vmul.f32 %v2259, %v2515
        %v2644 = vmul.f32 %v2260, %v2516
        %v2645 = vmul.f32 %v2261, %v2517
        %v2646 = vmul.f32 %v2262, %v2518
        %v2647 = vmul.f32 %v2263, %v2519
        %v2648 = vmul.f32 %v2264, %v2520
        %v2649 = vmul.f32 %v2265, %v2521
        %v2650 = vmul.f32 %v2266, %v2522
        %v2651 = vmul.f32 %v2267, %v2523
        %v2652 = vmul.f32 %v2268, %v2524
        %v2653 = vmul.f32 %v2269, %v2525
        %v2654 = vmul.f32 %v2270, %v2526
        %v2655 = vmul.f32 %v2271, %v2527
        %v2656 = vmul.f32 %v2272, %v2528
        %v2657 = vmul.f32 %v2273, %v2529
        %v2658 = vmul.f32 %v2274, %v2530
        %v2659 = vmul.f32 %v2275, %v2531
        %v2660 = vmul.f32 %v2276, %v2532
        %v2661 = vmul.f32 %v2277, %v2533
        %v2662 = vmul.f32 %v2278, %v2534
        %v2663 = vmul.f32 %v2279, %v2535
        %v2664 = vmul.f32 %v2280, %v2536
        %v2665 = vmul.f32 %v2281, %v2537
        %v2666 = vmul.f32 %v2282, %v2538
        %v2667 = vmul.f32 %v2283, %v2539
        %v2668 = vmul.f32 %v2284, %v2540
        %v2669 = vmul.f32 %v2285, %v2541
        %v2670 = vmul.f32 %v2286, %v2542
        %v2671 = vmul.f32 %v2287, %v2543
        %v2672 = vmul.f32 %v2288, %v2544
        %v2673 = vmul.f32 %v2289, %v2545
        %v2674 = vmul.f32 %v2290, %v2546
        %v2675 = vmul.f32 %v2291, %v2547
        %v2676 = vmul.f32 %v2292, %v2548
        %v2677 = vmul.f32 %v2293, %v2549
        %v2678 = vmul.f32 %v2294, %v2550
        %v2679 = vmul.f32 %v2295, %v2551
        %v2680 = vmul.f32 %v2296, %v2552
        %v2681 = vmul.f32 %v2297, %v2553
        %v2682 = vmul.f32 %v2298, %v2554
        %v2683 = vmul.f32 %v2299, %v2555
        %v2684 = vmul.f32 %v2300, %v2556
        %v2685 = vmul.f32 %v2301, %v2557
        %v2686 = vmul.f32 %v2302, %v2558
        %v2687 = vmul.f32 %v2303, %v2559
        %v2688 = vmul.f32 %v2304, %v2560
        %v2689 = vmul.f32 %v2305, %v2561
        %v2690 = vmul.f32 %v2306, %v2562
        %v2691 = vmul.f32 %v2307, %v2563
        %v2692 = vmul.f32 %v2308, %v2564
        %v2693 = vmul.f32 %v2309, %v2565
        %v2694 = vmul.f32 %v2310, %v2566
        %v2695 = vmul.f32 %v2311, %v2567
        %v2696 = vmul.f32 %v2312, %v2568
        %v2697 = vmul.f32 %v2313, %v2569
        %v2698 = vmul.f32 %v2314, %v2570
        %v2699 = vmul.f32 %v2315, %v2571
        %v2700 = vmul.f32 %v2316, %v2572
        %v2701 = vmul.f32 %v2317, %v2573
        %v2702 = vmul.f32 %v2318, %v2574
        %v2703 = vmul.f32 %v2319, %v2575
        %v2704 = vmul.f32 %v2320, %v2576
        %v2705 = vmul.f32 %v2321, %v2577
        %v2706 = vmul.f32 %v2322, %v2578
        %v2707 = vmul.f32 %v2323, %v2579
        %v2708 = vmul.f32 %v2324, %v2580
        %v2709 = vmul.f32 %v2325, %v2581
        %v2710 = vmul.f32 %v2326, %v2582
        %v2711 = vmul.f32 %v2327, %v2583
        %v2712 = vmul.f32 %v2328, %v2584
        %v2713 = vmul.f32 %v2329, %v2585
        %v2714 = vmul.f32 %v2330, %v2586
        %v2715 = vmul.f32 %v2331, %v2587
        %v2716 = vmul.f32 %v2332, %v2588
        %v2717 = vmul.f32 %v2333, %v2589
        %v2718 = vmul.f32 %v2334, %v2590
        %v2719 = vmul.f32 %v2335, %v2591
        %v2720 = vmul.f32 %v2336, %v2592
        %v2721 = vmul.f32 %v2337, %v2593
        %v2722 = vmul.f32 %v2338, %v2594
        %v2723 = vmul.f32 %v2339, %v2595
        %v2724 = vmul.f32 %v2340, %v2596
        %v2725 = vmul.f32 %v2341, %v2597
        %v2726 = vmul.f32 %v2342, %v2598
        %v2727 = vmul.f32 %v2343, %v2599
        %v2728 = vmul.f32 %v2344, %v2600
        %v2729 = vmul.f32 %v2345, %v2601
        %v2730 = vmul.f32 %v2346, %v2602
        %v2731 = vmul.f32 %v2347, %v2603
        %v2732 = vmul.f32 %v2348, %v2604
        %v2733 = vmul.f32 %v2349, %v2605
        %v2734 = vmul.f32 %v2350, %v2606
        %v2735 = vmul.f32 %v2351, %v2607
        %v2736 = vmul.f32 %v2352, %v2608
        %v2737 = vmul.f32 %v2353, %v2609
        %v2738 = vmul.f32 %v2354, %v2610
        %v2739 = vmul.f32 %v2355, %v2611
        %v2740 = vmul.f32 %v2356, %v2612
        %v2741 = vmul.f32 %v2357, %v2613
        %v2742 = vmul.f32 %v2358, %v2614
        %v2743 = vmul.f32 %v2359, %v2615
        %v2744 = vmul.f32 %v2360, %v2616
        %v2745 = vmul.f32 %v2361, %v2617
        %v2746 = vmul.f32 %v2362, %v2618
        %v2747 = vpack.c.bf16 %v2620, %v2619
        %v2748 = vpack.c.bf16 %v2622, %v2621
        %v2749 = vpack.c.bf16 %v2624, %v2623
        %v2750 = vpack.c.bf16 %v2626, %v2625
        %v2751 = vpack.c.bf16 %v2628, %v2627
        %v2752 = vpack.c.bf16 %v2630, %v2629
        %v2753 = vpack.c.bf16 %v2632, %v2631
        %v2754 = vpack.c.bf16 %v2634, %v2633
        %v2755 = vpack.c.bf16 %v2636, %v2635
        %v2756 = vpack.c.bf16 %v2638, %v2637
        %v2757 = vpack.c.bf16 %v2640, %v2639
        %v2758 = vpack.c.bf16 %v2642, %v2641
        %v2759 = vpack.c.bf16 %v2644, %v2643
        %v2760 = vpack.c.bf16 %v2646, %v2645
        %v2761 = vpack.c.bf16 %v2648, %v2647
        %v2762 = vpack.c.bf16 %v2650, %v2649
        %v2763 = vpack.c.bf16 %v2652, %v2651
        %v2764 = vpack.c.bf16 %v2654, %v2653
        %v2765 = vpack.c.bf16 %v2656, %v2655
        %v2766 = vpack.c.bf16 %v2658, %v2657
        %v2767 = vpack.c.bf16 %v2660, %v2659
        %v2768 = vpack.c.bf16 %v2662, %v2661
        %v2769 = vpack.c.bf16 %v2664, %v2663
        %v2770 = vpack.c.bf16 %v2666, %v2665
        %v2771 = vpack.c.bf16 %v2668, %v2667
        %v2772 = vpack.c.bf16 %v2670, %v2669
        %v2773 = vpack.c.bf16 %v2672, %v2671
        %v2774 = vpack.c.bf16 %v2674, %v2673
        %v2775 = vpack.c.bf16 %v2676, %v2675
        %v2776 = vpack.c.bf16 %v2678, %v2677
        %v2777 = vpack.c.bf16 %v2680, %v2679
        %v2778 = vpack.c.bf16 %v2682, %v2681
        %v2779 = vpack.c.bf16 %v2684, %v2683
        %v2780 = vpack.c.bf16 %v2686, %v2685
        %v2781 = vpack.c.bf16 %v2688, %v2687
        %v2782 = vpack.c.bf16 %v2690, %v2689
        %v2783 = vpack.c.bf16 %v2692, %v2691
        %v2784 = vpack.c.bf16 %v2694, %v2693
        %v2785 = vpack.c.bf16 %v2696, %v2695
        %v2786 = vpack.c.bf16 %v2698, %v2697
        %v2787 = vpack.c.bf16 %v2700, %v2699
        %v2788 = vpack.c.bf16 %v2702, %v2701
        %v2789 = vpack.c.bf16 %v2704, %v2703
        %v2790 = vpack.c.bf16 %v2706, %v2705
        %v2791 = vpack.c.bf16 %v2708, %v2707
        %v2792 = vpack.c.bf16 %v2710, %v2709
        %v2793 = vpack.c.bf16 %v2712, %v2711
        %v2794 = vpack.c.bf16 %v2714, %v2713
        %v2795 = vpack.c.bf16 %v2716, %v2715
        %v2796 = vpack.c.bf16 %v2718, %v2717
        %v2797 = vpack.c.bf16 %v2720, %v2719
        %v2798 = vpack.c.bf16 %v2722, %v2721
        %v2799 = vpack.c.bf16 %v2724, %v2723
        %v2800 = vpack.c.bf16 %v2726, %v2725
        %v2801 = vpack.c.bf16 %v2728, %v2727
        %v2802 = vpack.c.bf16 %v2730, %v2729
        %v2803 = vpack.c.bf16 %v2732, %v2731
        %v2804 = vpack.c.bf16 %v2734, %v2733
        %v2805 = vpack.c.bf16 %v2736, %v2735
        %v2806 = vpack.c.bf16 %v2738, %v2737
        %v2807 = vpack.c.bf16 %v2740, %v2739
        %v2808 = vpack.c.bf16 %v2742, %v2741
        %v2809 = vpack.c.bf16 %v2744, %v2743
        %v2810 = vpack.c.bf16 %v2746, %v2745
        %v2811 = vld [vmem:[%s5] sm:$0xf]
        %v2812 = vld [vmem:[%s5 + $0x4] sm:$0xf]
        %v2813 = vld [vmem:[%s5 + $0x8] sm:$0xf]
        %v2814 = vld [vmem:[%s5 + $0xc] sm:$0xf]
        %v2815 = vld [vmem:[%s5 + $0x10] sm:$0xf]
        %v2816 = vld [vmem:[%s5 + $0x14] sm:$0xf]
        %v2817 = vld [vmem:[%s5 + $0x18] sm:$0xf]
        %v2818 = vld [vmem:[%s5 + $0x1c] sm:$0xf]
        %v2819 = vld [vmem:[#allocation7] sm:$0x1]
        %v2821 = vperm.slane %v2819, 0
        %v2831 = vunpack.c.l.b16 %v2811
        %v2832 = vunpack.c.l.b16 %v2812
        %v2833 = vunpack.c.l.b16 %v2813
        %v2834 = vunpack.c.l.b16 %v2814
        %v2835 = vunpack.c.l.b16 %v2815
        %v2836 = vunpack.c.l.b16 %v2816
        %v2837 = vunpack.c.l.b16 %v2817
        %v2838 = vunpack.c.l.b16 %v2818
        %v2839 = vpack.c.b16 %v2832, %v2831
        %v2840 = vpack.c.b16 %v2834, %v2833
        %v2841 = vpack.c.b16 %v2836, %v2835
        %v2842 = vpack.c.b16 %v2838, %v2837
        %vm2847 = vcmask 523264
        %v2849 = vsel %vm2847, %v2747, 0
        %v2852 = vsel %vm2847, %v2748, 0
        %v2855 = vsel %vm2847, %v2749, 0
        %v2858 = vsel %vm2847, %v2750, 0
        %v2861 = vsel %vm2847, %v2751, 0
        %v2864 = vsel %vm2847, %v2752, 0
        %v2867 = vsel %vm2847, %v2753, 0
        %v2870 = vsel %vm2847, %v2754, 0
        %v2873 = vsel %vm2847, %v2755, 0
        %v2876 = vsel %vm2847, %v2756, 0
        %v2879 = vsel %vm2847, %v2757, 0
        %v2882 = vsel %vm2847, %v2758, 0
        %v2885 = vsel %vm2847, %v2759, 0
        %v2888 = vsel %vm2847, %v2760, 0
        %v2891 = vsel %vm2847, %v2761, 0
        %v2894 = vsel %vm2847, %v2762, 0
        %v2897 = vsel %vm2847, %v2763, 0
        %v2900 = vsel %vm2847, %v2764, 0
        %v2903 = vsel %vm2847, %v2765, 0
        %v2906 = vsel %vm2847, %v2766, 0
        %v2909 = vsel %vm2847, %v2767, 0
        %v2912 = vsel %vm2847, %v2768, 0
        %v2915 = vsel %vm2847, %v2769, 0
        %v2918 = vsel %vm2847, %v2770, 0
        %v2921 = vsel %vm2847, %v2771, 0
        %v2924 = vsel %vm2847, %v2772, 0
        %v2927 = vsel %vm2847, %v2773, 0
        %v2930 = vsel %vm2847, %v2774, 0
        %v2933 = vsel %vm2847, %v2775, 0
        %v2936 = vsel %vm2847, %v2776, 0
        %v2939 = vsel %vm2847, %v2777, 0
        %v2942 = vsel %vm2847, %v2778, 0
        %v2945 = vsel %vm2847, %v2779, 0
        %v2948 = vsel %vm2847, %v2780, 0
        %v2951 = vsel %vm2847, %v2781, 0
        %v2954 = vsel %vm2847, %v2782, 0
        %v2957 = vsel %vm2847, %v2783, 0
        %v2960 = vsel %vm2847, %v2784, 0
        %v2963 = vsel %vm2847, %v2785, 0
        %v2966 = vsel %vm2847, %v2786, 0
        %v2969 = vsel %vm2847, %v2787, 0
        %v2972 = vsel %vm2847, %v2788, 0
        %v2975 = vsel %vm2847, %v2789, 0
        %v2978 = vsel %vm2847, %v2790, 0
        %v2981 = vsel %vm2847, %v2791, 0
        %v2984 = vsel %vm2847, %v2792, 0
        %v2987 = vsel %vm2847, %v2793, 0
        %v2990 = vsel %vm2847, %v2794, 0
        %v2993 = vsel %vm2847, %v2795, 0
        %v2996 = vsel %vm2847, %v2796, 0
        %v2999 = vsel %vm2847, %v2797, 0
        %v3002 = vsel %vm2847, %v2798, 0
        %v3005 = vsel %vm2847, %v2799, 0
        %v3008 = vsel %vm2847, %v2800, 0
        %v3011 = vsel %vm2847, %v2801, 0
        %v3014 = vsel %vm2847, %v2802, 0
        %v3017 = vsel %vm2847, %v2803, 0
        %v3020 = vsel %vm2847, %v2804, 0
        %v3023 = vsel %vm2847, %v2805, 0
        %v3026 = vsel %vm2847, %v2806, 0
        %v3029 = vsel %vm2847, %v2807, 0
        %v3032 = vsel %vm2847, %v2808, 0
        %v3035 = vsel %vm2847, %v2809, 0
        %v3038 = vsel %vm2847, %v2810, 0
        %3040 = vmatpush.bf16.msra.mxu0 0
        %3041 = vmatpush.bf16.msra.mxu0 0
        %3042 = vmatpush.bf16.msra.mxu0 0
        %3043 = vmatpush.bf16.msra.mxu0 0
        %3044 = vmatpush.bf16.msra.mxu0 %v2842
        %3045 = vmatpush.bf16.msra.mxu0 %v2841
        %3046 = vmatpush.bf16.msra.mxu0 %v2840
        %3047 = vmatpush.bf16.msra.mxu0 %v2839
        %3048 = vmatmul.bf16.gmra.mxu0 %v2849
        %v3049 = vpop.f32.mrf.mxu0
        %v3050 = vadd.f32 %v2821, %v3049
        %v3051 = vpop.f32.mrf.mxu0
        %v3052 = vadd.f32 %v2821, %v3051
        %3053 = vmatmul.bf16.gmra.mxu0 %v2852
        %v3054 = vpop.f32.mrf.mxu0
        %v3055 = vadd.f32 %v2821, %v3054
        %v3056 = vpop.f32.mrf.mxu0
        %v3057 = vadd.f32 %v2821, %v3056
        %3058 = vmatmul.bf16.gmra.mxu0 %v2855
        %v3059 = vpop.f32.mrf.mxu0
        %v3060 = vadd.f32 %v2821, %v3059
        %v3061 = vpop.f32.mrf.mxu0
        %v3062 = vadd.f32 %v2821, %v3061
        %3063 = vmatmul.bf16.gmra.mxu0 %v2858
        %v3064 = vpop.f32.mrf.mxu0
        %v3065 = vadd.f32 %v2821, %v3064
        %v3066 = vpop.f32.mrf.mxu0
        %v3067 = vadd.f32 %v2821, %v3066
        %3068 = vmatmul.bf16.gmra.mxu0 %v2861
        %v3069 = vpop.f32.mrf.mxu0
        %v3070 = vadd.f32 %v2821, %v3069
        %v3071 = vpop.f32.mrf.mxu0
        %v3072 = vadd.f32 %v2821, %v3071
        %3073 = vmatmul.bf16.gmra.mxu0 %v2864
        %v3074 = vpop.f32.mrf.mxu0
        %v3075 = vadd.f32 %v2821, %v3074
        %v3076 = vpop.f32.mrf.mxu0
        %v3077 = vadd.f32 %v2821, %v3076
        %3078 = vmatmul.bf16.gmra.mxu0 %v2867
        %v3079 = vpop.f32.mrf.mxu0
        %v3080 = vadd.f32 %v2821, %v3079
        %v3081 = vpop.f32.mrf.mxu0
        %v3082 = vadd.f32 %v2821, %v3081
        %3083 = vmatmul.bf16.gmra.mxu0 %v2870
        %v3084 = vpop.f32.mrf.mxu0
        %v3085 = vadd.f32 %v2821, %v3084
        %v3086 = vpop.f32.mrf.mxu0
        %v3087 = vadd.f32 %v2821, %v3086
        %3088 = vmatmul.bf16.gmra.mxu0 %v2873
        %v3089 = vpop.f32.mrf.mxu0
        %v3090 = vadd.f32 %v2821, %v3089
        %v3091 = vpop.f32.mrf.mxu0
        %v3092 = vadd.f32 %v2821, %v3091
        %3093 = vmatmul.bf16.gmra.mxu0 %v2876
        %v3094 = vpop.f32.mrf.mxu0
        %v3095 = vadd.f32 %v2821, %v3094
        %v3096 = vpop.f32.mrf.mxu0
        %v3097 = vadd.f32 %v2821, %v3096
        %3098 = vmatmul.bf16.gmra.mxu0 %v2879
        %v3099 = vpop.f32.mrf.mxu0
        %v3100 = vadd.f32 %v2821, %v3099
        %v3101 = vpop.f32.mrf.mxu0
        %v3102 = vadd.f32 %v2821, %v3101
        %3103 = vmatmul.bf16.gmra.mxu0 %v2882
        %v3104 = vpop.f32.mrf.mxu0
        %v3105 = vadd.f32 %v2821, %v3104
        %v3106 = vpop.f32.mrf.mxu0
        %v3107 = vadd.f32 %v2821, %v3106
        %3108 = vmatmul.bf16.gmra.mxu0 %v2885
        %v3109 = vpop.f32.mrf.mxu0
        %v3110 = vadd.f32 %v2821, %v3109
        %v3111 = vpop.f32.mrf.mxu0
        %v3112 = vadd.f32 %v2821, %v3111
        %3113 = vmatmul.bf16.gmra.mxu0 %v2888
        %v3114 = vpop.f32.mrf.mxu0
        %v3115 = vadd.f32 %v2821, %v3114
        %v3116 = vpop.f32.mrf.mxu0
        %v3117 = vadd.f32 %v2821, %v3116
        %3118 = vmatmul.bf16.gmra.mxu0 %v2891
        %v3119 = vpop.f32.mrf.mxu0
        %v3120 = vadd.f32 %v2821, %v3119
        %v3121 = vpop.f32.mrf.mxu0
        %v3122 = vadd.f32 %v2821, %v3121
        %3123 = vmatmul.bf16.gmra.mxu0 %v2894
        %v3124 = vpop.f32.mrf.mxu0
        %v3125 = vadd.f32 %v2821, %v3124
        %v3126 = vpop.f32.mrf.mxu0
        %v3127 = vadd.f32 %v2821, %v3126
        %3128 = vmatmul.bf16.gmra.mxu0 %v2897
        %v3129 = vpop.f32.mrf.mxu0
        %v3130 = vadd.f32 %v2821, %v3129
        %v3131 = vpop.f32.mrf.mxu0
        %v3132 = vadd.f32 %v2821, %v3131
        %3133 = vmatmul.bf16.gmra.mxu0 %v2900
        %v3134 = vpop.f32.mrf.mxu0
        %v3135 = vadd.f32 %v2821, %v3134
        %v3136 = vpop.f32.mrf.mxu0
        %v3137 = vadd.f32 %v2821, %v3136
        %3138 = vmatmul.bf16.gmra.mxu0 %v2903
        %v3139 = vpop.f32.mrf.mxu0
        %v3140 = vadd.f32 %v2821, %v3139
        %v3141 = vpop.f32.mrf.mxu0
        %v3142 = vadd.f32 %v2821, %v3141
        %3143 = vmatmul.bf16.gmra.mxu0 %v2906
        %v3144 = vpop.f32.mrf.mxu0
        %v3145 = vadd.f32 %v2821, %v3144
        %v3146 = vpop.f32.mrf.mxu0
        %v3147 = vadd.f32 %v2821, %v3146
        %3148 = vmatmul.bf16.gmra.mxu0 %v2909
        %v3149 = vpop.f32.mrf.mxu0
        %v3150 = vadd.f32 %v2821, %v3149
        %v3151 = vpop.f32.mrf.mxu0
        %v3152 = vadd.f32 %v2821, %v3151
        %3153 = vmatmul.bf16.gmra.mxu0 %v2912
        %v3154 = vpop.f32.mrf.mxu0
        %v3155 = vadd.f32 %v2821, %v3154
        %v3156 = vpop.f32.mrf.mxu0
        %v3157 = vadd.f32 %v2821, %v3156
        %3158 = vmatmul.bf16.gmra.mxu0 %v2915
        %v3159 = vpop.f32.mrf.mxu0
        %v3160 = vadd.f32 %v2821, %v3159
        %v3161 = vpop.f32.mrf.mxu0
        %v3162 = vadd.f32 %v2821, %v3161
        %3163 = vmatmul.bf16.gmra.mxu0 %v2918
        %v3164 = vpop.f32.mrf.mxu0
        %v3165 = vadd.f32 %v2821, %v3164
        %v3166 = vpop.f32.mrf.mxu0
        %v3167 = vadd.f32 %v2821, %v3166
        %3168 = vmatmul.bf16.gmra.mxu0 %v2921
        %v3169 = vpop.f32.mrf.mxu0
        %v3170 = vadd.f32 %v2821, %v3169
        %v3171 = vpop.f32.mrf.mxu0
        %v3172 = vadd.f32 %v2821, %v3171
        %3173 = vmatmul.bf16.gmra.mxu0 %v2924
        %v3174 = vpop.f32.mrf.mxu0
        %v3175 = vadd.f32 %v2821, %v3174
        %v3176 = vpop.f32.mrf.mxu0
        %v3177 = vadd.f32 %v2821, %v3176
        %3178 = vmatmul.bf16.gmra.mxu0 %v2927
        %v3179 = vpop.f32.mrf.mxu0
        %v3180 = vadd.f32 %v2821, %v3179
        %v3181 = vpop.f32.mrf.mxu0
        %v3182 = vadd.f32 %v2821, %v3181
        %3183 = vmatmul.bf16.gmra.mxu0 %v2930
        %v3184 = vpop.f32.mrf.mxu0
        %v3185 = vadd.f32 %v2821, %v3184
        %v3186 = vpop.f32.mrf.mxu0
        %v3187 = vadd.f32 %v2821, %v3186
        %3188 = vmatmul.bf16.gmra.mxu0 %v2933
        %v3189 = vpop.f32.mrf.mxu0
        %v3190 = vadd.f32 %v2821, %v3189
        %v3191 = vpop.f32.mrf.mxu0
        %v3192 = vadd.f32 %v2821, %v3191
        %3193 = vmatmul.bf16.gmra.mxu0 %v2936
        %v3194 = vpop.f32.mrf.mxu0
        %v3195 = vadd.f32 %v2821, %v3194
        %v3196 = vpop.f32.mrf.mxu0
        %v3197 = vadd.f32 %v2821, %v3196
        %3198 = vmatmul.bf16.gmra.mxu0 %v2939
        %v3199 = vpop.f32.mrf.mxu0
        %v3200 = vadd.f32 %v2821, %v3199
        %v3201 = vpop.f32.mrf.mxu0
        %v3202 = vadd.f32 %v2821, %v3201
        %3203 = vmatmul.bf16.gmra.mxu0 %v2942
        %v3204 = vpop.f32.mrf.mxu0
        %v3205 = vadd.f32 %v2821, %v3204
        %v3206 = vpop.f32.mrf.mxu0
        %v3207 = vadd.f32 %v2821, %v3206
        %3208 = vmatmul.bf16.gmra.mxu0 %v2945
        %v3209 = vpop.f32.mrf.mxu0
        %v3210 = vadd.f32 %v2821, %v3209
        %v3211 = vpop.f32.mrf.mxu0
        %v3212 = vadd.f32 %v2821, %v3211
        %3213 = vmatmul.bf16.gmra.mxu0 %v2948
        %v3214 = vpop.f32.mrf.mxu0
        %v3215 = vadd.f32 %v2821, %v3214
        %v3216 = vpop.f32.mrf.mxu0
        %v3217 = vadd.f32 %v2821, %v3216
        %3218 = vmatmul.bf16.gmra.mxu0 %v2951
        %v3219 = vpop.f32.mrf.mxu0
        %v3220 = vadd.f32 %v2821, %v3219
        %v3221 = vpop.f32.mrf.mxu0
        %v3222 = vadd.f32 %v2821, %v3221
        %3223 = vmatmul.bf16.gmra.mxu0 %v2954
        %v3224 = vpop.f32.mrf.mxu0
        %v3225 = vadd.f32 %v2821, %v3224
        %v3226 = vpop.f32.mrf.mxu0
        %v3227 = vadd.f32 %v2821, %v3226
        %3228 = vmatmul.bf16.gmra.mxu0 %v2957
        %v3229 = vpop.f32.mrf.mxu0
        %v3230 = vadd.f32 %v2821, %v3229
        %v3231 = vpop.f32.mrf.mxu0
        %v3232 = vadd.f32 %v2821, %v3231
        %3233 = vmatmul.bf16.gmra.mxu0 %v2960
        %v3234 = vpop.f32.mrf.mxu0
        %v3235 = vadd.f32 %v2821, %v3234
        %v3236 = vpop.f32.mrf.mxu0
        %v3237 = vadd.f32 %v2821, %v3236
        %3238 = vmatmul.bf16.gmra.mxu0 %v2963
        %v3239 = vpop.f32.mrf.mxu0
        %v3240 = vadd.f32 %v2821, %v3239
        %v3241 = vpop.f32.mrf.mxu0
        %v3242 = vadd.f32 %v2821, %v3241
        %3243 = vmatmul.bf16.gmra.mxu0 %v2966
        %v3244 = vpop.f32.mrf.mxu0
        %v3245 = vadd.f32 %v2821, %v3244
        %v3246 = vpop.f32.mrf.mxu0
        %v3247 = vadd.f32 %v2821, %v3246
        %3248 = vmatmul.bf16.gmra.mxu0 %v2969
        %v3249 = vpop.f32.mrf.mxu0
        %v3250 = vadd.f32 %v2821, %v3249
        %v3251 = vpop.f32.mrf.mxu0
        %v3252 = vadd.f32 %v2821, %v3251
        %3253 = vmatmul.bf16.gmra.mxu0 %v2972
        %v3254 = vpop.f32.mrf.mxu0
        %v3255 = vadd.f32 %v2821, %v3254
        %v3256 = vpop.f32.mrf.mxu0
        %v3257 = vadd.f32 %v2821, %v3256
        %3258 = vmatmul.bf16.gmra.mxu0 %v2975
        %v3259 = vpop.f32.mrf.mxu0
        %v3260 = vadd.f32 %v2821, %v3259
        %v3261 = vpop.f32.mrf.mxu0
        %v3262 = vadd.f32 %v2821, %v3261
        %3263 = vmatmul.bf16.gmra.mxu0 %v2978
        %v3264 = vpop.f32.mrf.mxu0
        %v3265 = vadd.f32 %v2821, %v3264
        %v3266 = vpop.f32.mrf.mxu0
        %v3267 = vadd.f32 %v2821, %v3266
        %3268 = vmatmul.bf16.gmra.mxu0 %v2981
        %v3269 = vpop.f32.mrf.mxu0
        %v3270 = vadd.f32 %v2821, %v3269
        %v3271 = vpop.f32.mrf.mxu0
        %v3272 = vadd.f32 %v2821, %v3271
        %3273 = vmatmul.bf16.gmra.mxu0 %v2984
        %v3274 = vpop.f32.mrf.mxu0
        %v3275 = vadd.f32 %v2821, %v3274
        %v3276 = vpop.f32.mrf.mxu0
        %v3277 = vadd.f32 %v2821, %v3276
        %3278 = vmatmul.bf16.gmra.mxu0 %v2987
        %v3279 = vpop.f32.mrf.mxu0
        %v3280 = vadd.f32 %v2821, %v3279
        %v3281 = vpop.f32.mrf.mxu0
        %v3282 = vadd.f32 %v2821, %v3281
        %3283 = vmatmul.bf16.gmra.mxu0 %v2990
        %v3284 = vpop.f32.mrf.mxu0
        %v3285 = vadd.f32 %v2821, %v3284
        %v3286 = vpop.f32.mrf.mxu0
        %v3287 = vadd.f32 %v2821, %v3286
        %3288 = vmatmul.bf16.gmra.mxu0 %v2993
        %v3289 = vpop.f32.mrf.mxu0
        %v3290 = vadd.f32 %v2821, %v3289
        %v3291 = vpop.f32.mrf.mxu0
        %v3292 = vadd.f32 %v2821, %v3291
        %3293 = vmatmul.bf16.gmra.mxu0 %v2996
        %v3294 = vpop.f32.mrf.mxu0
        %v3295 = vadd.f32 %v2821, %v3294
        %v3296 = vpop.f32.mrf.mxu0
        %v3297 = vadd.f32 %v2821, %v3296
        %3298 = vmatmul.bf16.gmra.mxu0 %v2999
        %v3299 = vpop.f32.mrf.mxu0
        %v3300 = vadd.f32 %v2821, %v3299
        %v3301 = vpop.f32.mrf.mxu0
        %v3302 = vadd.f32 %v2821, %v3301
        %3303 = vmatmul.bf16.gmra.mxu0 %v3002
        %v3304 = vpop.f32.mrf.mxu0
        %v3305 = vadd.f32 %v2821, %v3304
        %v3306 = vpop.f32.mrf.mxu0
        %v3307 = vadd.f32 %v2821, %v3306
        %3308 = vmatmul.bf16.gmra.mxu0 %v3005
        %v3309 = vpop.f32.mrf.mxu0
        %v3310 = vadd.f32 %v2821, %v3309
        %v3311 = vpop.f32.mrf.mxu0
        %v3312 = vadd.f32 %v2821, %v3311
        %3313 = vmatmul.bf16.gmra.mxu0 %v3008
        %v3314 = vpop.f32.mrf.mxu0
        %v3315 = vadd.f32 %v2821, %v3314
        %v3316 = vpop.f32.mrf.mxu0
        %v3317 = vadd.f32 %v2821, %v3316
        %3318 = vmatmul.bf16.gmra.mxu0 %v3011
        %v3319 = vpop.f32.mrf.mxu0
        %v3320 = vadd.f32 %v2821, %v3319
        %v3321 = vpop.f32.mrf.mxu0
        %v3322 = vadd.f32 %v2821, %v3321
        %3323 = vmatmul.bf16.gmra.mxu0 %v3014
        %v3324 = vpop.f32.mrf.mxu0
        %v3325 = vadd.f32 %v2821, %v3324
        %v3326 = vpop.f32.mrf.mxu0
        %v3327 = vadd.f32 %v2821, %v3326
        %3328 = vmatmul.bf16.gmra.mxu0 %v3017
        %v3329 = vpop.f32.mrf.mxu0
        %v3330 = vadd.f32 %v2821, %v3329
        %v3331 = vpop.f32.mrf.mxu0
        %v3332 = vadd.f32 %v2821, %v3331
        %3333 = vmatmul.bf16.gmra.mxu0 %v3020
        %v3334 = vpop.f32.mrf.mxu0
        %v3335 = vadd.f32 %v2821, %v3334
        %v3336 = vpop.f32.mrf.mxu0
        %v3337 = vadd.f32 %v2821, %v3336
        %3338 = vmatmul.bf16.gmra.mxu0 %v3023
        %v3339 = vpop.f32.mrf.mxu0
        %v3340 = vadd.f32 %v2821, %v3339
        %v3341 = vpop.f32.mrf.mxu0
        %v3342 = vadd.f32 %v2821, %v3341
        %3343 = vmatmul.bf16.gmra.mxu0 %v3026
        %v3344 = vpop.f32.mrf.mxu0
        %v3345 = vadd.f32 %v2821, %v3344
        %v3346 = vpop.f32.mrf.mxu0
        %v3347 = vadd.f32 %v2821, %v3346
        %3348 = vmatmul.bf16.gmra.mxu0 %v3029
        %v3349 = vpop.f32.mrf.mxu0
        %v3350 = vadd.f32 %v2821, %v3349
        %v3351 = vpop.f32.mrf.mxu0
        %v3352 = vadd.f32 %v2821, %v3351
        %3353 = vmatmul.bf16.gmra.mxu0 %v3032
        %v3354 = vpop.f32.mrf.mxu0
        %v3355 = vadd.f32 %v2821, %v3354
        %v3356 = vpop.f32.mrf.mxu0
        %v3357 = vadd.f32 %v2821, %v3356
        %3358 = vmatmul.bf16.gmra.mxu0 %v3035
        %v3359 = vpop.f32.mrf.mxu0
        %v3360 = vadd.f32 %v2821, %v3359
        %v3361 = vpop.f32.mrf.mxu0
        %v3362 = vadd.f32 %v2821, %v3361
        %3363 = vmatmul.bf16.gmra.mxu0 %v3038
        %v3364 = vpop.f32.mrf.mxu0
        %v3365 = vadd.f32 %v2821, %v3364
        %v3366 = vpop.f32.mrf.mxu0
        %v3367 = vadd.f32 %v2821, %v3366
        %3368 = vdwg.mxu0
        %v3369 = vmul.f32 %v3050, 0.5
        %v3370 = vmul.f32 %v3052, 0.5
        %v3371 = vmul.f32 %v3055, 0.5
        %v3372 = vmul.f32 %v3057, 0.5
        %v3373 = vmul.f32 %v3060, 0.5
        %v3374 = vmul.f32 %v3062, 0.5
        %v3375 = vmul.f32 %v3065, 0.5
        %v3376 = vmul.f32 %v3067, 0.5
        %v3377 = vmul.f32 %v3070, 0.5
        %v3378 = vmul.f32 %v3072, 0.5
        %v3379 = vmul.f32 %v3075, 0.5
        %v3380 = vmul.f32 %v3077, 0.5
        %v3381 = vmul.f32 %v3080, 0.5
        %v3382 = vmul.f32 %v3082, 0.5
        %v3383 = vmul.f32 %v3085, 0.5
        %v3384 = vmul.f32 %v3087, 0.5
        %v3385 = vmul.f32 %v3090, 0.5
        %v3386 = vmul.f32 %v3092, 0.5
        %v3387 = vmul.f32 %v3095, 0.5
        %v3388 = vmul.f32 %v3097, 0.5
        %v3389 = vmul.f32 %v3100, 0.5
        %v3390 = vmul.f32 %v3102, 0.5
        %v3391 = vmul.f32 %v3105, 0.5
        %v3392 = vmul.f32 %v3107, 0.5
        %v3393 = vmul.f32 %v3110, 0.5
        %v3394 = vmul.f32 %v3112, 0.5
        %v3395 = vmul.f32 %v3115, 0.5
        %v3396 = vmul.f32 %v3117, 0.5
        %v3397 = vmul.f32 %v3120, 0.5
        %v3398 = vmul.f32 %v3122, 0.5
        %v3399 = vmul.f32 %v3125, 0.5
        %v3400 = vmul.f32 %v3127, 0.5
        %v3401 = vmul.f32 %v3130, 0.5
        %v3402 = vmul.f32 %v3132, 0.5
        %v3403 = vmul.f32 %v3135, 0.5
        %v3404 = vmul.f32 %v3137, 0.5
        %v3405 = vmul.f32 %v3140, 0.5
        %v3406 = vmul.f32 %v3142, 0.5
        %v3407 = vmul.f32 %v3145, 0.5
        %v3408 = vmul.f32 %v3147, 0.5
        %v3409 = vmul.f32 %v3150, 0.5
        %v3410 = vmul.f32 %v3152, 0.5
        %v3411 = vmul.f32 %v3155, 0.5
        %v3412 = vmul.f32 %v3157, 0.5
        %v3413 = vmul.f32 %v3160, 0.5
        %v3414 = vmul.f32 %v3162, 0.5
        %v3415 = vmul.f32 %v3165, 0.5
        %v3416 = vmul.f32 %v3167, 0.5
        %v3417 = vmul.f32 %v3170, 0.5
        %v3418 = vmul.f32 %v3172, 0.5
        %v3419 = vmul.f32 %v3175, 0.5
        %v3420 = vmul.f32 %v3177, 0.5
        %v3421 = vmul.f32 %v3180, 0.5
        %v3422 = vmul.f32 %v3182, 0.5
        %v3423 = vmul.f32 %v3185, 0.5
        %v3424 = vmul.f32 %v3187, 0.5
        %v3425 = vmul.f32 %v3190, 0.5
        %v3426 = vmul.f32 %v3192, 0.5
        %v3427 = vmul.f32 %v3195, 0.5
        %v3428 = vmul.f32 %v3197, 0.5
        %v3429 = vmul.f32 %v3200, 0.5
        %v3430 = vmul.f32 %v3202, 0.5
        %v3431 = vmul.f32 %v3205, 0.5
        %v3432 = vmul.f32 %v3207, 0.5
        %v3433 = vmul.f32 %v3210, 0.5
        %v3434 = vmul.f32 %v3212, 0.5
        %v3435 = vmul.f32 %v3215, 0.5
        %v3436 = vmul.f32 %v3217, 0.5
        %v3437 = vmul.f32 %v3220, 0.5
        %v3438 = vmul.f32 %v3222, 0.5
        %v3439 = vmul.f32 %v3225, 0.5
        %v3440 = vmul.f32 %v3227, 0.5
        %v3441 = vmul.f32 %v3230, 0.5
        %v3442 = vmul.f32 %v3232, 0.5
        %v3443 = vmul.f32 %v3235, 0.5
        %v3444 = vmul.f32 %v3237, 0.5
        %v3445 = vmul.f32 %v3240, 0.5
        %v3446 = vmul.f32 %v3242, 0.5
        %v3447 = vmul.f32 %v3245, 0.5
        %v3448 = vmul.f32 %v3247, 0.5
        %v3449 = vmul.f32 %v3250, 0.5
        %v3450 = vmul.f32 %v3252, 0.5
        %v3451 = vmul.f32 %v3255, 0.5
        %v3452 = vmul.f32 %v3257, 0.5
        %v3453 = vmul.f32 %v3260, 0.5
        %v3454 = vmul.f32 %v3262, 0.5
        %v3455 = vmul.f32 %v3265, 0.5
        %v3456 = vmul.f32 %v3267, 0.5
        %v3457 = vmul.f32 %v3270, 0.5
        %v3458 = vmul.f32 %v3272, 0.5
        %v3459 = vmul.f32 %v3275, 0.5
        %v3460 = vmul.f32 %v3277, 0.5
        %v3461 = vmul.f32 %v3280, 0.5
        %v3462 = vmul.f32 %v3282, 0.5
        %v3463 = vmul.f32 %v3285, 0.5
        %v3464 = vmul.f32 %v3287, 0.5
        %v3465 = vmul.f32 %v3290, 0.5
        %v3466 = vmul.f32 %v3292, 0.5
        %v3467 = vmul.f32 %v3295, 0.5
        %v3468 = vmul.f32 %v3297, 0.5
        %v3469 = vmul.f32 %v3300, 0.5
        %v3470 = vmul.f32 %v3302, 0.5
        %v3471 = vmul.f32 %v3305, 0.5
        %v3472 = vmul.f32 %v3307, 0.5
        %v3473 = vmul.f32 %v3310, 0.5
        %v3474 = vmul.f32 %v3312, 0.5
        %v3475 = vmul.f32 %v3315, 0.5
        %v3476 = vmul.f32 %v3317, 0.5
        %v3477 = vmul.f32 %v3320, 0.5
        %v3478 = vmul.f32 %v3322, 0.5
        %v3479 = vmul.f32 %v3325, 0.5
        %v3480 = vmul.f32 %v3327, 0.5
        %v3481 = vmul.f32 %v3330, 0.5
        %v3482 = vmul.f32 %v3332, 0.5
        %v3483 = vmul.f32 %v3335, 0.5
        %v3484 = vmul.f32 %v3337, 0.5
        %v3485 = vmul.f32 %v3340, 0.5
        %v3486 = vmul.f32 %v3342, 0.5
        %v3487 = vmul.f32 %v3345, 0.5
        %v3488 = vmul.f32 %v3347, 0.5
        %v3489 = vmul.f32 %v3350, 0.5
        %v3490 = vmul.f32 %v3352, 0.5
        %v3491 = vmul.f32 %v3355, 0.5
        %v3492 = vmul.f32 %v3357, 0.5
        %v3493 = vmul.f32 %v3360, 0.5
        %v3494 = vmul.f32 %v3362, 0.5
        %v3495 = vmul.f32 %v3365, 0.5
        %v3496 = vmul.f32 %v3367, 0.5
        %v3497 = vtanh.pop %v3369
        %v3498 = vtanh.pop %v3370
        %v3499 = vtanh.pop %v3371
        %v3500 = vtanh.pop %v3372
        %v3501 = vtanh.pop %v3373
        %v3502 = vtanh.pop %v3374
        %v3503 = vtanh.pop %v3375
        %v3504 = vtanh.pop %v3376
        %v3505 = vtanh.pop %v3377
        %v3506 = vtanh.pop %v3378
        %v3507 = vtanh.pop %v3379
        %v3508 = vtanh.pop %v3380
        %v3509 = vtanh.pop %v3381
        %v3510 = vtanh.pop %v3382
        %v3511 = vtanh.pop %v3383
        %v3512 = vtanh.pop %v3384
        %v3513 = vtanh.pop %v3385
        %v3514 = vtanh.pop %v3386
        %v3515 = vtanh.pop %v3387
        %v3516 = vtanh.pop %v3388
        %v3517 = vtanh.pop %v3389
        %v3518 = vtanh.pop %v3390
        %v3519 = vtanh.pop %v3391
        %v3520 = vtanh.pop %v3392
        %v3521 = vtanh.pop %v3393
        %v3522 = vtanh.pop %v3394
        %v3523 = vtanh.pop %v3395
        %v3524 = vtanh.pop %v3396
        %v3525 = vtanh.pop %v3397
        %v3526 = vtanh.pop %v3398
        %v3527 = vtanh.pop %v3399
        %v3528 = vtanh.pop %v3400
        %v3529 = vtanh.pop %v3401
        %v3530 = vtanh.pop %v3402
        %v3531 = vtanh.pop %v3403
        %v3532 = vtanh.pop %v3404
        %v3533 = vtanh.pop %v3405
        %v3534 = vtanh.pop %v3406
        %v3535 = vtanh.pop %v3407
        %v3536 = vtanh.pop %v3408
        %v3537 = vtanh.pop %v3409
        %v3538 = vtanh.pop %v3410
        %v3539 = vtanh.pop %v3411
        %v3540 = vtanh.pop %v3412
        %v3541 = vtanh.pop %v3413
        %v3542 = vtanh.pop %v3414
        %v3543 = vtanh.pop %v3415
        %v3544 = vtanh.pop %v3416
        %v3545 = vtanh.pop %v3417
        %v3546 = vtanh.pop %v3418
        %v3547 = vtanh.pop %v3419
        %v3548 = vtanh.pop %v3420
        %v3549 = vtanh.pop %v3421
        %v3550 = vtanh.pop %v3422
        %v3551 = vtanh.pop %v3423
        %v3552 = vtanh.pop %v3424
        %v3553 = vtanh.pop %v3425
        %v3554 = vtanh.pop %v3426
        %v3555 = vtanh.pop %v3427
        %v3556 = vtanh.pop %v3428
        %v3557 = vtanh.pop %v3429
        %v3558 = vtanh.pop %v3430
        %v3559 = vtanh.pop %v3431
        %v3560 = vtanh.pop %v3432
        %v3561 = vtanh.pop %v3433
        %v3562 = vtanh.pop %v3434
        %v3563 = vtanh.pop %v3435
        %v3564 = vtanh.pop %v3436
        %v3565 = vtanh.pop %v3437
        %v3566 = vtanh.pop %v3438
        %v3567 = vtanh.pop %v3439
        %v3568 = vtanh.pop %v3440
        %v3569 = vtanh.pop %v3441
        %v3570 = vtanh.pop %v3442
        %v3571 = vtanh.pop %v3443
        %v3572 = vtanh.pop %v3444
        %v3573 = vtanh.pop %v3445
        %v3574 = vtanh.pop %v3446
        %v3575 = vtanh.pop %v3447
        %v3576 = vtanh.pop %v3448
        %v3577 = vtanh.pop %v3449
        %v3578 = vtanh.pop %v3450
        %v3579 = vtanh.pop %v3451
        %v3580 = vtanh.pop %v3452
        %v3581 = vtanh.pop %v3453
        %v3582 = vtanh.pop %v3454
        %v3583 = vtanh.pop %v3455
        %v3584 = vtanh.pop %v3456
        %v3585 = vtanh.pop %v3457
        %v3586 = vtanh.pop %v3458
        %v3587 = vtanh.pop %v3459
        %v3588 = vtanh.pop %v3460
        %v3589 = vtanh.pop %v3461
        %v3590 = vtanh.pop %v3462
        %v3591 = vtanh.pop %v3463
        %v3592 = vtanh.pop %v3464
        %v3593 = vtanh.pop %v3465
        %v3594 = vtanh.pop %v3466
        %v3595 = vtanh.pop %v3467
        %v3596 = vtanh.pop %v3468
        %v3597 = vtanh.pop %v3469
        %v3598 = vtanh.pop %v3470
        %v3599 = vtanh.pop %v3471
        %v3600 = vtanh.pop %v3472
        %v3601 = vtanh.pop %v3473
        %v3602 = vtanh.pop %v3474
        %v3603 = vtanh.pop %v3475
        %v3604 = vtanh.pop %v3476
        %v3605 = vtanh.pop %v3477
        %v3606 = vtanh.pop %v3478
        %v3607 = vtanh.pop %v3479
        %v3608 = vtanh.pop %v3480
        %v3609 = vtanh.pop %v3481
        %v3610 = vtanh.pop %v3482
        %v3611 = vtanh.pop %v3483
        %v3612 = vtanh.pop %v3484
        %v3613 = vtanh.pop %v3485
        %v3614 = vtanh.pop %v3486
        %v3615 = vtanh.pop %v3487
        %v3616 = vtanh.pop %v3488
        %v3617 = vtanh.pop %v3489
        %v3618 = vtanh.pop %v3490
        %v3619 = vtanh.pop %v3491
        %v3620 = vtanh.pop %v3492
        %v3621 = vtanh.pop %v3493
        %v3622 = vtanh.pop %v3494
        %v3623 = vtanh.pop %v3495
        %v3624 = vtanh.pop %v3496
        %v3625 = vadd.f32 %v3497, 1.0
        %v3626 = vadd.f32 %v3498, 1.0
        %v3627 = vadd.f32 %v3499, 1.0
        %v3628 = vadd.f32 %v3500, 1.0
        %v3629 = vadd.f32 %v3501, 1.0
        %v3630 = vadd.f32 %v3502, 1.0
        %v3631 = vadd.f32 %v3503, 1.0
        %v3632 = vadd.f32 %v3504, 1.0
        %v3633 = vadd.f32 %v3505, 1.0
        %v3634 = vadd.f32 %v3506, 1.0
        %v3635 = vadd.f32 %v3507, 1.0
        %v3636 = vadd.f32 %v3508, 1.0
        %v3637 = vadd.f32 %v3509, 1.0
        %v3638 = vadd.f32 %v3510, 1.0
        %v3639 = vadd.f32 %v3511, 1.0
        %v3640 = vadd.f32 %v3512, 1.0
        %v3641 = vadd.f32 %v3513, 1.0
        %v3642 = vadd.f32 %v3514, 1.0
        %v3643 = vadd.f32 %v3515, 1.0
        %v3644 = vadd.f32 %v3516, 1.0
        %v3645 = vadd.f32 %v3517, 1.0
        %v3646 = vadd.f32 %v3518, 1.0
        %v3647 = vadd.f32 %v3519, 1.0
        %v3648 = vadd.f32 %v3520, 1.0
        %v3649 = vadd.f32 %v3521, 1.0
        %v3650 = vadd.f32 %v3522, 1.0
        %v3651 = vadd.f32 %v3523, 1.0
        %v3652 = vadd.f32 %v3524, 1.0
        %v3653 = vadd.f32 %v3525, 1.0
        %v3654 = vadd.f32 %v3526, 1.0
        %v3655 = vadd.f32 %v3527, 1.0
        %v3656 = vadd.f32 %v3528, 1.0
        %v3657 = vadd.f32 %v3529, 1.0
        %v3658 = vadd.f32 %v3530, 1.0
        %v3659 = vadd.f32 %v3531, 1.0
        %v3660 = vadd.f32 %v3532, 1.0
        %v3661 = vadd.f32 %v3533, 1.0
        %v3662 = vadd.f32 %v3534, 1.0
        %v3663 = vadd.f32 %v3535, 1.0
        %v3664 = vadd.f32 %v3536, 1.0
        %v3665 = vadd.f32 %v3537, 1.0
        %v3666 = vadd.f32 %v3538, 1.0
        %v3667 = vadd.f32 %v3539, 1.0
        %v3668 = vadd.f32 %v3540, 1.0
        %v3669 = vadd.f32 %v3541, 1.0
        %v3670 = vadd.f32 %v3542, 1.0
        %v3671 = vadd.f32 %v3543, 1.0
        %v3672 = vadd.f32 %v3544, 1.0
        %v3673 = vadd.f32 %v3545, 1.0
        %v3674 = vadd.f32 %v3546, 1.0
        %v3675 = vadd.f32 %v3547, 1.0
        %v3676 = vadd.f32 %v3548, 1.0
        %v3677 = vadd.f32 %v3549, 1.0
        %v3678 = vadd.f32 %v3550, 1.0
        %v3679 = vadd.f32 %v3551, 1.0
        %v3680 = vadd.f32 %v3552, 1.0
        %v3681 = vadd.f32 %v3553, 1.0
        %v3682 = vadd.f32 %v3554, 1.0
        %v3683 = vadd.f32 %v3555, 1.0
        %v3684 = vadd.f32 %v3556, 1.0
        %v3685 = vadd.f32 %v3557, 1.0
        %v3686 = vadd.f32 %v3558, 1.0
        %v3687 = vadd.f32 %v3559, 1.0
        %v3688 = vadd.f32 %v3560, 1.0
        %v3689 = vadd.f32 %v3561, 1.0
        %v3690 = vadd.f32 %v3562, 1.0
        %v3691 = vadd.f32 %v3563, 1.0
        %v3692 = vadd.f32 %v3564, 1.0
        %v3693 = vadd.f32 %v3565, 1.0
        %v3694 = vadd.f32 %v3566, 1.0
        %v3695 = vadd.f32 %v3567, 1.0
        %v3696 = vadd.f32 %v3568, 1.0
        %v3697 = vadd.f32 %v3569, 1.0
        %v3698 = vadd.f32 %v3570, 1.0
        %v3699 = vadd.f32 %v3571, 1.0
        %v3700 = vadd.f32 %v3572, 1.0
        %v3701 = vadd.f32 %v3573, 1.0
        %v3702 = vadd.f32 %v3574, 1.0
        %v3703 = vadd.f32 %v3575, 1.0
        %v3704 = vadd.f32 %v3576, 1.0
        %v3705 = vadd.f32 %v3577, 1.0
        %v3706 = vadd.f32 %v3578, 1.0
        %v3707 = vadd.f32 %v3579, 1.0
        %v3708 = vadd.f32 %v3580, 1.0
        %v3709 = vadd.f32 %v3581, 1.0
        %v3710 = vadd.f32 %v3582, 1.0
        %v3711 = vadd.f32 %v3583, 1.0
        %v3712 = vadd.f32 %v3584, 1.0
        %v3713 = vadd.f32 %v3585, 1.0
        %v3714 = vadd.f32 %v3586, 1.0
        %v3715 = vadd.f32 %v3587, 1.0
        %v3716 = vadd.f32 %v3588, 1.0
        %v3717 = vadd.f32 %v3589, 1.0
        %v3718 = vadd.f32 %v3590, 1.0
        %v3719 = vadd.f32 %v3591, 1.0
        %v3720 = vadd.f32 %v3592, 1.0
        %v3721 = vadd.f32 %v3593, 1.0
        %v3722 = vadd.f32 %v3594, 1.0
        %v3723 = vadd.f32 %v3595, 1.0
        %v3724 = vadd.f32 %v3596, 1.0
        %v3725 = vadd.f32 %v3597, 1.0
        %v3726 = vadd.f32 %v3598, 1.0
        %v3727 = vadd.f32 %v3599, 1.0
        %v3728 = vadd.f32 %v3600, 1.0
        %v3729 = vadd.f32 %v3601, 1.0
        %v3730 = vadd.f32 %v3602, 1.0
        %v3731 = vadd.f32 %v3603, 1.0
        %v3732 = vadd.f32 %v3604, 1.0
        %v3733 = vadd.f32 %v3605, 1.0
        %v3734 = vadd.f32 %v3606, 1.0
        %v3735 = vadd.f32 %v3607, 1.0
        %v3736 = vadd.f32 %v3608, 1.0
        %v3737 = vadd.f32 %v3609, 1.0
        %v3738 = vadd.f32 %v3610, 1.0
        %v3739 = vadd.f32 %v3611, 1.0
        %v3740 = vadd.f32 %v3612, 1.0
        %v3741 = vadd.f32 %v3613, 1.0
        %v3742 = vadd.f32 %v3614, 1.0
        %v3743 = vadd.f32 %v3615, 1.0
        %v3744 = vadd.f32 %v3616, 1.0
        %v3745 = vadd.f32 %v3617, 1.0
        %v3746 = vadd.f32 %v3618, 1.0
        %v3747 = vadd.f32 %v3619, 1.0
        %v3748 = vadd.f32 %v3620, 1.0
        %v3749 = vadd.f32 %v3621, 1.0
        %v3750 = vadd.f32 %v3622, 1.0
        %v3751 = vadd.f32 %v3623, 1.0
        %v3752 = vadd.f32 %v3624, 1.0
        %v3753 = vmul.f32 %v3369, %v3625
        %v3754 = vmul.f32 %v3370, %v3626
        %v3755 = vmul.f32 %v3371, %v3627
        %v3756 = vmul.f32 %v3372, %v3628
        %v3757 = vmul.f32 %v3373, %v3629
        %v3758 = vmul.f32 %v3374, %v3630
        %v3759 = vmul.f32 %v3375, %v3631
        %v3760 = vmul.f32 %v3376, %v3632
        %v3761 = vmul.f32 %v3377, %v3633
        %v3762 = vmul.f32 %v3378, %v3634
        %v3763 = vmul.f32 %v3379, %v3635
        %v3764 = vmul.f32 %v3380, %v3636
        %v3765 = vmul.f32 %v3381, %v3637
        %v3766 = vmul.f32 %v3382, %v3638
        %v3767 = vmul.f32 %v3383, %v3639
        %v3768 = vmul.f32 %v3384, %v3640
        %v3769 = vmul.f32 %v3385, %v3641
        %v3770 = vmul.f32 %v3386, %v3642
        %v3771 = vmul.f32 %v3387, %v3643
        %v3772 = vmul.f32 %v3388, %v3644
        %v3773 = vmul.f32 %v3389, %v3645
        %v3774 = vmul.f32 %v3390, %v3646
        %v3775 = vmul.f32 %v3391, %v3647
        %v3776 = vmul.f32 %v3392, %v3648
        %v3777 = vmul.f32 %v3393, %v3649
        %v3778 = vmul.f32 %v3394, %v3650
        %v3779 = vmul.f32 %v3395, %v3651
        %v3780 = vmul.f32 %v3396, %v3652
        %v3781 = vmul.f32 %v3397, %v3653
        %v3782 = vmul.f32 %v3398, %v3654
        %v3783 = vmul.f32 %v3399, %v3655
        %v3784 = vmul.f32 %v3400, %v3656
        %v3785 = vmul.f32 %v3401, %v3657
        %v3786 = vmul.f32 %v3402, %v3658
        %v3787 = vmul.f32 %v3403, %v3659
        %v3788 = vmul.f32 %v3404, %v3660
        %v3789 = vmul.f32 %v3405, %v3661
        %v3790 = vmul.f32 %v3406, %v3662
        %v3791 = vmul.f32 %v3407, %v3663
        %v3792 = vmul.f32 %v3408, %v3664
        %v3793 = vmul.f32 %v3409, %v3665
        %v3794 = vmul.f32 %v3410, %v3666
        %v3795 = vmul.f32 %v3411, %v3667
        %v3796 = vmul.f32 %v3412, %v3668
        %v3797 = vmul.f32 %v3413, %v3669
        %v3798 = vmul.f32 %v3414, %v3670
        %v3799 = vmul.f32 %v3415, %v3671
        %v3800 = vmul.f32 %v3416, %v3672
        %v3801 = vmul.f32 %v3417, %v3673
        %v3802 = vmul.f32 %v3418, %v3674
        %v3803 = vmul.f32 %v3419, %v3675
        %v3804 = vmul.f32 %v3420, %v3676
        %v3805 = vmul.f32 %v3421, %v3677
        %v3806 = vmul.f32 %v3422, %v3678
        %v3807 = vmul.f32 %v3423, %v3679
        %v3808 = vmul.f32 %v3424, %v3680
        %v3809 = vmul.f32 %v3425, %v3681
        %v3810 = vmul.f32 %v3426, %v3682
        %v3811 = vmul.f32 %v3427, %v3683
        %v3812 = vmul.f32 %v3428, %v3684
        %v3813 = vmul.f32 %v3429, %v3685
        %v3814 = vmul.f32 %v3430, %v3686
        %v3815 = vmul.f32 %v3431, %v3687
        %v3816 = vmul.f32 %v3432, %v3688
        %v3817 = vmul.f32 %v3433, %v3689
        %v3818 = vmul.f32 %v3434, %v3690
        %v3819 = vmul.f32 %v3435, %v3691
        %v3820 = vmul.f32 %v3436, %v3692
        %v3821 = vmul.f32 %v3437, %v3693
        %v3822 = vmul.f32 %v3438, %v3694
        %v3823 = vmul.f32 %v3439, %v3695
        %v3824 = vmul.f32 %v3440, %v3696
        %v3825 = vmul.f32 %v3441, %v3697
        %v3826 = vmul.f32 %v3442, %v3698
        %v3827 = vmul.f32 %v3443, %v3699
        %v3828 = vmul.f32 %v3444, %v3700
        %v3829 = vmul.f32 %v3445, %v3701
        %v3830 = vmul.f32 %v3446, %v3702
        %v3831 = vmul.f32 %v3447, %v3703
        %v3832 = vmul.f32 %v3448, %v3704
        %v3833 = vmul.f32 %v3449, %v3705
        %v3834 = vmul.f32 %v3450, %v3706
        %v3835 = vmul.f32 %v3451, %v3707
        %v3836 = vmul.f32 %v3452, %v3708
        %v3837 = vmul.f32 %v3453, %v3709
        %v3838 = vmul.f32 %v3454, %v3710
        %v3839 = vmul.f32 %v3455, %v3711
        %v3840 = vmul.f32 %v3456, %v3712
        %v3841 = vmul.f32 %v3457, %v3713
        %v3842 = vmul.f32 %v3458, %v3714
        %v3843 = vmul.f32 %v3459, %v3715
        %v3844 = vmul.f32 %v3460, %v3716
        %v3845 = vmul.f32 %v3461, %v3717
        %v3846 = vmul.f32 %v3462, %v3718
        %v3847 = vmul.f32 %v3463, %v3719
        %v3848 = vmul.f32 %v3464, %v3720
        %v3849 = vmul.f32 %v3465, %v3721
        %v3850 = vmul.f32 %v3466, %v3722
        %v3851 = vmul.f32 %v3467, %v3723
        %v3852 = vmul.f32 %v3468, %v3724
        %v3853 = vmul.f32 %v3469, %v3725
        %v3854 = vmul.f32 %v3470, %v3726
        %v3855 = vmul.f32 %v3471, %v3727
        %v3856 = vmul.f32 %v3472, %v3728
        %v3857 = vmul.f32 %v3473, %v3729
        %v3858 = vmul.f32 %v3474, %v3730
        %v3859 = vmul.f32 %v3475, %v3731
        %v3860 = vmul.f32 %v3476, %v3732
        %v3861 = vmul.f32 %v3477, %v3733
        %v3862 = vmul.f32 %v3478, %v3734
        %v3863 = vmul.f32 %v3479, %v3735
        %v3864 = vmul.f32 %v3480, %v3736
        %v3865 = vmul.f32 %v3481, %v3737
        %v3866 = vmul.f32 %v3482, %v3738
        %v3867 = vmul.f32 %v3483, %v3739
        %v3868 = vmul.f32 %v3484, %v3740
        %v3869 = vmul.f32 %v3485, %v3741
        %v3870 = vmul.f32 %v3486, %v3742
        %v3871 = vmul.f32 %v3487, %v3743
        %v3872 = vmul.f32 %v3488, %v3744
        %v3873 = vmul.f32 %v3489, %v3745
        %v3874 = vmul.f32 %v3490, %v3746
        %v3875 = vmul.f32 %v3491, %v3747
        %v3876 = vmul.f32 %v3492, %v3748
        %v3877 = vmul.f32 %v3493, %v3749
        %v3878 = vmul.f32 %v3494, %v3750
        %v3879 = vmul.f32 %v3495, %v3751
        %v3880 = vmul.f32 %v3496, %v3752
        %v3881 = vpack.c.bf16 %v3754, %v3753
        %v3882 = vpack.c.bf16 %v3756, %v3755
        %v3883 = vpack.c.bf16 %v3758, %v3757
        %v3884 = vpack.c.bf16 %v3760, %v3759
        %v3885 = vpack.c.bf16 %v3762, %v3761
        %v3886 = vpack.c.bf16 %v3764, %v3763
        %v3887 = vpack.c.bf16 %v3766, %v3765
        %v3888 = vpack.c.bf16 %v3768, %v3767
        %v3889 = vpack.c.bf16 %v3770, %v3769
        %v3890 = vpack.c.bf16 %v3772, %v3771
        %v3891 = vpack.c.bf16 %v3774, %v3773
        %v3892 = vpack.c.bf16 %v3776, %v3775
        %v3893 = vpack.c.bf16 %v3778, %v3777
        %v3894 = vpack.c.bf16 %v3780, %v3779
        %v3895 = vpack.c.bf16 %v3782, %v3781
        %v3896 = vpack.c.bf16 %v3784, %v3783
        %v3897 = vpack.c.bf16 %v3786, %v3785
        %v3898 = vpack.c.bf16 %v3788, %v3787
        %v3899 = vpack.c.bf16 %v3790, %v3789
        %v3900 = vpack.c.bf16 %v3792, %v3791
        %v3901 = vpack.c.bf16 %v3794, %v3793
        %v3902 = vpack.c.bf16 %v3796, %v3795
        %v3903 = vpack.c.bf16 %v3798, %v3797
        %v3904 = vpack.c.bf16 %v3800, %v3799
        %v3905 = vpack.c.bf16 %v3802, %v3801
        %v3906 = vpack.c.bf16 %v3804, %v3803
        %v3907 = vpack.c.bf16 %v3806, %v3805
        %v3908 = vpack.c.bf16 %v3808, %v3807
        %v3909 = vpack.c.bf16 %v3810, %v3809
        %v3910 = vpack.c.bf16 %v3812, %v3811
        %v3911 = vpack.c.bf16 %v3814, %v3813
        %v3912 = vpack.c.bf16 %v3816, %v3815
        %v3913 = vpack.c.bf16 %v3818, %v3817
        %v3914 = vpack.c.bf16 %v3820, %v3819
        %v3915 = vpack.c.bf16 %v3822, %v3821
        %v3916 = vpack.c.bf16 %v3824, %v3823
        %v3917 = vpack.c.bf16 %v3826, %v3825
        %v3918 = vpack.c.bf16 %v3828, %v3827
        %v3919 = vpack.c.bf16 %v3830, %v3829
        %v3920 = vpack.c.bf16 %v3832, %v3831
        %v3921 = vpack.c.bf16 %v3834, %v3833
        %v3922 = vpack.c.bf16 %v3836, %v3835
        %v3923 = vpack.c.bf16 %v3838, %v3837
        %v3924 = vpack.c.bf16 %v3840, %v3839
        %v3925 = vpack.c.bf16 %v3842, %v3841
        %v3926 = vpack.c.bf16 %v3844, %v3843
        %v3927 = vpack.c.bf16 %v3846, %v3845
        %v3928 = vpack.c.bf16 %v3848, %v3847
        %v3929 = vpack.c.bf16 %v3850, %v3849
        %v3930 = vpack.c.bf16 %v3852, %v3851
        %v3931 = vpack.c.bf16 %v3854, %v3853
        %v3932 = vpack.c.bf16 %v3856, %v3855
        %v3933 = vpack.c.bf16 %v3858, %v3857
        %v3934 = vpack.c.bf16 %v3860, %v3859
        %v3935 = vpack.c.bf16 %v3862, %v3861
        %v3936 = vpack.c.bf16 %v3864, %v3863
        %v3937 = vpack.c.bf16 %v3866, %v3865
        %v3938 = vpack.c.bf16 %v3868, %v3867
        %v3939 = vpack.c.bf16 %v3870, %v3869
        %v3940 = vpack.c.bf16 %v3872, %v3871
        %v3941 = vpack.c.bf16 %v3874, %v3873
        %v3942 = vpack.c.bf16 %v3876, %v3875
        %v3943 = vpack.c.bf16 %v3878, %v3877
        %v3944 = vpack.c.bf16 %v3880, %v3879
        %v3945 = vld [vmem:[%s7] sm:$0xff]
        %v3946 = vld [vmem:[%s7 + $0x8] sm:$0xff]
        %v3947 = vld [vmem:[%s7 + $0x10] sm:$0xff]
        %v3948 = vld [vmem:[%s7 + $0x18] sm:$0xff]
        %v3949 = vld [vmem:[%s7 + $0x20] sm:$0xff]
        %v3950 = vld [vmem:[%s7 + $0x28] sm:$0xff]
        %v3951 = vld [vmem:[%s7 + $0x30] sm:$0xff]
        %v3952 = vld [vmem:[%s7 + $0x38] sm:$0xff]
        %v3953 = vld [vmem:[%s7 + $0x40] sm:$0xff]
        %v3954 = vld [vmem:[%s7 + $0x48] sm:$0xff]
        %v3955 = vld [vmem:[%s7 + $0x50] sm:$0xff]
        %v3956 = vld [vmem:[%s7 + $0x58] sm:$0xff]
        %v3957 = vld [vmem:[%s7 + $0x60] sm:$0xff]
        %v3958 = vld [vmem:[%s7 + $0x68] sm:$0xff]
        %v3959 = vld [vmem:[%s7 + $0x70] sm:$0xff]
        %v3960 = vld [vmem:[%s7 + $0x78] sm:$0xff]
        %v3961 = vld [vmem:[#allocation8] sm:$0x3]
        %v3963 = vperm.slane %v3961, 0
        %v3964 = vperm.slane %v3961, 1
        %v3983 = vunpack.c.l.b16 %v3945
        %v3984 = vunpack.c.h.b16 %v3945
        %v3985 = vunpack.c.l.b16 %v3946
        %v3986 = vunpack.c.h.b16 %v3946
        %v3987 = vunpack.c.l.b16 %v3947
        %v3988 = vunpack.c.h.b16 %v3947
        %v3989 = vunpack.c.l.b16 %v3948
        %v3990 = vunpack.c.h.b16 %v3948
        %v3991 = vunpack.c.l.b16 %v3949
        %v3992 = vunpack.c.h.b16 %v3949
        %v3993 = vunpack.c.l.b16 %v3950
        %v3994 = vunpack.c.h.b16 %v3950
        %v3995 = vunpack.c.l.b16 %v3951
        %v3996 = vunpack.c.h.b16 %v3951
        %v3997 = vunpack.c.l.b16 %v3952
        %v3998 = vunpack.c.h.b16 %v3952
        %v3999 = vunpack.c.l.b16 %v3953
        %v4000 = vunpack.c.h.b16 %v3953
        %v4001 = vunpack.c.l.b16 %v3954
        %v4002 = vunpack.c.h.b16 %v3954
        %v4003 = vunpack.c.l.b16 %v3955
        %v4004 = vunpack.c.h.b16 %v3955
        %v4005 = vunpack.c.l.b16 %v3956
        %v4006 = vunpack.c.h.b16 %v3956
        %v4007 = vunpack.c.l.b16 %v3957
        %v4008 = vunpack.c.h.b16 %v3957
        %v4009 = vunpack.c.l.b16 %v3958
        %v4010 = vunpack.c.h.b16 %v3958
        %v4011 = vunpack.c.l.b16 %v3959
        %v4012 = vunpack.c.h.b16 %v3959
        %v4013 = vunpack.c.l.b16 %v3960
        %v4014 = vunpack.c.h.b16 %v3960
        %v4015 = vpack.c.b16 %v3985, %v3983
        %v4016 = vpack.c.b16 %v3986, %v3984
        %v4017 = vpack.c.b16 %v3989, %v3987
        %v4018 = vpack.c.b16 %v3990, %v3988
        %v4019 = vpack.c.b16 %v3993, %v3991
        %v4020 = vpack.c.b16 %v3994, %v3992
        %v4021 = vpack.c.b16 %v3997, %v3995
        %v4022 = vpack.c.b16 %v3998, %v3996
        %v4023 = vpack.c.b16 %v4001, %v3999
        %v4024 = vpack.c.b16 %v4002, %v4000
        %v4025 = vpack.c.b16 %v4005, %v4003
        %v4026 = vpack.c.b16 %v4006, %v4004
        %v4027 = vpack.c.b16 %v4009, %v4007
        %v4028 = vpack.c.b16 %v4010, %v4008
        %v4029 = vpack.c.b16 %v4013, %v4011
        %v4030 = vpack.c.b16 %v4014, %v4012
        %4047 = vmatpush.bf16.msra.mxu0 %v4029
        %4048 = vmatpush.bf16.msra.mxu0 %v4027
        %4049 = vmatpush.bf16.msra.mxu0 %v4025
        %4050 = vmatpush.bf16.msra.mxu0 %v4023
        %4051 = vmatpush.bf16.msra.mxu0 %v4021
        %4052 = vmatpush.bf16.msra.mxu0 %v4019
        %4053 = vmatpush.bf16.msra.mxu0 %v4017
        %4054 = vmatpush.bf16.msra.mxu0 %v4015
        %4055 = vmatmul.bf16.gmra.mxu0 %v3881
        %v4056 = vpop.f32.mrf.mxu0
        %v4057 = vadd.f32 %v3963, %v4056
        %v4058 = vpop.f32.mrf.mxu0
        %v4059 = vadd.f32 %v3963, %v4058
        %4060 = vmatmul.bf16.gmra.mxu0 %v3882
        %v4061 = vpop.f32.mrf.mxu0
        %v4062 = vadd.f32 %v3963, %v4061
        %v4063 = vpop.f32.mrf.mxu0
        %v4064 = vadd.f32 %v3963, %v4063
        %4065 = vmatmul.bf16.gmra.mxu0 %v3883
        %v4066 = vpop.f32.mrf.mxu0
        %v4067 = vadd.f32 %v3963, %v4066
        %v4068 = vpop.f32.mrf.mxu0
        %v4069 = vadd.f32 %v3963, %v4068
        %4070 = vmatmul.bf16.gmra.mxu0 %v3884
        %v4071 = vpop.f32.mrf.mxu0
        %v4072 = vadd.f32 %v3963, %v4071
        %v4073 = vpop.f32.mrf.mxu0
        %v4074 = vadd.f32 %v3963, %v4073
        %4075 = vmatmul.bf16.gmra.mxu0 %v3885
        %v4076 = vpop.f32.mrf.mxu0
        %v4077 = vadd.f32 %v3963, %v4076
        %v4078 = vpop.f32.mrf.mxu0
        %v4079 = vadd.f32 %v3963, %v4078
        %4080 = vmatmul.bf16.gmra.mxu0 %v3886
        %v4081 = vpop.f32.mrf.mxu0
        %v4082 = vadd.f32 %v3963, %v4081
        %v4083 = vpop.f32.mrf.mxu0
        %v4084 = vadd.f32 %v3963, %v4083
        %4085 = vmatmul.bf16.gmra.mxu0 %v3887
        %v4086 = vpop.f32.mrf.mxu0
        %v4087 = vadd.f32 %v3963, %v4086
        %v4088 = vpop.f32.mrf.mxu0
        %v4089 = vadd.f32 %v3963, %v4088
        %4090 = vmatmul.bf16.gmra.mxu0 %v3888
        %v4091 = vpop.f32.mrf.mxu0
        %v4092 = vadd.f32 %v3963, %v4091
        %v4093 = vpop.f32.mrf.mxu0
        %v4094 = vadd.f32 %v3963, %v4093
        %4095 = vmatmul.bf16.gmra.mxu0 %v3889
        %v4096 = vpop.f32.mrf.mxu0
        %v4097 = vadd.f32 %v3963, %v4096
        %v4098 = vpop.f32.mrf.mxu0
        %v4099 = vadd.f32 %v3963, %v4098
        %4100 = vmatmul.bf16.gmra.mxu0 %v3890
        %v4101 = vpop.f32.mrf.mxu0
        %v4102 = vadd.f32 %v3963, %v4101
        %v4103 = vpop.f32.mrf.mxu0
        %v4104 = vadd.f32 %v3963, %v4103
        %4105 = vmatmul.bf16.gmra.mxu0 %v3891
        %v4106 = vpop.f32.mrf.mxu0
        %v4107 = vadd.f32 %v3963, %v4106
        %v4108 = vpop.f32.mrf.mxu0
        %v4109 = vadd.f32 %v3963, %v4108
        %4110 = vmatmul.bf16.gmra.mxu0 %v3892
        %v4111 = vpop.f32.mrf.mxu0
        %v4112 = vadd.f32 %v3963, %v4111
        %v4113 = vpop.f32.mrf.mxu0
        %v4114 = vadd.f32 %v3963, %v4113
        %4115 = vmatmul.bf16.gmra.mxu0 %v3893
        %v4116 = vpop.f32.mrf.mxu0
        %v4117 = vadd.f32 %v3963, %v4116
        %v4118 = vpop.f32.mrf.mxu0
        %v4119 = vadd.f32 %v3963, %v4118
        %4120 = vmatmul.bf16.gmra.mxu0 %v3894
        %v4121 = vpop.f32.mrf.mxu0
        %v4122 = vadd.f32 %v3963, %v4121
        %v4123 = vpop.f32.mrf.mxu0
        %v4124 = vadd.f32 %v3963, %v4123
        %4125 = vmatmul.bf16.gmra.mxu0 %v3895
        %v4126 = vpop.f32.mrf.mxu0
        %v4127 = vadd.f32 %v3963, %v4126
        %v4128 = vpop.f32.mrf.mxu0
        %v4129 = vadd.f32 %v3963, %v4128
        %4130 = vmatmul.bf16.gmra.mxu0 %v3896
        %v4131 = vpop.f32.mrf.mxu0
        %v4132 = vadd.f32 %v3963, %v4131
        %v4133 = vpop.f32.mrf.mxu0
        %v4134 = vadd.f32 %v3963, %v4133
        %4135 = vmatmul.bf16.gmra.mxu0 %v3897
        %v4136 = vpop.f32.mrf.mxu0
        %v4137 = vadd.f32 %v3963, %v4136
        %v4138 = vpop.f32.mrf.mxu0
        %v4139 = vadd.f32 %v3963, %v4138
        %4140 = vmatmul.bf16.gmra.mxu0 %v3898
        %v4141 = vpop.f32.mrf.mxu0
        %v4142 = vadd.f32 %v3963, %v4141
        %v4143 = vpop.f32.mrf.mxu0
        %v4144 = vadd.f32 %v3963, %v4143
        %4145 = vmatmul.bf16.gmra.mxu0 %v3899
        %v4146 = vpop.f32.mrf.mxu0
        %v4147 = vadd.f32 %v3963, %v4146
        %v4148 = vpop.f32.mrf.mxu0
        %v4149 = vadd.f32 %v3963, %v4148
        %4150 = vmatmul.bf16.gmra.mxu0 %v3900
        %v4151 = vpop.f32.mrf.mxu0
        %v4152 = vadd.f32 %v3963, %v4151
        %v4153 = vpop.f32.mrf.mxu0
        %v4154 = vadd.f32 %v3963, %v4153
        %4155 = vmatmul.bf16.gmra.mxu0 %v3901
        %v4156 = vpop.f32.mrf.mxu0
        %v4157 = vadd.f32 %v3963, %v4156
        %v4158 = vpop.f32.mrf.mxu0
        %v4159 = vadd.f32 %v3963, %v4158
        %4160 = vmatmul.bf16.gmra.mxu0 %v3902
        %v4161 = vpop.f32.mrf.mxu0
        %v4162 = vadd.f32 %v3963, %v4161
        %v4163 = vpop.f32.mrf.mxu0
        %v4164 = vadd.f32 %v3963, %v4163
        %4165 = vmatmul.bf16.gmra.mxu0 %v3903
        %v4166 = vpop.f32.mrf.mxu0
        %v4167 = vadd.f32 %v3963, %v4166
        %v4168 = vpop.f32.mrf.mxu0
        %v4169 = vadd.f32 %v3963, %v4168
        %4170 = vmatmul.bf16.gmra.mxu0 %v3904
        %v4171 = vpop.f32.mrf.mxu0
        %v4172 = vadd.f32 %v3963, %v4171
        %v4173 = vpop.f32.mrf.mxu0
        %v4174 = vadd.f32 %v3963, %v4173
        %4175 = vmatmul.bf16.gmra.mxu0 %v3905
        %v4176 = vpop.f32.mrf.mxu0
        %v4177 = vadd.f32 %v3963, %v4176
        %v4178 = vpop.f32.mrf.mxu0
        %v4179 = vadd.f32 %v3963, %v4178
        %4180 = vmatmul.bf16.gmra.mxu0 %v3906
        %v4181 = vpop.f32.mrf.mxu0
        %v4182 = vadd.f32 %v3963, %v4181
        %v4183 = vpop.f32.mrf.mxu0
        %v4184 = vadd.f32 %v3963, %v4183
        %4185 = vmatmul.bf16.gmra.mxu0 %v3907
        %v4186 = vpop.f32.mrf.mxu0
        %v4187 = vadd.f32 %v3963, %v4186
        %v4188 = vpop.f32.mrf.mxu0
        %v4189 = vadd.f32 %v3963, %v4188
        %4190 = vmatmul.bf16.gmra.mxu0 %v3908
        %v4191 = vpop.f32.mrf.mxu0
        %v4192 = vadd.f32 %v3963, %v4191
        %v4193 = vpop.f32.mrf.mxu0
        %v4194 = vadd.f32 %v3963, %v4193
        %4195 = vmatmul.bf16.gmra.mxu0 %v3909
        %v4196 = vpop.f32.mrf.mxu0
        %v4197 = vadd.f32 %v3963, %v4196
        %v4198 = vpop.f32.mrf.mxu0
        %v4199 = vadd.f32 %v3963, %v4198
        %4200 = vmatmul.bf16.gmra.mxu0 %v3910
        %v4201 = vpop.f32.mrf.mxu0
        %v4202 = vadd.f32 %v3963, %v4201
        %v4203 = vpop.f32.mrf.mxu0
        %v4204 = vadd.f32 %v3963, %v4203
        %4205 = vmatmul.bf16.gmra.mxu0 %v3911
        %v4206 = vpop.f32.mrf.mxu0
        %v4207 = vadd.f32 %v3963, %v4206
        %v4208 = vpop.f32.mrf.mxu0
        %v4209 = vadd.f32 %v3963, %v4208
        %4210 = vmatmul.bf16.gmra.mxu0 %v3912
        %v4211 = vpop.f32.mrf.mxu0
        %v4212 = vadd.f32 %v3963, %v4211
        %v4213 = vpop.f32.mrf.mxu0
        %v4214 = vadd.f32 %v3963, %v4213
        %4215 = vmatmul.bf16.gmra.mxu0 %v3913
        %v4216 = vpop.f32.mrf.mxu0
        %v4217 = vadd.f32 %v3963, %v4216
        %v4218 = vpop.f32.mrf.mxu0
        %v4219 = vadd.f32 %v3963, %v4218
        %4220 = vmatmul.bf16.gmra.mxu0 %v3914
        %v4221 = vpop.f32.mrf.mxu0
        %v4222 = vadd.f32 %v3963, %v4221
        %v4223 = vpop.f32.mrf.mxu0
        %v4224 = vadd.f32 %v3963, %v4223
        %4225 = vmatmul.bf16.gmra.mxu0 %v3915
        %v4226 = vpop.f32.mrf.mxu0
        %v4227 = vadd.f32 %v3963, %v4226
        %v4228 = vpop.f32.mrf.mxu0
        %v4229 = vadd.f32 %v3963, %v4228
        %4230 = vmatmul.bf16.gmra.mxu0 %v3916
        %v4231 = vpop.f32.mrf.mxu0
        %v4232 = vadd.f32 %v3963, %v4231
        %v4233 = vpop.f32.mrf.mxu0
        %v4234 = vadd.f32 %v3963, %v4233
        %4235 = vmatmul.bf16.gmra.mxu0 %v3917
        %v4236 = vpop.f32.mrf.mxu0
        %v4237 = vadd.f32 %v3963, %v4236
        %v4238 = vpop.f32.mrf.mxu0
        %v4239 = vadd.f32 %v3963, %v4238
        %4240 = vmatmul.bf16.gmra.mxu0 %v3918
        %v4241 = vpop.f32.mrf.mxu0
        %v4242 = vadd.f32 %v3963, %v4241
        %v4243 = vpop.f32.mrf.mxu0
        %v4244 = vadd.f32 %v3963, %v4243
        %4245 = vmatmul.bf16.gmra.mxu0 %v3919
        %v4246 = vpop.f32.mrf.mxu0
        %v4247 = vadd.f32 %v3963, %v4246
        %v4248 = vpop.f32.mrf.mxu0
        %v4249 = vadd.f32 %v3963, %v4248
        %4250 = vmatmul.bf16.gmra.mxu0 %v3920
        %v4251 = vpop.f32.mrf.mxu0
        %v4252 = vadd.f32 %v3963, %v4251
        %v4253 = vpop.f32.mrf.mxu0
        %v4254 = vadd.f32 %v3963, %v4253
        %4255 = vmatmul.bf16.gmra.mxu0 %v3921
        %v4256 = vpop.f32.mrf.mxu0
        %v4257 = vadd.f32 %v3963, %v4256
        %v4258 = vpop.f32.mrf.mxu0
        %v4259 = vadd.f32 %v3963, %v4258
        %4260 = vmatmul.bf16.gmra.mxu0 %v3922
        %v4261 = vpop.f32.mrf.mxu0
        %v4262 = vadd.f32 %v3963, %v4261
        %v4263 = vpop.f32.mrf.mxu0
        %v4264 = vadd.f32 %v3963, %v4263
        %4265 = vmatmul.bf16.gmra.mxu0 %v3923
        %v4266 = vpop.f32.mrf.mxu0
        %v4267 = vadd.f32 %v3963, %v4266
        %v4268 = vpop.f32.mrf.mxu0
        %v4269 = vadd.f32 %v3963, %v4268
        %4270 = vmatmul.bf16.gmra.mxu0 %v3924
        %v4271 = vpop.f32.mrf.mxu0
        %v4272 = vadd.f32 %v3963, %v4271
        %v4273 = vpop.f32.mrf.mxu0
        %v4274 = vadd.f32 %v3963, %v4273
        %4275 = vmatmul.bf16.gmra.mxu0 %v3925
        %v4276 = vpop.f32.mrf.mxu0
        %v4277 = vadd.f32 %v3963, %v4276
        %v4278 = vpop.f32.mrf.mxu0
        %v4279 = vadd.f32 %v3963, %v4278
        %4280 = vmatmul.bf16.gmra.mxu0 %v3926
        %v4281 = vpop.f32.mrf.mxu0
        %v4282 = vadd.f32 %v3963, %v4281
        %v4283 = vpop.f32.mrf.mxu0
        %v4284 = vadd.f32 %v3963, %v4283
        %4285 = vmatmul.bf16.gmra.mxu0 %v3927
        %v4286 = vpop.f32.mrf.mxu0
        %v4287 = vadd.f32 %v3963, %v4286
        %v4288 = vpop.f32.mrf.mxu0
        %v4289 = vadd.f32 %v3963, %v4288
        %4290 = vmatmul.bf16.gmra.mxu0 %v3928
        %v4291 = vpop.f32.mrf.mxu0
        %v4292 = vadd.f32 %v3963, %v4291
        %v4293 = vpop.f32.mrf.mxu0
        %v4294 = vadd.f32 %v3963, %v4293
        %4295 = vmatmul.bf16.gmra.mxu0 %v3929
        %v4296 = vpop.f32.mrf.mxu0
        %v4297 = vadd.f32 %v3963, %v4296
        %v4298 = vpop.f32.mrf.mxu0
        %v4299 = vadd.f32 %v3963, %v4298
        %4300 = vmatmul.bf16.gmra.mxu0 %v3930
        %v4301 = vpop.f32.mrf.mxu0
        %v4302 = vadd.f32 %v3963, %v4301
        %v4303 = vpop.f32.mrf.mxu0
        %v4304 = vadd.f32 %v3963, %v4303
        %4305 = vmatmul.bf16.gmra.mxu0 %v3931
        %v4306 = vpop.f32.mrf.mxu0
        %v4307 = vadd.f32 %v3963, %v4306
        %v4308 = vpop.f32.mrf.mxu0
        %v4309 = vadd.f32 %v3963, %v4308
        %4310 = vmatmul.bf16.gmra.mxu0 %v3932
        %v4311 = vpop.f32.mrf.mxu0
        %v4312 = vadd.f32 %v3963, %v4311
        %v4313 = vpop.f32.mrf.mxu0
        %v4314 = vadd.f32 %v3963, %v4313
        %4315 = vmatmul.bf16.gmra.mxu0 %v3933
        %v4316 = vpop.f32.mrf.mxu0
        %v4317 = vadd.f32 %v3963, %v4316
        %v4318 = vpop.f32.mrf.mxu0
        %v4319 = vadd.f32 %v3963, %v4318
        %4320 = vmatmul.bf16.gmra.mxu0 %v3934
        %v4321 = vpop.f32.mrf.mxu0
        %v4322 = vadd.f32 %v3963, %v4321
        %v4323 = vpop.f32.mrf.mxu0
        %v4324 = vadd.f32 %v3963, %v4323
        %4325 = vmatmul.bf16.gmra.mxu0 %v3935
        %v4326 = vpop.f32.mrf.mxu0
        %v4327 = vadd.f32 %v3963, %v4326
        %v4328 = vpop.f32.mrf.mxu0
        %v4329 = vadd.f32 %v3963, %v4328
        %4330 = vmatmul.bf16.gmra.mxu0 %v3936
        %v4331 = vpop.f32.mrf.mxu0
        %v4332 = vadd.f32 %v3963, %v4331
        %v4333 = vpop.f32.mrf.mxu0
        %v4334 = vadd.f32 %v3963, %v4333
        %4335 = vmatmul.bf16.gmra.mxu0 %v3937
        %v4336 = vpop.f32.mrf.mxu0
        %v4337 = vadd.f32 %v3963, %v4336
        %v4338 = vpop.f32.mrf.mxu0
        %v4339 = vadd.f32 %v3963, %v4338
        %4340 = vmatmul.bf16.gmra.mxu0 %v3938
        %v4341 = vpop.f32.mrf.mxu0
        %v4342 = vadd.f32 %v3963, %v4341
        %v4343 = vpop.f32.mrf.mxu0
        %v4344 = vadd.f32 %v3963, %v4343
        %4345 = vmatmul.bf16.gmra.mxu0 %v3939
        %v4346 = vpop.f32.mrf.mxu0
        %v4347 = vadd.f32 %v3963, %v4346
        %v4348 = vpop.f32.mrf.mxu0
        %v4349 = vadd.f32 %v3963, %v4348
        %4350 = vmatmul.bf16.gmra.mxu0 %v3940
        %v4351 = vpop.f32.mrf.mxu0
        %v4352 = vadd.f32 %v3963, %v4351
        %v4353 = vpop.f32.mrf.mxu0
        %v4354 = vadd.f32 %v3963, %v4353
        %4355 = vmatmul.bf16.gmra.mxu0 %v3941
        %v4356 = vpop.f32.mrf.mxu0
        %v4357 = vadd.f32 %v3963, %v4356
        %v4358 = vpop.f32.mrf.mxu0
        %v4359 = vadd.f32 %v3963, %v4358
        %4360 = vmatmul.bf16.gmra.mxu0 %v3942
        %v4361 = vpop.f32.mrf.mxu0
        %v4362 = vadd.f32 %v3963, %v4361
        %v4363 = vpop.f32.mrf.mxu0
        %v4364 = vadd.f32 %v3963, %v4363
        %4365 = vmatmul.bf16.gmra.mxu0 %v3943
        %v4366 = vpop.f32.mrf.mxu0
        %v4367 = vadd.f32 %v3963, %v4366
        %v4368 = vpop.f32.mrf.mxu0
        %v4369 = vadd.f32 %v3963, %v4368
        %4370 = vmatmul.bf16.gmra.mxu0 %v3944
        %v4371 = vpop.f32.mrf.mxu0
        %v4372 = vadd.f32 %v3963, %v4371
        %v4373 = vpop.f32.mrf.mxu0
        %v4374 = vadd.f32 %v3963, %v4373
        %4375 = vdwg.mxu0
        %4376 = vmatpush.bf16.msra.mxu0 %v4030
        %4377 = vmatpush.bf16.msra.mxu0 %v4028
        %4378 = vmatpush.bf16.msra.mxu0 %v4026
        %4379 = vmatpush.bf16.msra.mxu0 %v4024
        %4380 = vmatpush.bf16.msra.mxu0 %v4022
        %4381 = vmatpush.bf16.msra.mxu0 %v4020
        %4382 = vmatpush.bf16.msra.mxu0 %v4018
        %4383 = vmatpush.bf16.msra.mxu0 %v4016
        %4384 = vmatmul.bf16.gmra.mxu0 %v3881
        %v4385 = vpop.f32.mrf.mxu0
        %v4386 = vadd.f32 %v3964, %v4385
        %v4387 = vpop.f32.mrf.mxu0
        %v4388 = vadd.f32 %v3964, %v4387
        %4389 = vmatmul.bf16.gmra.mxu0 %v3882
        %v4390 = vpop.f32.mrf.mxu0
        %v4391 = vadd.f32 %v3964, %v4390
        %v4392 = vpop.f32.mrf.mxu0
        %v4393 = vadd.f32 %v3964, %v4392
        %4394 = vmatmul.bf16.gmra.mxu0 %v3883
        %v4395 = vpop.f32.mrf.mxu0
        %v4396 = vadd.f32 %v3964, %v4395
        %v4397 = vpop.f32.mrf.mxu0
        %v4398 = vadd.f32 %v3964, %v4397
        %4399 = vmatmul.bf16.gmra.mxu0 %v3884
        %v4400 = vpop.f32.mrf.mxu0
        %v4401 = vadd.f32 %v3964, %v4400
        %v4402 = vpop.f32.mrf.mxu0
        %v4403 = vadd.f32 %v3964, %v4402
        %4404 = vmatmul.bf16.gmra.mxu0 %v3885
        %v4405 = vpop.f32.mrf.mxu0
        %v4406 = vadd.f32 %v3964, %v4405
        %v4407 = vpop.f32.mrf.mxu0
        %v4408 = vadd.f32 %v3964, %v4407
        %4409 = vmatmul.bf16.gmra.mxu0 %v3886
        %v4410 = vpop.f32.mrf.mxu0
        %v4411 = vadd.f32 %v3964, %v4410
        %v4412 = vpop.f32.mrf.mxu0
        %v4413 = vadd.f32 %v3964, %v4412
        %4414 = vmatmul.bf16.gmra.mxu0 %v3887
        %v4415 = vpop.f32.mrf.mxu0
        %v4416 = vadd.f32 %v3964, %v4415
        %v4417 = vpop.f32.mrf.mxu0
        %v4418 = vadd.f32 %v3964, %v4417
        %4419 = vmatmul.bf16.gmra.mxu0 %v3888
        %v4420 = vpop.f32.mrf.mxu0
        %v4421 = vadd.f32 %v3964, %v4420
        %v4422 = vpop.f32.mrf.mxu0
        %v4423 = vadd.f32 %v3964, %v4422
        %4424 = vmatmul.bf16.gmra.mxu0 %v3889
        %v4425 = vpop.f32.mrf.mxu0
        %v4426 = vadd.f32 %v3964, %v4425
        %v4427 = vpop.f32.mrf.mxu0
        %v4428 = vadd.f32 %v3964, %v4427
        %4429 = vmatmul.bf16.gmra.mxu0 %v3890
        %v4430 = vpop.f32.mrf.mxu0
        %v4431 = vadd.f32 %v3964, %v4430
        %v4432 = vpop.f32.mrf.mxu0
        %v4433 = vadd.f32 %v3964, %v4432
        %4434 = vmatmul.bf16.gmra.mxu0 %v3891
        %v4435 = vpop.f32.mrf.mxu0
        %v4436 = vadd.f32 %v3964, %v4435
        %v4437 = vpop.f32.mrf.mxu0
        %v4438 = vadd.f32 %v3964, %v4437
        %4439 = vmatmul.bf16.gmra.mxu0 %v3892
        %v4440 = vpop.f32.mrf.mxu0
        %v4441 = vadd.f32 %v3964, %v4440
        %v4442 = vpop.f32.mrf.mxu0
        %v4443 = vadd.f32 %v3964, %v4442
        %4444 = vmatmul.bf16.gmra.mxu0 %v3893
        %v4445 = vpop.f32.mrf.mxu0
        %v4446 = vadd.f32 %v3964, %v4445
        %v4447 = vpop.f32.mrf.mxu0
        %v4448 = vadd.f32 %v3964, %v4447
        %4449 = vmatmul.bf16.gmra.mxu0 %v3894
        %v4450 = vpop.f32.mrf.mxu0
        %v4451 = vadd.f32 %v3964, %v4450
        %v4452 = vpop.f32.mrf.mxu0
        %v4453 = vadd.f32 %v3964, %v4452
        %4454 = vmatmul.bf16.gmra.mxu0 %v3895
        %v4455 = vpop.f32.mrf.mxu0
        %v4456 = vadd.f32 %v3964, %v4455
        %v4457 = vpop.f32.mrf.mxu0
        %v4458 = vadd.f32 %v3964, %v4457
        %4459 = vmatmul.bf16.gmra.mxu0 %v3896
        %v4460 = vpop.f32.mrf.mxu0
        %v4461 = vadd.f32 %v3964, %v4460
        %v4462 = vpop.f32.mrf.mxu0
        %v4463 = vadd.f32 %v3964, %v4462
        %4464 = vmatmul.bf16.gmra.mxu0 %v3897
        %v4465 = vpop.f32.mrf.mxu0
        %v4466 = vadd.f32 %v3964, %v4465
        %v4467 = vpop.f32.mrf.mxu0
        %v4468 = vadd.f32 %v3964, %v4467
        %4469 = vmatmul.bf16.gmra.mxu0 %v3898
        %v4470 = vpop.f32.mrf.mxu0
        %v4471 = vadd.f32 %v3964, %v4470
        %v4472 = vpop.f32.mrf.mxu0
        %v4473 = vadd.f32 %v3964, %v4472
        %4474 = vmatmul.bf16.gmra.mxu0 %v3899
        %v4475 = vpop.f32.mrf.mxu0
        %v4476 = vadd.f32 %v3964, %v4475
        %v4477 = vpop.f32.mrf.mxu0
        %v4478 = vadd.f32 %v3964, %v4477
        %4479 = vmatmul.bf16.gmra.mxu0 %v3900
        %v4480 = vpop.f32.mrf.mxu0
        %v4481 = vadd.f32 %v3964, %v4480
        %v4482 = vpop.f32.mrf.mxu0
        %v4483 = vadd.f32 %v3964, %v4482
        %4484 = vmatmul.bf16.gmra.mxu0 %v3901
        %v4485 = vpop.f32.mrf.mxu0
        %v4486 = vadd.f32 %v3964, %v4485
        %v4487 = vpop.f32.mrf.mxu0
        %v4488 = vadd.f32 %v3964, %v4487
        %4489 = vmatmul.bf16.gmra.mxu0 %v3902
        %v4490 = vpop.f32.mrf.mxu0
        %v4491 = vadd.f32 %v3964, %v4490
        %v4492 = vpop.f32.mrf.mxu0
        %v4493 = vadd.f32 %v3964, %v4492
        %4494 = vmatmul.bf16.gmra.mxu0 %v3903
        %v4495 = vpop.f32.mrf.mxu0
        %v4496 = vadd.f32 %v3964, %v4495
        %v4497 = vpop.f32.mrf.mxu0
        %v4498 = vadd.f32 %v3964, %v4497
        %4499 = vmatmul.bf16.gmra.mxu0 %v3904
        %v4500 = vpop.f32.mrf.mxu0
        %v4501 = vadd.f32 %v3964, %v4500
        %v4502 = vpop.f32.mrf.mxu0
        %v4503 = vadd.f32 %v3964, %v4502
        %4504 = vmatmul.bf16.gmra.mxu0 %v3905
        %v4505 = vpop.f32.mrf.mxu0
        %v4506 = vadd.f32 %v3964, %v4505
        %v4507 = vpop.f32.mrf.mxu0
        %v4508 = vadd.f32 %v3964, %v4507
        %4509 = vmatmul.bf16.gmra.mxu0 %v3906
        %v4510 = vpop.f32.mrf.mxu0
        %v4511 = vadd.f32 %v3964, %v4510
        %v4512 = vpop.f32.mrf.mxu0
        %v4513 = vadd.f32 %v3964, %v4512
        %4514 = vmatmul.bf16.gmra.mxu0 %v3907
        %v4515 = vpop.f32.mrf.mxu0
        %v4516 = vadd.f32 %v3964, %v4515
        %v4517 = vpop.f32.mrf.mxu0
        %v4518 = vadd.f32 %v3964, %v4517
        %4519 = vmatmul.bf16.gmra.mxu0 %v3908
        %v4520 = vpop.f32.mrf.mxu0
        %v4521 = vadd.f32 %v3964, %v4520
        %v4522 = vpop.f32.mrf.mxu0
        %v4523 = vadd.f32 %v3964, %v4522
        %4524 = vmatmul.bf16.gmra.mxu0 %v3909
        %v4525 = vpop.f32.mrf.mxu0
        %v4526 = vadd.f32 %v3964, %v4525
        %v4527 = vpop.f32.mrf.mxu0
        %v4528 = vadd.f32 %v3964, %v4527
        %4529 = vmatmul.bf16.gmra.mxu0 %v3910
        %v4530 = vpop.f32.mrf.mxu0
        %v4531 = vadd.f32 %v3964, %v4530
        %v4532 = vpop.f32.mrf.mxu0
        %v4533 = vadd.f32 %v3964, %v4532
        %4534 = vmatmul.bf16.gmra.mxu0 %v3911
        %v4535 = vpop.f32.mrf.mxu0
        %v4536 = vadd.f32 %v3964, %v4535
        %v4537 = vpop.f32.mrf.mxu0
        %v4538 = vadd.f32 %v3964, %v4537
        %4539 = vmatmul.bf16.gmra.mxu0 %v3912
        %v4540 = vpop.f32.mrf.mxu0
        %v4541 = vadd.f32 %v3964, %v4540
        %v4542 = vpop.f32.mrf.mxu0
        %v4543 = vadd.f32 %v3964, %v4542
        %4544 = vmatmul.bf16.gmra.mxu0 %v3913
        %v4545 = vpop.f32.mrf.mxu0
        %v4546 = vadd.f32 %v3964, %v4545
        %v4547 = vpop.f32.mrf.mxu0
        %v4548 = vadd.f32 %v3964, %v4547
        %4549 = vmatmul.bf16.gmra.mxu0 %v3914
        %v4550 = vpop.f32.mrf.mxu0
        %v4551 = vadd.f32 %v3964, %v4550
        %v4552 = vpop.f32.mrf.mxu0
        %v4553 = vadd.f32 %v3964, %v4552
        %4554 = vmatmul.bf16.gmra.mxu0 %v3915
        %v4555 = vpop.f32.mrf.mxu0
        %v4556 = vadd.f32 %v3964, %v4555
        %v4557 = vpop.f32.mrf.mxu0
        %v4558 = vadd.f32 %v3964, %v4557
        %4559 = vmatmul.bf16.gmra.mxu0 %v3916
        %v4560 = vpop.f32.mrf.mxu0
        %v4561 = vadd.f32 %v3964, %v4560
        %v4562 = vpop.f32.mrf.mxu0
        %v4563 = vadd.f32 %v3964, %v4562
        %4564 = vmatmul.bf16.gmra.mxu0 %v3917
        %v4565 = vpop.f32.mrf.mxu0
        %v4566 = vadd.f32 %v3964, %v4565
        %v4567 = vpop.f32.mrf.mxu0
        %v4568 = vadd.f32 %v3964, %v4567
        %4569 = vmatmul.bf16.gmra.mxu0 %v3918
        %v4570 = vpop.f32.mrf.mxu0
        %v4571 = vadd.f32 %v3964, %v4570
        %v4572 = vpop.f32.mrf.mxu0
        %v4573 = vadd.f32 %v3964, %v4572
        %4574 = vmatmul.bf16.gmra.mxu0 %v3919
        %v4575 = vpop.f32.mrf.mxu0
        %v4576 = vadd.f32 %v3964, %v4575
        %v4577 = vpop.f32.mrf.mxu0
        %v4578 = vadd.f32 %v3964, %v4577
        %4579 = vmatmul.bf16.gmra.mxu0 %v3920
        %v4580 = vpop.f32.mrf.mxu0
        %v4581 = vadd.f32 %v3964, %v4580
        %v4582 = vpop.f32.mrf.mxu0
        %v4583 = vadd.f32 %v3964, %v4582
        %4584 = vmatmul.bf16.gmra.mxu0 %v3921
        %v4585 = vpop.f32.mrf.mxu0
        %v4586 = vadd.f32 %v3964, %v4585
        %v4587 = vpop.f32.mrf.mxu0
        %v4588 = vadd.f32 %v3964, %v4587
        %4589 = vmatmul.bf16.gmra.mxu0 %v3922
        %v4590 = vpop.f32.mrf.mxu0
        %v4591 = vadd.f32 %v3964, %v4590
        %v4592 = vpop.f32.mrf.mxu0
        %v4593 = vadd.f32 %v3964, %v4592
        %4594 = vmatmul.bf16.gmra.mxu0 %v3923
        %v4595 = vpop.f32.mrf.mxu0
        %v4596 = vadd.f32 %v3964, %v4595
        %v4597 = vpop.f32.mrf.mxu0
        %v4598 = vadd.f32 %v3964, %v4597
        %4599 = vmatmul.bf16.gmra.mxu0 %v3924
        %v4600 = vpop.f32.mrf.mxu0
        %v4601 = vadd.f32 %v3964, %v4600
        %v4602 = vpop.f32.mrf.mxu0
        %v4603 = vadd.f32 %v3964, %v4602
        %4604 = vmatmul.bf16.gmra.mxu0 %v3925
        %v4605 = vpop.f32.mrf.mxu0
        %v4606 = vadd.f32 %v3964, %v4605
        %v4607 = vpop.f32.mrf.mxu0
        %v4608 = vadd.f32 %v3964, %v4607
        %4609 = vmatmul.bf16.gmra.mxu0 %v3926
        %v4610 = vpop.f32.mrf.mxu0
        %v4611 = vadd.f32 %v3964, %v4610
        %v4612 = vpop.f32.mrf.mxu0
        %v4613 = vadd.f32 %v3964, %v4612
        %4614 = vmatmul.bf16.gmra.mxu0 %v3927
        %v4615 = vpop.f32.mrf.mxu0
        %v4616 = vadd.f32 %v3964, %v4615
        %v4617 = vpop.f32.mrf.mxu0
        %v4618 = vadd.f32 %v3964, %v4617
        %4619 = vmatmul.bf16.gmra.mxu0 %v3928
        %v4620 = vpop.f32.mrf.mxu0
        %v4621 = vadd.f32 %v3964, %v4620
        %v4622 = vpop.f32.mrf.mxu0
        %v4623 = vadd.f32 %v3964, %v4622
        %4624 = vmatmul.bf16.gmra.mxu0 %v3929
        %v4625 = vpop.f32.mrf.mxu0
        %v4626 = vadd.f32 %v3964, %v4625
        %v4627 = vpop.f32.mrf.mxu0
        %v4628 = vadd.f32 %v3964, %v4627
        %4629 = vmatmul.bf16.gmra.mxu0 %v3930
        %v4630 = vpop.f32.mrf.mxu0
        %v4631 = vadd.f32 %v3964, %v4630
        %v4632 = vpop.f32.mrf.mxu0
        %v4633 = vadd.f32 %v3964, %v4632
        %4634 = vmatmul.bf16.gmra.mxu0 %v3931
        %v4635 = vpop.f32.mrf.mxu0
        %v4636 = vadd.f32 %v3964, %v4635
        %v4637 = vpop.f32.mrf.mxu0
        %v4638 = vadd.f32 %v3964, %v4637
        %4639 = vmatmul.bf16.gmra.mxu0 %v3932
        %v4640 = vpop.f32.mrf.mxu0
        %v4641 = vadd.f32 %v3964, %v4640
        %v4642 = vpop.f32.mrf.mxu0
        %v4643 = vadd.f32 %v3964, %v4642
        %4644 = vmatmul.bf16.gmra.mxu0 %v3933
        %v4645 = vpop.f32.mrf.mxu0
        %v4646 = vadd.f32 %v3964, %v4645
        %v4647 = vpop.f32.mrf.mxu0
        %v4648 = vadd.f32 %v3964, %v4647
        %4649 = vmatmul.bf16.gmra.mxu0 %v3934
        %v4650 = vpop.f32.mrf.mxu0
        %v4651 = vadd.f32 %v3964, %v4650
        %v4652 = vpop.f32.mrf.mxu0
        %v4653 = vadd.f32 %v3964, %v4652
        %4654 = vmatmul.bf16.gmra.mxu0 %v3935
        %v4655 = vpop.f32.mrf.mxu0
        %v4656 = vadd.f32 %v3964, %v4655
        %v4657 = vpop.f32.mrf.mxu0
        %v4658 = vadd.f32 %v3964, %v4657
        %4659 = vmatmul.bf16.gmra.mxu0 %v3936
        %v4660 = vpop.f32.mrf.mxu0
        %v4661 = vadd.f32 %v3964, %v4660
        %v4662 = vpop.f32.mrf.mxu0
        %v4663 = vadd.f32 %v3964, %v4662
        %4664 = vmatmul.bf16.gmra.mxu0 %v3937
        %v4665 = vpop.f32.mrf.mxu0
        %v4666 = vadd.f32 %v3964, %v4665
        %v4667 = vpop.f32.mrf.mxu0
        %v4668 = vadd.f32 %v3964, %v4667
        %4669 = vmatmul.bf16.gmra.mxu0 %v3938
        %v4670 = vpop.f32.mrf.mxu0
        %v4671 = vadd.f32 %v3964, %v4670
        %v4672 = vpop.f32.mrf.mxu0
        %v4673 = vadd.f32 %v3964, %v4672
        %4674 = vmatmul.bf16.gmra.mxu0 %v3939
        %v4675 = vpop.f32.mrf.mxu0
        %v4676 = vadd.f32 %v3964, %v4675
        %v4677 = vpop.f32.mrf.mxu0
        %v4678 = vadd.f32 %v3964, %v4677
        %4679 = vmatmul.bf16.gmra.mxu0 %v3940
        %v4680 = vpop.f32.mrf.mxu0
        %v4681 = vadd.f32 %v3964, %v4680
        %v4682 = vpop.f32.mrf.mxu0
        %v4683 = vadd.f32 %v3964, %v4682
        %4684 = vmatmul.bf16.gmra.mxu0 %v3941
        %v4685 = vpop.f32.mrf.mxu0
        %v4686 = vadd.f32 %v3964, %v4685
        %v4687 = vpop.f32.mrf.mxu0
        %v4688 = vadd.f32 %v3964, %v4687
        %4689 = vmatmul.bf16.gmra.mxu0 %v3942
        %v4690 = vpop.f32.mrf.mxu0
        %v4691 = vadd.f32 %v3964, %v4690
        %v4692 = vpop.f32.mrf.mxu0
        %v4693 = vadd.f32 %v3964, %v4692
        %4694 = vmatmul.bf16.gmra.mxu0 %v3943
        %v4695 = vpop.f32.mrf.mxu0
        %v4696 = vadd.f32 %v3964, %v4695
        %v4697 = vpop.f32.mrf.mxu0
        %v4698 = vadd.f32 %v3964, %v4697
        %4699 = vmatmul.bf16.gmra.mxu0 %v3944
        %v4700 = vpop.f32.mrf.mxu0
        %v4701 = vadd.f32 %v3964, %v4700
        %v4702 = vpop.f32.mrf.mxu0
        %v4703 = vadd.f32 %v3964, %v4702
        %4704 = vdwg.mxu0
        %v4705 = vmul.f32 %v4057, 0.5
        %v4706 = vmul.f32 %v4386, 0.5
        %v4707 = vmul.f32 %v4059, 0.5
        %v4708 = vmul.f32 %v4388, 0.5
        %v4709 = vmul.f32 %v4062, 0.5
        %v4710 = vmul.f32 %v4391, 0.5
        %v4711 = vmul.f32 %v4064, 0.5
        %v4712 = vmul.f32 %v4393, 0.5
        %v4713 = vmul.f32 %v4067, 0.5
        %v4714 = vmul.f32 %v4396, 0.5
        %v4715 = vmul.f32 %v4069, 0.5
        %v4716 = vmul.f32 %v4398, 0.5
        %v4717 = vmul.f32 %v4072, 0.5
        %v4718 = vmul.f32 %v4401, 0.5
        %v4719 = vmul.f32 %v4074, 0.5
        %v4720 = vmul.f32 %v4403, 0.5
        %v4721 = vmul.f32 %v4077, 0.5
        %v4722 = vmul.f32 %v4406, 0.5
        %v4723 = vmul.f32 %v4079, 0.5
        %v4724 = vmul.f32 %v4408, 0.5
        %v4725 = vmul.f32 %v4082, 0.5
        %v4726 = vmul.f32 %v4411, 0.5
        %v4727 = vmul.f32 %v4084, 0.5
        %v4728 = vmul.f32 %v4413, 0.5
        %v4729 = vmul.f32 %v4087, 0.5
        %v4730 = vmul.f32 %v4416, 0.5
        %v4731 = vmul.f32 %v4089, 0.5
        %v4732 = vmul.f32 %v4418, 0.5
        %v4733 = vmul.f32 %v4092, 0.5
        %v4734 = vmul.f32 %v4421, 0.5
        %v4735 = vmul.f32 %v4094, 0.5
        %v4736 = vmul.f32 %v4423, 0.5
        %v4737 = vmul.f32 %v4097, 0.5
        %v4738 = vmul.f32 %v4426, 0.5
        %v4739 = vmul.f32 %v4099, 0.5
        %v4740 = vmul.f32 %v4428, 0.5
        %v4741 = vmul.f32 %v4102, 0.5
        %v4742 = vmul.f32 %v4431, 0.5
        %v4743 = vmul.f32 %v4104, 0.5
        %v4744 = vmul.f32 %v4433, 0.5
        %v4745 = vmul.f32 %v4107, 0.5
        %v4746 = vmul.f32 %v4436, 0.5
        %v4747 = vmul.f32 %v4109, 0.5
        %v4748 = vmul.f32 %v4438, 0.5
        %v4749 = vmul.f32 %v4112, 0.5
        %v4750 = vmul.f32 %v4441, 0.5
        %v4751 = vmul.f32 %v4114, 0.5
        %v4752 = vmul.f32 %v4443, 0.5
        %v4753 = vmul.f32 %v4117, 0.5
        %v4754 = vmul.f32 %v4446, 0.5
        %v4755 = vmul.f32 %v4119, 0.5
        %v4756 = vmul.f32 %v4448, 0.5
        %v4757 = vmul.f32 %v4122, 0.5
        %v4758 = vmul.f32 %v4451, 0.5
        %v4759 = vmul.f32 %v4124, 0.5
        %v4760 = vmul.f32 %v4453, 0.5
        %v4761 = vmul.f32 %v4127, 0.5
        %v4762 = vmul.f32 %v4456, 0.5
        %v4763 = vmul.f32 %v4129, 0.5
        %v4764 = vmul.f32 %v4458, 0.5
        %v4765 = vmul.f32 %v4132, 0.5
        %v4766 = vmul.f32 %v4461, 0.5
        %v4767 = vmul.f32 %v4134, 0.5
        %v4768 = vmul.f32 %v4463, 0.5
        %v4769 = vmul.f32 %v4137, 0.5
        %v4770 = vmul.f32 %v4466, 0.5
        %v4771 = vmul.f32 %v4139, 0.5
        %v4772 = vmul.f32 %v4468, 0.5
        %v4773 = vmul.f32 %v4142, 0.5
        %v4774 = vmul.f32 %v4471, 0.5
        %v4775 = vmul.f32 %v4144, 0.5
        %v4776 = vmul.f32 %v4473, 0.5
        %v4777 = vmul.f32 %v4147, 0.5
        %v4778 = vmul.f32 %v4476, 0.5
        %v4779 = vmul.f32 %v4149, 0.5
        %v4780 = vmul.f32 %v4478, 0.5
        %v4781 = vmul.f32 %v4152, 0.5
        %v4782 = vmul.f32 %v4481, 0.5
        %v4783 = vmul.f32 %v4154, 0.5
        %v4784 = vmul.f32 %v4483, 0.5
        %v4785 = vmul.f32 %v4157, 0.5
        %v4786 = vmul.f32 %v4486, 0.5
        %v4787 = vmul.f32 %v4159, 0.5
        %v4788 = vmul.f32 %v4488, 0.5
        %v4789 = vmul.f32 %v4162, 0.5
        %v4790 = vmul.f32 %v4491, 0.5
        %v4791 = vmul.f32 %v4164, 0.5
        %v4792 = vmul.f32 %v4493, 0.5
        %v4793 = vmul.f32 %v4167, 0.5
        %v4794 = vmul.f32 %v4496, 0.5
        %v4795 = vmul.f32 %v4169, 0.5
        %v4796 = vmul.f32 %v4498, 0.5
        %v4797 = vmul.f32 %v4172, 0.5
        %v4798 = vmul.f32 %v4501, 0.5
        %v4799 = vmul.f32 %v4174, 0.5
        %v4800 = vmul.f32 %v4503, 0.5
        %v4801 = vmul.f32 %v4177, 0.5
        %v4802 = vmul.f32 %v4506, 0.5
        %v4803 = vmul.f32 %v4179, 0.5
        %v4804 = vmul.f32 %v4508, 0.5
        %v4805 = vmul.f32 %v4182, 0.5
        %v4806 = vmul.f32 %v4511, 0.5
        %v4807 = vmul.f32 %v4184, 0.5
        %v4808 = vmul.f32 %v4513, 0.5
        %v4809 = vmul.f32 %v4187, 0.5
        %v4810 = vmul.f32 %v4516, 0.5
        %v4811 = vmul.f32 %v4189, 0.5
        %v4812 = vmul.f32 %v4518, 0.5
        %v4813 = vmul.f32 %v4192, 0.5
        %v4814 = vmul.f32 %v4521, 0.5
        %v4815 = vmul.f32 %v4194, 0.5
        %v4816 = vmul.f32 %v4523, 0.5
        %v4817 = vmul.f32 %v4197, 0.5
        %v4818 = vmul.f32 %v4526, 0.5
        %v4819 = vmul.f32 %v4199, 0.5
        %v4820 = vmul.f32 %v4528, 0.5
        %v4821 = vmul.f32 %v4202, 0.5
        %v4822 = vmul.f32 %v4531, 0.5
        %v4823 = vmul.f32 %v4204, 0.5
        %v4824 = vmul.f32 %v4533, 0.5
        %v4825 = vmul.f32 %v4207, 0.5
        %v4826 = vmul.f32 %v4536, 0.5
        %v4827 = vmul.f32 %v4209, 0.5
        %v4828 = vmul.f32 %v4538, 0.5
        %v4829 = vmul.f32 %v4212, 0.5
        %v4830 = vmul.f32 %v4541, 0.5
        %v4831 = vmul.f32 %v4214, 0.5
        %v4832 = vmul.f32 %v4543, 0.5
        %v4833 = vmul.f32 %v4217, 0.5
        %v4834 = vmul.f32 %v4546, 0.5
        %v4835 = vmul.f32 %v4219, 0.5
        %v4836 = vmul.f32 %v4548, 0.5
        %v4837 = vmul.f32 %v4222, 0.5
        %v4838 = vmul.f32 %v4551, 0.5
        %v4839 = vmul.f32 %v4224, 0.5
        %v4840 = vmul.f32 %v4553, 0.5
        %v4841 = vmul.f32 %v4227, 0.5
        %v4842 = vmul.f32 %v4556, 0.5
        %v4843 = vmul.f32 %v4229, 0.5
        %v4844 = vmul.f32 %v4558, 0.5
        %v4845 = vmul.f32 %v4232, 0.5
        %v4846 = vmul.f32 %v4561, 0.5
        %v4847 = vmul.f32 %v4234, 0.5
        %v4848 = vmul.f32 %v4563, 0.5
        %v4849 = vmul.f32 %v4237, 0.5
        %v4850 = vmul.f32 %v4566, 0.5
        %v4851 = vmul.f32 %v4239, 0.5
        %v4852 = vmul.f32 %v4568, 0.5
        %v4853 = vmul.f32 %v4242, 0.5
        %v4854 = vmul.f32 %v4571, 0.5
        %v4855 = vmul.f32 %v4244, 0.5
        %v4856 = vmul.f32 %v4573, 0.5
        %v4857 = vmul.f32 %v4247, 0.5
        %v4858 = vmul.f32 %v4576, 0.5
        %v4859 = vmul.f32 %v4249, 0.5
        %v4860 = vmul.f32 %v4578, 0.5
        %v4861 = vmul.f32 %v4252, 0.5
        %v4862 = vmul.f32 %v4581, 0.5
        %v4863 = vmul.f32 %v4254, 0.5
        %v4864 = vmul.f32 %v4583, 0.5
        %v4865 = vmul.f32 %v4257, 0.5
        %v4866 = vmul.f32 %v4586, 0.5
        %v4867 = vmul.f32 %v4259, 0.5
        %v4868 = vmul.f32 %v4588, 0.5
        %v4869 = vmul.f32 %v4262, 0.5
        %v4870 = vmul.f32 %v4591, 0.5
        %v4871 = vmul.f32 %v4264, 0.5
        %v4872 = vmul.f32 %v4593, 0.5
        %v4873 = vmul.f32 %v4267, 0.5
        %v4874 = vmul.f32 %v4596, 0.5
        %v4875 = vmul.f32 %v4269, 0.5
        %v4876 = vmul.f32 %v4598, 0.5
        %v4877 = vmul.f32 %v4272, 0.5
        %v4878 = vmul.f32 %v4601, 0.5
        %v4879 = vmul.f32 %v4274, 0.5
        %v4880 = vmul.f32 %v4603, 0.5
        %v4881 = vmul.f32 %v4277, 0.5
        %v4882 = vmul.f32 %v4606, 0.5
        %v4883 = vmul.f32 %v4279, 0.5
        %v4884 = vmul.f32 %v4608, 0.5
        %v4885 = vmul.f32 %v4282, 0.5
        %v4886 = vmul.f32 %v4611, 0.5
        %v4887 = vmul.f32 %v4284, 0.5
        %v4888 = vmul.f32 %v4613, 0.5
        %v4889 = vmul.f32 %v4287, 0.5
        %v4890 = vmul.f32 %v4616, 0.5
        %v4891 = vmul.f32 %v4289, 0.5
        %v4892 = vmul.f32 %v4618, 0.5
        %v4893 = vmul.f32 %v4292, 0.5
        %v4894 = vmul.f32 %v4621, 0.5
        %v4895 = vmul.f32 %v4294, 0.5
        %v4896 = vmul.f32 %v4623, 0.5
        %v4897 = vmul.f32 %v4297, 0.5
        %v4898 = vmul.f32 %v4626, 0.5
        %v4899 = vmul.f32 %v4299, 0.5
        %v4900 = vmul.f32 %v4628, 0.5
        %v4901 = vmul.f32 %v4302, 0.5
        %v4902 = vmul.f32 %v4631, 0.5
        %v4903 = vmul.f32 %v4304, 0.5
        %v4904 = vmul.f32 %v4633, 0.5
        %v4905 = vmul.f32 %v4307, 0.5
        %v4906 = vmul.f32 %v4636, 0.5
        %v4907 = vmul.f32 %v4309, 0.5
        %v4908 = vmul.f32 %v4638, 0.5
        %v4909 = vmul.f32 %v4312, 0.5
        %v4910 = vmul.f32 %v4641, 0.5
        %v4911 = vmul.f32 %v4314, 0.5
        %v4912 = vmul.f32 %v4643, 0.5
        %v4913 = vmul.f32 %v4317, 0.5
        %v4914 = vmul.f32 %v4646, 0.5
        %v4915 = vmul.f32 %v4319, 0.5
        %v4916 = vmul.f32 %v4648, 0.5
        %v4917 = vmul.f32 %v4322, 0.5
        %v4918 = vmul.f32 %v4651, 0.5
        %v4919 = vmul.f32 %v4324, 0.5
        %v4920 = vmul.f32 %v4653, 0.5
        %v4921 = vmul.f32 %v4327, 0.5
        %v4922 = vmul.f32 %v4656, 0.5
        %v4923 = vmul.f32 %v4329, 0.5
        %v4924 = vmul.f32 %v4658, 0.5
        %v4925 = vmul.f32 %v4332, 0.5
        %v4926 = vmul.f32 %v4661, 0.5
        %v4927 = vmul.f32 %v4334, 0.5
        %v4928 = vmul.f32 %v4663, 0.5
        %v4929 = vmul.f32 %v4337, 0.5
        %v4930 = vmul.f32 %v4666, 0.5
        %v4931 = vmul.f32 %v4339, 0.5
        %v4932 = vmul.f32 %v4668, 0.5
        %v4933 = vmul.f32 %v4342, 0.5
        %v4934 = vmul.f32 %v4671, 0.5
        %v4935 = vmul.f32 %v4344, 0.5
        %v4936 = vmul.f32 %v4673, 0.5
        %v4937 = vmul.f32 %v4347, 0.5
        %v4938 = vmul.f32 %v4676, 0.5
        %v4939 = vmul.f32 %v4349, 0.5
        %v4940 = vmul.f32 %v4678, 0.5
        %v4941 = vmul.f32 %v4352, 0.5
        %v4942 = vmul.f32 %v4681, 0.5
        %v4943 = vmul.f32 %v4354, 0.5
        %v4944 = vmul.f32 %v4683, 0.5
        %v4945 = vmul.f32 %v4357, 0.5
        %v4946 = vmul.f32 %v4686, 0.5
        %v4947 = vmul.f32 %v4359, 0.5
        %v4948 = vmul.f32 %v4688, 0.5
        %v4949 = vmul.f32 %v4362, 0.5
        %v4950 = vmul.f32 %v4691, 0.5
        %v4951 = vmul.f32 %v4364, 0.5
        %v4952 = vmul.f32 %v4693, 0.5
        %v4953 = vmul.f32 %v4367, 0.5
        %v4954 = vmul.f32 %v4696, 0.5
        %v4955 = vmul.f32 %v4369, 0.5
        %v4956 = vmul.f32 %v4698, 0.5
        %v4957 = vmul.f32 %v4372, 0.5
        %v4958 = vmul.f32 %v4701, 0.5
        %v4959 = vmul.f32 %v4374, 0.5
        %v4960 = vmul.f32 %v4703, 0.5
        %v4961 = vtanh.pop %v4705
        %v4962 = vtanh.pop %v4706
        %v4963 = vtanh.pop %v4707
        %v4964 = vtanh.pop %v4708
        %v4965 = vtanh.pop %v4709
        %v4966 = vtanh.pop %v4710
        %v4967 = vtanh.pop %v4711
        %v4968 = vtanh.pop %v4712
        %v4969 = vtanh.pop %v4713
        %v4970 = vtanh.pop %v4714
        %v4971 = vtanh.pop %v4715
        %v4972 = vtanh.pop %v4716
        %v4973 = vtanh.pop %v4717
        %v4974 = vtanh.pop %v4718
        %v4975 = vtanh.pop %v4719
        %v4976 = vtanh.pop %v4720
        %v4977 = vtanh.pop %v4721
        %v4978 = vtanh.pop %v4722
        %v4979 = vtanh.pop %v4723
        %v4980 = vtanh.pop %v4724
        %v4981 = vtanh.pop %v4725
        %v4982 = vtanh.pop %v4726
        %v4983 = vtanh.pop %v4727
        %v4984 = vtanh.pop %v4728
        %v4985 = vtanh.pop %v4729
        %v4986 = vtanh.pop %v4730
        %v4987 = vtanh.pop %v4731
        %v4988 = vtanh.pop %v4732
        %v4989 = vtanh.pop %v4733
        %v4990 = vtanh.pop %v4734
        %v4991 = vtanh.pop %v4735
        %v4992 = vtanh.pop %v4736
        %v4993 = vtanh.pop %v4737
        %v4994 = vtanh.pop %v4738
        %v4995 = vtanh.pop %v4739
        %v4996 = vtanh.pop %v4740
        %v4997 = vtanh.pop %v4741
        %v4998 = vtanh.pop %v4742
        %v4999 = vtanh.pop %v4743
        %v5000 = vtanh.pop %v4744
        %v5001 = vtanh.pop %v4745
        %v5002 = vtanh.pop %v4746
        %v5003 = vtanh.pop %v4747
        %v5004 = vtanh.pop %v4748
        %v5005 = vtanh.pop %v4749
        %v5006 = vtanh.pop %v4750
        %v5007 = vtanh.pop %v4751
        %v5008 = vtanh.pop %v4752
        %v5009 = vtanh.pop %v4753
        %v5010 = vtanh.pop %v4754
        %v5011 = vtanh.pop %v4755
        %v5012 = vtanh.pop %v4756
        %v5013 = vtanh.pop %v4757
        %v5014 = vtanh.pop %v4758
        %v5015 = vtanh.pop %v4759
        %v5016 = vtanh.pop %v4760
        %v5017 = vtanh.pop %v4761
        %v5018 = vtanh.pop %v4762
        %v5019 = vtanh.pop %v4763
        %v5020 = vtanh.pop %v4764
        %v5021 = vtanh.pop %v4765
        %v5022 = vtanh.pop %v4766
        %v5023 = vtanh.pop %v4767
        %v5024 = vtanh.pop %v4768
        %v5025 = vtanh.pop %v4769
        %v5026 = vtanh.pop %v4770
        %v5027 = vtanh.pop %v4771
        %v5028 = vtanh.pop %v4772
        %v5029 = vtanh.pop %v4773
        %v5030 = vtanh.pop %v4774
        %v5031 = vtanh.pop %v4775
        %v5032 = vtanh.pop %v4776
        %v5033 = vtanh.pop %v4777
        %v5034 = vtanh.pop %v4778
        %v5035 = vtanh.pop %v4779
        %v5036 = vtanh.pop %v4780
        %v5037 = vtanh.pop %v4781
        %v5038 = vtanh.pop %v4782
        %v5039 = vtanh.pop %v4783
        %v5040 = vtanh.pop %v4784
        %v5041 = vtanh.pop %v4785
        %v5042 = vtanh.pop %v4786
        %v5043 = vtanh.pop %v4787
        %v5044 = vtanh.pop %v4788
        %v5045 = vtanh.pop %v4789
        %v5046 = vtanh.pop %v4790
        %v5047 = vtanh.pop %v4791
        %v5048 = vtanh.pop %v4792
        %v5049 = vtanh.pop %v4793
        %v5050 = vtanh.pop %v4794
        %v5051 = vtanh.pop %v4795
        %v5052 = vtanh.pop %v4796
        %v5053 = vtanh.pop %v4797
        %v5054 = vtanh.pop %v4798
        %v5055 = vtanh.pop %v4799
        %v5056 = vtanh.pop %v4800
        %v5057 = vtanh.pop %v4801
        %v5058 = vtanh.pop %v4802
        %v5059 = vtanh.pop %v4803
        %v5060 = vtanh.pop %v4804
        %v5061 = vtanh.pop %v4805
        %v5062 = vtanh.pop %v4806
        %v5063 = vtanh.pop %v4807
        %v5064 = vtanh.pop %v4808
        %v5065 = vtanh.pop %v4809
        %v5066 = vtanh.pop %v4810
        %v5067 = vtanh.pop %v4811
        %v5068 = vtanh.pop %v4812
        %v5069 = vtanh.pop %v4813
        %v5070 = vtanh.pop %v4814
        %v5071 = vtanh.pop %v4815
        %v5072 = vtanh.pop %v4816
        %v5073 = vtanh.pop %v4817
        %v5074 = vtanh.pop %v4818
        %v5075 = vtanh.pop %v4819
        %v5076 = vtanh.pop %v4820
        %v5077 = vtanh.pop %v4821
        %v5078 = vtanh.pop %v4822
        %v5079 = vtanh.pop %v4823
        %v5080 = vtanh.pop %v4824
        %v5081 = vtanh.pop %v4825
        %v5082 = vtanh.pop %v4826
        %v5083 = vtanh.pop %v4827
        %v5084 = vtanh.pop %v4828
        %v5085 = vtanh.pop %v4829
        %v5086 = vtanh.pop %v4830
        %v5087 = vtanh.pop %v4831
        %v5088 = vtanh.pop %v4832
        %v5089 = vtanh.pop %v4833
        %v5090 = vtanh.pop %v4834
        %v5091 = vtanh.pop %v4835
        %v5092 = vtanh.pop %v4836
        %v5093 = vtanh.pop %v4837
        %v5094 = vtanh.pop %v4838
        %v5095 = vtanh.pop %v4839
        %v5096 = vtanh.pop %v4840
        %v5097 = vtanh.pop %v4841
        %v5098 = vtanh.pop %v4842
        %v5099 = vtanh.pop %v4843
        %v5100 = vtanh.pop %v4844
        %v5101 = vtanh.pop %v4845
        %v5102 = vtanh.pop %v4846
        %v5103 = vtanh.pop %v4847
        %v5104 = vtanh.pop %v4848
        %v5105 = vtanh.pop %v4849
        %v5106 = vtanh.pop %v4850
        %v5107 = vtanh.pop %v4851
        %v5108 = vtanh.pop %v4852
        %v5109 = vtanh.pop %v4853
        %v5110 = vtanh.pop %v4854
        %v5111 = vtanh.pop %v4855
        %v5112 = vtanh.pop %v4856
        %v5113 = vtanh.pop %v4857
        %v5114 = vtanh.pop %v4858
        %v5115 = vtanh.pop %v4859
        %v5116 = vtanh.pop %v4860
        %v5117 = vtanh.pop %v4861
        %v5118 = vtanh.pop %v4862
        %v5119 = vtanh.pop %v4863
        %v5120 = vtanh.pop %v4864
        %v5121 = vtanh.pop %v4865
        %v5122 = vtanh.pop %v4866
        %v5123 = vtanh.pop %v4867
        %v5124 = vtanh.pop %v4868
        %v5125 = vtanh.pop %v4869
        %v5126 = vtanh.pop %v4870
        %v5127 = vtanh.pop %v4871
        %v5128 = vtanh.pop %v4872
        %v5129 = vtanh.pop %v4873
        %v5130 = vtanh.pop %v4874
        %v5131 = vtanh.pop %v4875
        %v5132 = vtanh.pop %v4876
        %v5133 = vtanh.pop %v4877
        %v5134 = vtanh.pop %v4878
        %v5135 = vtanh.pop %v4879
        %v5136 = vtanh.pop %v4880
        %v5137 = vtanh.pop %v4881
        %v5138 = vtanh.pop %v4882
        %v5139 = vtanh.pop %v4883
        %v5140 = vtanh.pop %v4884
        %v5141 = vtanh.pop %v4885
        %v5142 = vtanh.pop %v4886
        %v5143 = vtanh.pop %v4887
        %v5144 = vtanh.pop %v4888
        %v5145 = vtanh.pop %v4889
        %v5146 = vtanh.pop %v4890
        %v5147 = vtanh.pop %v4891
        %v5148 = vtanh.pop %v4892
        %v5149 = vtanh.pop %v4893
        %v5150 = vtanh.pop %v4894
        %v5151 = vtanh.pop %v4895
        %v5152 = vtanh.pop %v4896
        %v5153 = vtanh.pop %v4897
        %v5154 = vtanh.pop %v4898
        %v5155 = vtanh.pop %v4899
        %v5156 = vtanh.pop %v4900
        %v5157 = vtanh.pop %v4901
        %v5158 = vtanh.pop %v4902
        %v5159 = vtanh.pop %v4903
        %v5160 = vtanh.pop %v4904
        %v5161 = vtanh.pop %v4905
        %v5162 = vtanh.pop %v4906
        %v5163 = vtanh.pop %v4907
        %v5164 = vtanh.pop %v4908
        %v5165 = vtanh.pop %v4909
        %v5166 = vtanh.pop %v4910
        %v5167 = vtanh.pop %v4911
        %v5168 = vtanh.pop %v4912
        %v5169 = vtanh.pop %v4913
        %v5170 = vtanh.pop %v4914
        %v5171 = vtanh.pop %v4915
        %v5172 = vtanh.pop %v4916
        %v5173 = vtanh.pop %v4917
        %v5174 = vtanh.pop %v4918
        %v5175 = vtanh.pop %v4919
        %v5176 = vtanh.pop %v4920
        %v5177 = vtanh.pop %v4921
        %v5178 = vtanh.pop %v4922
        %v5179 = vtanh.pop %v4923
        %v5180 = vtanh.pop %v4924
        %v5181 = vtanh.pop %v4925
        %v5182 = vtanh.pop %v4926
        %v5183 = vtanh.pop %v4927
        %v5184 = vtanh.pop %v4928
        %v5185 = vtanh.pop %v4929
        %v5186 = vtanh.pop %v4930
        %v5187 = vtanh.pop %v4931
        %v5188 = vtanh.pop %v4932
        %v5189 = vtanh.pop %v4933
        %v5190 = vtanh.pop %v4934
        %v5191 = vtanh.pop %v4935
        %v5192 = vtanh.pop %v4936
        %v5193 = vtanh.pop %v4937
        %v5194 = vtanh.pop %v4938
        %v5195 = vtanh.pop %v4939
        %v5196 = vtanh.pop %v4940
        %v5197 = vtanh.pop %v4941
        %v5198 = vtanh.pop %v4942
        %v5199 = vtanh.pop %v4943
        %v5200 = vtanh.pop %v4944
        %v5201 = vtanh.pop %v4945
        %v5202 = vtanh.pop %v4946
        %v5203 = vtanh.pop %v4947
        %v5204 = vtanh.pop %v4948
        %v5205 = vtanh.pop %v4949
        %v5206 = vtanh.pop %v4950
        %v5207 = vtanh.pop %v4951
        %v5208 = vtanh.pop %v4952
        %v5209 = vtanh.pop %v4953
        %v5210 = vtanh.pop %v4954
        %v5211 = vtanh.pop %v4955
        %v5212 = vtanh.pop %v4956
        %v5213 = vtanh.pop %v4957
        %v5214 = vtanh.pop %v4958
        %v5215 = vtanh.pop %v4959
        %v5216 = vtanh.pop %v4960
        %v5217 = vadd.f32 %v4961, 1.0
        %v5218 = vadd.f32 %v4962, 1.0
        %v5219 = vadd.f32 %v4963, 1.0
        %v5220 = vadd.f32 %v4964, 1.0
        %v5221 = vadd.f32 %v4965, 1.0
        %v5222 = vadd.f32 %v4966, 1.0
        %v5223 = vadd.f32 %v4967, 1.0
        %v5224 = vadd.f32 %v4968, 1.0
        %v5225 = vadd.f32 %v4969, 1.0
        %v5226 = vadd.f32 %v4970, 1.0
        %v5227 = vadd.f32 %v4971, 1.0
        %v5228 = vadd.f32 %v4972, 1.0
        %v5229 = vadd.f32 %v4973, 1.0
        %v5230 = vadd.f32 %v4974, 1.0
        %v5231 = vadd.f32 %v4975, 1.0
        %v5232 = vadd.f32 %v4976, 1.0
        %v5233 = vadd.f32 %v4977, 1.0
        %v5234 = vadd.f32 %v4978, 1.0
        %v5235 = vadd.f32 %v4979, 1.0
        %v5236 = vadd.f32 %v4980, 1.0
        %v5237 = vadd.f32 %v4981, 1.0
        %v5238 = vadd.f32 %v4982, 1.0
        %v5239 = vadd.f32 %v4983, 1.0
        %v5240 = vadd.f32 %v4984, 1.0
        %v5241 = vadd.f32 %v4985, 1.0
        %v5242 = vadd.f32 %v4986, 1.0
        %v5243 = vadd.f32 %v4987, 1.0
        %v5244 = vadd.f32 %v4988, 1.0
        %v5245 = vadd.f32 %v4989, 1.0
        %v5246 = vadd.f32 %v4990, 1.0
        %v5247 = vadd.f32 %v4991, 1.0
        %v5248 = vadd.f32 %v4992, 1.0
        %v5249 = vadd.f32 %v4993, 1.0
        %v5250 = vadd.f32 %v4994, 1.0
        %v5251 = vadd.f32 %v4995, 1.0
        %v5252 = vadd.f32 %v4996, 1.0
        %v5253 = vadd.f32 %v4997, 1.0
        %v5254 = vadd.f32 %v4998, 1.0
        %v5255 = vadd.f32 %v4999, 1.0
        %v5256 = vadd.f32 %v5000, 1.0
        %v5257 = vadd.f32 %v5001, 1.0
        %v5258 = vadd.f32 %v5002, 1.0
        %v5259 = vadd.f32 %v5003, 1.0
        %v5260 = vadd.f32 %v5004, 1.0
        %v5261 = vadd.f32 %v5005, 1.0
        %v5262 = vadd.f32 %v5006, 1.0
        %v5263 = vadd.f32 %v5007, 1.0
        %v5264 = vadd.f32 %v5008, 1.0
        %v5265 = vadd.f32 %v5009, 1.0
        %v5266 = vadd.f32 %v5010, 1.0
        %v5267 = vadd.f32 %v5011, 1.0
        %v5268 = vadd.f32 %v5012, 1.0
        %v5269 = vadd.f32 %v5013, 1.0
        %v5270 = vadd.f32 %v5014, 1.0
        %v5271 = vadd.f32 %v5015, 1.0
        %v5272 = vadd.f32 %v5016, 1.0
        %v5273 = vadd.f32 %v5017, 1.0
        %v5274 = vadd.f32 %v5018, 1.0
        %v5275 = vadd.f32 %v5019, 1.0
        %v5276 = vadd.f32 %v5020, 1.0
        %v5277 = vadd.f32 %v5021, 1.0
        %v5278 = vadd.f32 %v5022, 1.0
        %v5279 = vadd.f32 %v5023, 1.0
        %v5280 = vadd.f32 %v5024, 1.0
        %v5281 = vadd.f32 %v5025, 1.0
        %v5282 = vadd.f32 %v5026, 1.0
        %v5283 = vadd.f32 %v5027, 1.0
        %v5284 = vadd.f32 %v5028, 1.0
        %v5285 = vadd.f32 %v5029, 1.0
        %v5286 = vadd.f32 %v5030, 1.0
        %v5287 = vadd.f32 %v5031, 1.0
        %v5288 = vadd.f32 %v5032, 1.0
        %v5289 = vadd.f32 %v5033, 1.0
        %v5290 = vadd.f32 %v5034, 1.0
        %v5291 = vadd.f32 %v5035, 1.0
        %v5292 = vadd.f32 %v5036, 1.0
        %v5293 = vadd.f32 %v5037, 1.0
        %v5294 = vadd.f32 %v5038, 1.0
        %v5295 = vadd.f32 %v5039, 1.0
        %v5296 = vadd.f32 %v5040, 1.0
        %v5297 = vadd.f32 %v5041, 1.0
        %v5298 = vadd.f32 %v5042, 1.0
        %v5299 = vadd.f32 %v5043, 1.0
        %v5300 = vadd.f32 %v5044, 1.0
        %v5301 = vadd.f32 %v5045, 1.0
        %v5302 = vadd.f32 %v5046, 1.0
        %v5303 = vadd.f32 %v5047, 1.0
        %v5304 = vadd.f32 %v5048, 1.0
        %v5305 = vadd.f32 %v5049, 1.0
        %v5306 = vadd.f32 %v5050, 1.0
        %v5307 = vadd.f32 %v5051, 1.0
        %v5308 = vadd.f32 %v5052, 1.0
        %v5309 = vadd.f32 %v5053, 1.0
        %v5310 = vadd.f32 %v5054, 1.0
        %v5311 = vadd.f32 %v5055, 1.0
        %v5312 = vadd.f32 %v5056, 1.0
        %v5313 = vadd.f32 %v5057, 1.0
        %v5314 = vadd.f32 %v5058, 1.0
        %v5315 = vadd.f32 %v5059, 1.0
        %v5316 = vadd.f32 %v5060, 1.0
        %v5317 = vadd.f32 %v5061, 1.0
        %v5318 = vadd.f32 %v5062, 1.0
        %v5319 = vadd.f32 %v5063, 1.0
        %v5320 = vadd.f32 %v5064, 1.0
        %v5321 = vadd.f32 %v5065, 1.0
        %v5322 = vadd.f32 %v5066, 1.0
        %v5323 = vadd.f32 %v5067, 1.0
        %v5324 = vadd.f32 %v5068, 1.0
        %v5325 = vadd.f32 %v5069, 1.0
        %v5326 = vadd.f32 %v5070, 1.0
        %v5327 = vadd.f32 %v5071, 1.0
        %v5328 = vadd.f32 %v5072, 1.0
        %v5329 = vadd.f32 %v5073, 1.0
        %v5330 = vadd.f32 %v5074, 1.0
        %v5331 = vadd.f32 %v5075, 1.0
        %v5332 = vadd.f32 %v5076, 1.0
        %v5333 = vadd.f32 %v5077, 1.0
        %v5334 = vadd.f32 %v5078, 1.0
        %v5335 = vadd.f32 %v5079, 1.0
        %v5336 = vadd.f32 %v5080, 1.0
        %v5337 = vadd.f32 %v5081, 1.0
        %v5338 = vadd.f32 %v5082, 1.0
        %v5339 = vadd.f32 %v5083, 1.0
        %v5340 = vadd.f32 %v5084, 1.0
        %v5341 = vadd.f32 %v5085, 1.0
        %v5342 = vadd.f32 %v5086, 1.0
        %v5343 = vadd.f32 %v5087, 1.0
        %v5344 = vadd.f32 %v5088, 1.0
        %v5345 = vadd.f32 %v5089, 1.0
        %v5346 = vadd.f32 %v5090, 1.0
        %v5347 = vadd.f32 %v5091, 1.0
        %v5348 = vadd.f32 %v5092, 1.0
        %v5349 = vadd.f32 %v5093, 1.0
        %v5350 = vadd.f32 %v5094, 1.0
        %v5351 = vadd.f32 %v5095, 1.0
        %v5352 = vadd.f32 %v5096, 1.0
        %v5353 = vadd.f32 %v5097, 1.0
        %v5354 = vadd.f32 %v5098, 1.0
        %v5355 = vadd.f32 %v5099, 1.0
        %v5356 = vadd.f32 %v5100, 1.0
        %v5357 = vadd.f32 %v5101, 1.0
        %v5358 = vadd.f32 %v5102, 1.0
        %v5359 = vadd.f32 %v5103, 1.0
        %v5360 = vadd.f32 %v5104, 1.0
        %v5361 = vadd.f32 %v5105, 1.0
        %v5362 = vadd.f32 %v5106, 1.0
        %v5363 = vadd.f32 %v5107, 1.0
        %v5364 = vadd.f32 %v5108, 1.0
        %v5365 = vadd.f32 %v5109, 1.0
        %v5366 = vadd.f32 %v5110, 1.0
        %v5367 = vadd.f32 %v5111, 1.0
        %v5368 = vadd.f32 %v5112, 1.0
        %v5369 = vadd.f32 %v5113, 1.0
        %v5370 = vadd.f32 %v5114, 1.0
        %v5371 = vadd.f32 %v5115, 1.0
        %v5372 = vadd.f32 %v5116, 1.0
        %v5373 = vadd.f32 %v5117, 1.0
        %v5374 = vadd.f32 %v5118, 1.0
        %v5375 = vadd.f32 %v5119, 1.0
        %v5376 = vadd.f32 %v5120, 1.0
        %v5377 = vadd.f32 %v5121, 1.0
        %v5378 = vadd.f32 %v5122, 1.0
        %v5379 = vadd.f32 %v5123, 1.0
        %v5380 = vadd.f32 %v5124, 1.0
        %v5381 = vadd.f32 %v5125, 1.0
        %v5382 = vadd.f32 %v5126, 1.0
        %v5383 = vadd.f32 %v5127, 1.0
        %v5384 = vadd.f32 %v5128, 1.0
        %v5385 = vadd.f32 %v5129, 1.0
        %v5386 = vadd.f32 %v5130, 1.0
        %v5387 = vadd.f32 %v5131, 1.0
        %v5388 = vadd.f32 %v5132, 1.0
        %v5389 = vadd.f32 %v5133, 1.0
        %v5390 = vadd.f32 %v5134, 1.0
        %v5391 = vadd.f32 %v5135, 1.0
        %v5392 = vadd.f32 %v5136, 1.0
        %v5393 = vadd.f32 %v5137, 1.0
        %v5394 = vadd.f32 %v5138, 1.0
        %v5395 = vadd.f32 %v5139, 1.0
        %v5396 = vadd.f32 %v5140, 1.0
        %v5397 = vadd.f32 %v5141, 1.0
        %v5398 = vadd.f32 %v5142, 1.0
        %v5399 = vadd.f32 %v5143, 1.0
        %v5400 = vadd.f32 %v5144, 1.0
        %v5401 = vadd.f32 %v5145, 1.0
        %v5402 = vadd.f32 %v5146, 1.0
        %v5403 = vadd.f32 %v5147, 1.0
        %v5404 = vadd.f32 %v5148, 1.0
        %v5405 = vadd.f32 %v5149, 1.0
        %v5406 = vadd.f32 %v5150, 1.0
        %v5407 = vadd.f32 %v5151, 1.0
        %v5408 = vadd.f32 %v5152, 1.0
        %v5409 = vadd.f32 %v5153, 1.0
        %v5410 = vadd.f32 %v5154, 1.0
        %v5411 = vadd.f32 %v5155, 1.0
        %v5412 = vadd.f32 %v5156, 1.0
        %v5413 = vadd.f32 %v5157, 1.0
        %v5414 = vadd.f32 %v5158, 1.0
        %v5415 = vadd.f32 %v5159, 1.0
        %v5416 = vadd.f32 %v5160, 1.0
        %v5417 = vadd.f32 %v5161, 1.0
        %v5418 = vadd.f32 %v5162, 1.0
        %v5419 = vadd.f32 %v5163, 1.0
        %v5420 = vadd.f32 %v5164, 1.0
        %v5421 = vadd.f32 %v5165, 1.0
        %v5422 = vadd.f32 %v5166, 1.0
        %v5423 = vadd.f32 %v5167, 1.0
        %v5424 = vadd.f32 %v5168, 1.0
        %v5425 = vadd.f32 %v5169, 1.0
        %v5426 = vadd.f32 %v5170, 1.0
        %v5427 = vadd.f32 %v5171, 1.0
        %v5428 = vadd.f32 %v5172, 1.0
        %v5429 = vadd.f32 %v5173, 1.0
        %v5430 = vadd.f32 %v5174, 1.0
        %v5431 = vadd.f32 %v5175, 1.0
        %v5432 = vadd.f32 %v5176, 1.0
        %v5433 = vadd.f32 %v5177, 1.0
        %v5434 = vadd.f32 %v5178, 1.0
        %v5435 = vadd.f32 %v5179, 1.0
        %v5436 = vadd.f32 %v5180, 1.0
        %v5437 = vadd.f32 %v5181, 1.0
        %v5438 = vadd.f32 %v5182, 1.0
        %v5439 = vadd.f32 %v5183, 1.0
        %v5440 = vadd.f32 %v5184, 1.0
        %v5441 = vadd.f32 %v5185, 1.0
        %v5442 = vadd.f32 %v5186, 1.0
        %v5443 = vadd.f32 %v5187, 1.0
        %v5444 = vadd.f32 %v5188, 1.0
        %v5445 = vadd.f32 %v5189, 1.0
        %v5446 = vadd.f32 %v5190, 1.0
        %v5447 = vadd.f32 %v5191, 1.0
        %v5448 = vadd.f32 %v5192, 1.0
        %v5449 = vadd.f32 %v5193, 1.0
        %v5450 = vadd.f32 %v5194, 1.0
        %v5451 = vadd.f32 %v5195, 1.0
        %v5452 = vadd.f32 %v5196, 1.0
        %v5453 = vadd.f32 %v5197, 1.0
        %v5454 = vadd.f32 %v5198, 1.0
        %v5455 = vadd.f32 %v5199, 1.0
        %v5456 = vadd.f32 %v5200, 1.0
        %v5457 = vadd.f32 %v5201, 1.0
        %v5458 = vadd.f32 %v5202, 1.0
        %v5459 = vadd.f32 %v5203, 1.0
        %v5460 = vadd.f32 %v5204, 1.0
        %v5461 = vadd.f32 %v5205, 1.0
        %v5462 = vadd.f32 %v5206, 1.0
        %v5463 = vadd.f32 %v5207, 1.0
        %v5464 = vadd.f32 %v5208, 1.0
        %v5465 = vadd.f32 %v5209, 1.0
        %v5466 = vadd.f32 %v5210, 1.0
        %v5467 = vadd.f32 %v5211, 1.0
        %v5468 = vadd.f32 %v5212, 1.0
        %v5469 = vadd.f32 %v5213, 1.0
        %v5470 = vadd.f32 %v5214, 1.0
        %v5471 = vadd.f32 %v5215, 1.0
        %v5472 = vadd.f32 %v5216, 1.0
        %v5473 = vmul.f32 %v4705, %v5217
        %v5474 = vmul.f32 %v4706, %v5218
        %v5475 = vmul.f32 %v4707, %v5219
        %v5476 = vmul.f32 %v4708, %v5220
        %v5477 = vmul.f32 %v4709, %v5221
        %v5478 = vmul.f32 %v4710, %v5222
        %v5479 = vmul.f32 %v4711, %v5223
        %v5480 = vmul.f32 %v4712, %v5224
        %v5481 = vmul.f32 %v4713, %v5225
        %v5482 = vmul.f32 %v4714, %v5226
        %v5483 = vmul.f32 %v4715, %v5227
        %v5484 = vmul.f32 %v4716, %v5228
        %v5485 = vmul.f32 %v4717, %v5229
        %v5486 = vmul.f32 %v4718, %v5230
        %v5487 = vmul.f32 %v4719, %v5231
        %v5488 = vmul.f32 %v4720, %v5232
        %v5489 = vmul.f32 %v4721, %v5233
        %v5490 = vmul.f32 %v4722, %v5234
        %v5491 = vmul.f32 %v4723, %v5235
        %v5492 = vmul.f32 %v4724, %v5236
        %v5493 = vmul.f32 %v4725, %v5237
        %v5494 = vmul.f32 %v4726, %v5238
        %v5495 = vmul.f32 %v4727, %v5239
        %v5496 = vmul.f32 %v4728, %v5240
        %v5497 = vmul.f32 %v4729, %v5241
        %v5498 = vmul.f32 %v4730, %v5242
        %v5499 = vmul.f32 %v4731, %v5243
        %v5500 = vmul.f32 %v4732, %v5244
        %v5501 = vmul.f32 %v4733, %v5245
        %v5502 = vmul.f32 %v4734, %v5246
        %v5503 = vmul.f32 %v4735, %v5247
        %v5504 = vmul.f32 %v4736, %v5248
        %v5505 = vmul.f32 %v4737, %v5249
        %v5506 = vmul.f32 %v4738, %v5250
        %v5507 = vmul.f32 %v4739, %v5251
        %v5508 = vmul.f32 %v4740, %v5252
        %v5509 = vmul.f32 %v4741, %v5253
        %v5510 = vmul.f32 %v4742, %v5254
        %v5511 = vmul.f32 %v4743, %v5255
        %v5512 = vmul.f32 %v4744, %v5256
        %v5513 = vmul.f32 %v4745, %v5257
        %v5514 = vmul.f32 %v4746, %v5258
        %v5515 = vmul.f32 %v4747, %v5259
        %v5516 = vmul.f32 %v4748, %v5260
        %v5517 = vmul.f32 %v4749, %v5261
        %v5518 = vmul.f32 %v4750, %v5262
        %v5519 = vmul.f32 %v4751, %v5263
        %v5520 = vmul.f32 %v4752, %v5264
        %v5521 = vmul.f32 %v4753, %v5265
        %v5522 = vmul.f32 %v4754, %v5266
        %v5523 = vmul.f32 %v4755, %v5267
        %v5524 = vmul.f32 %v4756, %v5268
        %v5525 = vmul.f32 %v4757, %v5269
        %v5526 = vmul.f32 %v4758, %v5270
        %v5527 = vmul.f32 %v4759, %v5271
        %v5528 = vmul.f32 %v4760, %v5272
        %v5529 = vmul.f32 %v4761, %v5273
        %v5530 = vmul.f32 %v4762, %v5274
        %v5531 = vmul.f32 %v4763, %v5275
        %v5532 = vmul.f32 %v4764, %v5276
        %v5533 = vmul.f32 %v4765, %v5277
        %v5534 = vmul.f32 %v4766, %v5278
        %v5535 = vmul.f32 %v4767, %v5279
        %v5536 = vmul.f32 %v4768, %v5280
        %v5537 = vmul.f32 %v4769, %v5281
        %v5538 = vmul.f32 %v4770, %v5282
        %v5539 = vmul.f32 %v4771, %v5283
        %v5540 = vmul.f32 %v4772, %v5284
        %v5541 = vmul.f32 %v4773, %v5285
        %v5542 = vmul.f32 %v4774, %v5286
        %v5543 = vmul.f32 %v4775, %v5287
        %v5544 = vmul.f32 %v4776, %v5288
        %v5545 = vmul.f32 %v4777, %v5289
        %v5546 = vmul.f32 %v4778, %v5290
        %v5547 = vmul.f32 %v4779, %v5291
        %v5548 = vmul.f32 %v4780, %v5292
        %v5549 = vmul.f32 %v4781, %v5293
        %v5550 = vmul.f32 %v4782, %v5294
        %v5551 = vmul.f32 %v4783, %v5295
        %v5552 = vmul.f32 %v4784, %v5296
        %v5553 = vmul.f32 %v4785, %v5297
        %v5554 = vmul.f32 %v4786, %v5298
        %v5555 = vmul.f32 %v4787, %v5299
        %v5556 = vmul.f32 %v4788, %v5300
        %v5557 = vmul.f32 %v4789, %v5301
        %v5558 = vmul.f32 %v4790, %v5302
        %v5559 = vmul.f32 %v4791, %v5303
        %v5560 = vmul.f32 %v4792, %v5304
        %v5561 = vmul.f32 %v4793, %v5305
        %v5562 = vmul.f32 %v4794, %v5306
        %v5563 = vmul.f32 %v4795, %v5307
        %v5564 = vmul.f32 %v4796, %v5308
        %v5565 = vmul.f32 %v4797, %v5309
        %v5566 = vmul.f32 %v4798, %v5310
        %v5567 = vmul.f32 %v4799, %v5311
        %v5568 = vmul.f32 %v4800, %v5312
        %v5569 = vmul.f32 %v4801, %v5313
        %v5570 = vmul.f32 %v4802, %v5314
        %v5571 = vmul.f32 %v4803, %v5315
        %v5572 = vmul.f32 %v4804, %v5316
        %v5573 = vmul.f32 %v4805, %v5317
        %v5574 = vmul.f32 %v4806, %v5318
        %v5575 = vmul.f32 %v4807, %v5319
        %v5576 = vmul.f32 %v4808, %v5320
        %v5577 = vmul.f32 %v4809, %v5321
        %v5578 = vmul.f32 %v4810, %v5322
        %v5579 = vmul.f32 %v4811, %v5323
        %v5580 = vmul.f32 %v4812, %v5324
        %v5581 = vmul.f32 %v4813, %v5325
        %v5582 = vmul.f32 %v4814, %v5326
        %v5583 = vmul.f32 %v4815, %v5327
        %v5584 = vmul.f32 %v4816, %v5328
        %v5585 = vmul.f32 %v4817, %v5329
        %v5586 = vmul.f32 %v4818, %v5330
        %v5587 = vmul.f32 %v4819, %v5331
        %v5588 = vmul.f32 %v4820, %v5332
        %v5589 = vmul.f32 %v4821, %v5333
        %v5590 = vmul.f32 %v4822, %v5334
        %v5591 = vmul.f32 %v4823, %v5335
        %v5592 = vmul.f32 %v4824, %v5336
        %v5593 = vmul.f32 %v4825, %v5337
        %v5594 = vmul.f32 %v4826, %v5338
        %v5595 = vmul.f32 %v4827, %v5339
        %v5596 = vmul.f32 %v4828, %v5340
        %v5597 = vmul.f32 %v4829, %v5341
        %v5598 = vmul.f32 %v4830, %v5342
        %v5599 = vmul.f32 %v4831, %v5343
        %v5600 = vmul.f32 %v4832, %v5344
        %v5601 = vmul.f32 %v4833, %v5345
        %v5602 = vmul.f32 %v4834, %v5346
        %v5603 = vmul.f32 %v4835, %v5347
        %v5604 = vmul.f32 %v4836, %v5348
        %v5605 = vmul.f32 %v4837, %v5349
        %v5606 = vmul.f32 %v4838, %v5350
        %v5607 = vmul.f32 %v4839, %v5351
        %v5608 = vmul.f32 %v4840, %v5352
        %v5609 = vmul.f32 %v4841, %v5353
        %v5610 = vmul.f32 %v4842, %v5354
        %v5611 = vmul.f32 %v4843, %v5355
        %v5612 = vmul.f32 %v4844, %v5356
        %v5613 = vmul.f32 %v4845, %v5357
        %v5614 = vmul.f32 %v4846, %v5358
        %v5615 = vmul.f32 %v4847, %v5359
        %v5616 = vmul.f32 %v4848, %v5360
        %v5617 = vmul.f32 %v4849, %v5361
        %v5618 = vmul.f32 %v4850, %v5362
        %v5619 = vmul.f32 %v4851, %v5363
        %v5620 = vmul.f32 %v4852, %v5364
        %v5621 = vmul.f32 %v4853, %v5365
        %v5622 = vmul.f32 %v4854, %v5366
        %v5623 = vmul.f32 %v4855, %v5367
        %v5624 = vmul.f32 %v4856, %v5368
        %v5625 = vmul.f32 %v4857, %v5369
        %v5626 = vmul.f32 %v4858, %v5370
        %v5627 = vmul.f32 %v4859, %v5371
        %v5628 = vmul.f32 %v4860, %v5372
        %v5629 = vmul.f32 %v4861, %v5373
        %v5630 = vmul.f32 %v4862, %v5374
        %v5631 = vmul.f32 %v4863, %v5375
        %v5632 = vmul.f32 %v4864, %v5376
        %v5633 = vmul.f32 %v4865, %v5377
        %v5634 = vmul.f32 %v4866, %v5378
        %v5635 = vmul.f32 %v4867, %v5379
        %v5636 = vmul.f32 %v4868, %v5380
        %v5637 = vmul.f32 %v4869, %v5381
        %v5638 = vmul.f32 %v4870, %v5382
        %v5639 = vmul.f32 %v4871, %v5383
        %v5640 = vmul.f32 %v4872, %v5384
        %v5641 = vmul.f32 %v4873, %v5385
        %v5642 = vmul.f32 %v4874, %v5386
        %v5643 = vmul.f32 %v4875, %v5387
        %v5644 = vmul.f32 %v4876, %v5388
        %v5645 = vmul.f32 %v4877, %v5389
        %v5646 = vmul.f32 %v4878, %v5390
        %v5647 = vmul.f32 %v4879, %v5391
        %v5648 = vmul.f32 %v4880, %v5392
        %v5649 = vmul.f32 %v4881, %v5393
        %v5650 = vmul.f32 %v4882, %v5394
        %v5651 = vmul.f32 %v4883, %v5395
        %v5652 = vmul.f32 %v4884, %v5396
        %v5653 = vmul.f32 %v4885, %v5397
        %v5654 = vmul.f32 %v4886, %v5398
        %v5655 = vmul.f32 %v4887, %v5399
        %v5656 = vmul.f32 %v4888, %v5400
        %v5657 = vmul.f32 %v4889, %v5401
        %v5658 = vmul.f32 %v4890, %v5402
        %v5659 = vmul.f32 %v4891, %v5403
        %v5660 = vmul.f32 %v4892, %v5404
        %v5661 = vmul.f32 %v4893, %v5405
        %v5662 = vmul.f32 %v4894, %v5406
        %v5663 = vmul.f32 %v4895, %v5407
        %v5664 = vmul.f32 %v4896, %v5408
        %v5665 = vmul.f32 %v4897, %v5409
        %v5666 = vmul.f32 %v4898, %v5410
        %v5667 = vmul.f32 %v4899, %v5411
        %v5668 = vmul.f32 %v4900, %v5412
        %v5669 = vmul.f32 %v4901, %v5413
        %v5670 = vmul.f32 %v4902, %v5414
        %v5671 = vmul.f32 %v4903, %v5415
        %v5672 = vmul.f32 %v4904, %v5416
        %v5673 = vmul.f32 %v4905, %v5417
        %v5674 = vmul.f32 %v4906, %v5418
        %v5675 = vmul.f32 %v4907, %v5419
        %v5676 = vmul.f32 %v4908, %v5420
        %v5677 = vmul.f32 %v4909, %v5421
        %v5678 = vmul.f32 %v4910, %v5422
        %v5679 = vmul.f32 %v4911, %v5423
        %v5680 = vmul.f32 %v4912, %v5424
        %v5681 = vmul.f32 %v4913, %v5425
        %v5682 = vmul.f32 %v4914, %v5426
        %v5683 = vmul.f32 %v4915, %v5427
        %v5684 = vmul.f32 %v4916, %v5428
        %v5685 = vmul.f32 %v4917, %v5429
        %v5686 = vmul.f32 %v4918, %v5430
        %v5687 = vmul.f32 %v4919, %v5431
        %v5688 = vmul.f32 %v4920, %v5432
        %v5689 = vmul.f32 %v4921, %v5433
        %v5690 = vmul.f32 %v4922, %v5434
        %v5691 = vmul.f32 %v4923, %v5435
        %v5692 = vmul.f32 %v4924, %v5436
        %v5693 = vmul.f32 %v4925, %v5437
        %v5694 = vmul.f32 %v4926, %v5438
        %v5695 = vmul.f32 %v4927, %v5439
        %v5696 = vmul.f32 %v4928, %v5440
        %v5697 = vmul.f32 %v4929, %v5441
        %v5698 = vmul.f32 %v4930, %v5442
        %v5699 = vmul.f32 %v4931, %v5443
        %v5700 = vmul.f32 %v4932, %v5444
        %v5701 = vmul.f32 %v4933, %v5445
        %v5702 = vmul.f32 %v4934, %v5446
        %v5703 = vmul.f32 %v4935, %v5447
        %v5704 = vmul.f32 %v4936, %v5448
        %v5705 = vmul.f32 %v4937, %v5449
        %v5706 = vmul.f32 %v4938, %v5450
        %v5707 = vmul.f32 %v4939, %v5451
        %v5708 = vmul.f32 %v4940, %v5452
        %v5709 = vmul.f32 %v4941, %v5453
        %v5710 = vmul.f32 %v4942, %v5454
        %v5711 = vmul.f32 %v4943, %v5455
        %v5712 = vmul.f32 %v4944, %v5456
        %v5713 = vmul.f32 %v4945, %v5457
        %v5714 = vmul.f32 %v4946, %v5458
        %v5715 = vmul.f32 %v4947, %v5459
        %v5716 = vmul.f32 %v4948, %v5460
        %v5717 = vmul.f32 %v4949, %v5461
        %v5718 = vmul.f32 %v4950, %v5462
        %v5719 = vmul.f32 %v4951, %v5463
        %v5720 = vmul.f32 %v4952, %v5464
        %v5721 = vmul.f32 %v4953, %v5465
        %v5722 = vmul.f32 %v4954, %v5466
        %v5723 = vmul.f32 %v4955, %v5467
        %v5724 = vmul.f32 %v4956, %v5468
        %v5725 = vmul.f32 %v4957, %v5469
        %v5726 = vmul.f32 %v4958, %v5470
        %v5727 = vmul.f32 %v4959, %v5471
        %v5728 = vmul.f32 %v4960, %v5472
        %5729 = vst [vmem:[%s385] sm:$0xff] %v5473
        %5730 = vst [vmem:[%s385 + $0x8] sm:$0xff] %v5474
        %5731 = vst [vmem:[%s385 + $0x10] sm:$0xff] %v5475
        %5732 = vst [vmem:[%s385 + $0x18] sm:$0xff] %v5476
        %5733 = vst [vmem:[%s385 + $0x20] sm:$0xff] %v5477
        %5734 = vst [vmem:[%s385 + $0x28] sm:$0xff] %v5478
        %5735 = vst [vmem:[%s385 + $0x30] sm:$0xff] %v5479
        %5736 = vst [vmem:[%s385 + $0x38] sm:$0xff] %v5480
        %5737 = vst [vmem:[%s385 + $0x40] sm:$0xff] %v5481
        %5738 = vst [vmem:[%s385 + $0x48] sm:$0xff] %v5482
        %5739 = vst [vmem:[%s385 + $0x50] sm:$0xff] %v5483
        %5740 = vst [vmem:[%s385 + $0x58] sm:$0xff] %v5484
        %5741 = vst [vmem:[%s385 + $0x60] sm:$0xff] %v5485
        %5742 = vst [vmem:[%s385 + $0x68] sm:$0xff] %v5486
        %5743 = vst [vmem:[%s385 + $0x70] sm:$0xff] %v5487
        %5744 = vst [vmem:[%s385 + $0x78] sm:$0xff] %v5488
        %5745 = vst [vmem:[%s385 + $0x80] sm:$0xff] %v5489
        %5746 = vst [vmem:[%s385 + $0x88] sm:$0xff] %v5490
        %5747 = vst [vmem:[%s385 + $0x90] sm:$0xff] %v5491
        %5748 = vst [vmem:[%s385 + $0x98] sm:$0xff] %v5492
        %5749 = vst [vmem:[%s385 + $0xa0] sm:$0xff] %v5493
        %5750 = vst [vmem:[%s385 + $0xa8] sm:$0xff] %v5494
        %5751 = vst [vmem:[%s385 + $0xb0] sm:$0xff] %v5495
        %5752 = vst [vmem:[%s385 + $0xb8] sm:$0xff] %v5496
        %5753 = vst [vmem:[%s385 + $0xc0] sm:$0xff] %v5497
        %5754 = vst [vmem:[%s385 + $0xc8] sm:$0xff] %v5498
        %5755 = vst [vmem:[%s385 + $0xd0] sm:$0xff] %v5499
        %5756 = vst [vmem:[%s385 + $0xd8] sm:$0xff] %v5500
        %5757 = vst [vmem:[%s385 + $0xe0] sm:$0xff] %v5501
        %5758 = vst [vmem:[%s385 + $0xe8] sm:$0xff] %v5502
        %5759 = vst [vmem:[%s385 + $0xf0] sm:$0xff] %v5503
        %5760 = vst [vmem:[%s385 + $0xf8] sm:$0xff] %v5504
        %5761 = vst [vmem:[%s385 + $0x100] sm:$0xff] %v5505
        %5762 = vst [vmem:[%s385 + $0x108] sm:$0xff] %v5506
        %5763 = vst [vmem:[%s385 + $0x110] sm:$0xff] %v5507
        %5764 = vst [vmem:[%s385 + $0x118] sm:$0xff] %v5508
        %5765 = vst [vmem:[%s385 + $0x120] sm:$0xff] %v5509
        %5766 = vst [vmem:[%s385 + $0x128] sm:$0xff] %v5510
        %5767 = vst [vmem:[%s385 + $0x130] sm:$0xff] %v5511
        %5768 = vst [vmem:[%s385 + $0x138] sm:$0xff] %v5512
        %5769 = vst [vmem:[%s385 + $0x140] sm:$0xff] %v5513
        %5770 = vst [vmem:[%s385 + $0x148] sm:$0xff] %v5514
        %5771 = vst [vmem:[%s385 + $0x150] sm:$0xff] %v5515
        %5772 = vst [vmem:[%s385 + $0x158] sm:$0xff] %v5516
        %5773 = vst [vmem:[%s385 + $0x160] sm:$0xff] %v5517
        %5774 = vst [vmem:[%s385 + $0x168] sm:$0xff] %v5518
        %5775 = vst [vmem:[%s385 + $0x170] sm:$0xff] %v5519
        %5776 = vst [vmem:[%s385 + $0x178] sm:$0xff] %v5520
        %5777 = vst [vmem:[%s385 + $0x180] sm:$0xff] %v5521
        %5778 = vst [vmem:[%s385 + $0x188] sm:$0xff] %v5522
        %5779 = vst [vmem:[%s385 + $0x190] sm:$0xff] %v5523
        %5780 = vst [vmem:[%s385 + $0x198] sm:$0xff] %v5524
        %5781 = vst [vmem:[%s385 + $0x1a0] sm:$0xff] %v5525
        %5782 = vst [vmem:[%s385 + $0x1a8] sm:$0xff] %v5526
        %5783 = vst [vmem:[%s385 + $0x1b0] sm:$0xff] %v5527
        %5784 = vst [vmem:[%s385 + $0x1b8] sm:$0xff] %v5528
        %5785 = vst [vmem:[%s385 + $0x1c0] sm:$0xff] %v5529
        %5786 = vst [vmem:[%s385 + $0x1c8] sm:$0xff] %v5530
        %5787 = vst [vmem:[%s385 + $0x1d0] sm:$0xff] %v5531
        %5788 = vst [vmem:[%s385 + $0x1d8] sm:$0xff] %v5532
        %5789 = vst [vmem:[%s385 + $0x1e0] sm:$0xff] %v5533
        %5790 = vst [vmem:[%s385 + $0x1e8] sm:$0xff] %v5534
        %5791 = vst [vmem:[%s385 + $0x1f0] sm:$0xff] %v5535
        %5792 = vst [vmem:[%s385 + $0x1f8] sm:$0xff] %v5536
        %5793 = vst [vmem:[%s385 + $0x200] sm:$0xff] %v5537
        %5794 = vst [vmem:[%s385 + $0x208] sm:$0xff] %v5538
        %5795 = vst [vmem:[%s385 + $0x210] sm:$0xff] %v5539
        %5796 = vst [vmem:[%s385 + $0x218] sm:$0xff] %v5540
        %5797 = vst [vmem:[%s385 + $0x220] sm:$0xff] %v5541
        %5798 = vst [vmem:[%s385 + $0x228] sm:$0xff] %v5542
        %5799 = vst [vmem:[%s385 + $0x230] sm:$0xff] %v5543
        %5800 = vst [vmem:[%s385 + $0x238] sm:$0xff] %v5544
        %5801 = vst [vmem:[%s385 + $0x240] sm:$0xff] %v5545
        %5802 = vst [vmem:[%s385 + $0x248] sm:$0xff] %v5546
        %5803 = vst [vmem:[%s385 + $0x250] sm:$0xff] %v5547
        %5804 = vst [vmem:[%s385 + $0x258] sm:$0xff] %v5548
        %5805 = vst [vmem:[%s385 + $0x260] sm:$0xff] %v5549
        %5806 = vst [vmem:[%s385 + $0x268] sm:$0xff] %v5550
        %5807 = vst [vmem:[%s385 + $0x270] sm:$0xff] %v5551
        %5808 = vst [vmem:[%s385 + $0x278] sm:$0xff] %v5552
        %5809 = vst [vmem:[%s385 + $0x280] sm:$0xff] %v5553
        %5810 = vst [vmem:[%s385 + $0x288] sm:$0xff] %v5554
        %5811 = vst [vmem:[%s385 + $0x290] sm:$0xff] %v5555
        %5812 = vst [vmem:[%s385 + $0x298] sm:$0xff] %v5556
        %5813 = vst [vmem:[%s385 + $0x2a0] sm:$0xff] %v5557
        %5814 = vst [vmem:[%s385 + $0x2a8] sm:$0xff] %v5558
        %5815 = vst [vmem:[%s385 + $0x2b0] sm:$0xff] %v5559
        %5816 = vst [vmem:[%s385 + $0x2b8] sm:$0xff] %v5560
        %5817 = vst [vmem:[%s385 + $0x2c0] sm:$0xff] %v5561
        %5818 = vst [vmem:[%s385 + $0x2c8] sm:$0xff] %v5562
        %5819 = vst [vmem:[%s385 + $0x2d0] sm:$0xff] %v5563
        %5820 = vst [vmem:[%s385 + $0x2d8] sm:$0xff] %v5564
        %5821 = vst [vmem:[%s385 + $0x2e0] sm:$0xff] %v5565
        %5822 = vst [vmem:[%s385 + $0x2e8] sm:$0xff] %v5566
        %5823 = vst [vmem:[%s385 + $0x2f0] sm:$0xff] %v5567
        %5824 = vst [vmem:[%s385 + $0x2f8] sm:$0xff] %v5568
        %5825 = vst [vmem:[%s385 + $0x300] sm:$0xff] %v5569
        %5826 = vst [vmem:[%s385 + $0x308] sm:$0xff] %v5570
        %5827 = vst [vmem:[%s385 + $0x310] sm:$0xff] %v5571
        %5828 = vst [vmem:[%s385 + $0x318] sm:$0xff] %v5572
        %5829 = vst [vmem:[%s385 + $0x320] sm:$0xff] %v5573
        %5830 = vst [vmem:[%s385 + $0x328] sm:$0xff] %v5574
        %5831 = vst [vmem:[%s385 + $0x330] sm:$0xff] %v5575
        %5832 = vst [vmem:[%s385 + $0x338] sm:$0xff] %v5576
        %5833 = vst [vmem:[%s385 + $0x340] sm:$0xff] %v5577
        %5834 = vst [vmem:[%s385 + $0x348] sm:$0xff] %v5578
        %5835 = vst [vmem:[%s385 + $0x350] sm:$0xff] %v5579
        %5836 = vst [vmem:[%s385 + $0x358] sm:$0xff] %v5580
        %5837 = vst [vmem:[%s385 + $0x360] sm:$0xff] %v5581
        %5838 = vst [vmem:[%s385 + $0x368] sm:$0xff] %v5582
        %5839 = vst [vmem:[%s385 + $0x370] sm:$0xff] %v5583
        %5840 = vst [vmem:[%s385 + $0x378] sm:$0xff] %v5584
        %5841 = vst [vmem:[%s385 + $0x380] sm:$0xff] %v5585
        %5842 = vst [vmem:[%s385 + $0x388] sm:$0xff] %v5586
        %5843 = vst [vmem:[%s385 + $0x390] sm:$0xff] %v5587
        %5844 = vst [vmem:[%s385 + $0x398] sm:$0xff] %v5588
        %5845 = vst [vmem:[%s385 + $0x3a0] sm:$0xff] %v5589
        %5846 = vst [vmem:[%s385 + $0x3a8] sm:$0xff] %v5590
        %5847 = vst [vmem:[%s385 + $0x3b0] sm:$0xff] %v5591
        %5848 = vst [vmem:[%s385 + $0x3b8] sm:$0xff] %v5592
        %5849 = vst [vmem:[%s385 + $0x3c0] sm:$0xff] %v5593
        %5850 = vst [vmem:[%s385 + $0x3c8] sm:$0xff] %v5594
        %5851 = vst [vmem:[%s385 + $0x3d0] sm:$0xff] %v5595
        %5852 = vst [vmem:[%s385 + $0x3d8] sm:$0xff] %v5596
        %5853 = vst [vmem:[%s385 + $0x3e0] sm:$0xff] %v5597
        %5854 = vst [vmem:[%s385 + $0x3e8] sm:$0xff] %v5598
        %5855 = vst [vmem:[%s385 + $0x3f0] sm:$0xff] %v5599
        %5856 = vst [vmem:[%s385 + $0x3f8] sm:$0xff] %v5600
        %5857 = vst [vmem:[%s385 + $0x400] sm:$0xff] %v5601
        %5858 = vst [vmem:[%s385 + $0x408] sm:$0xff] %v5602
        %5859 = vst [vmem:[%s385 + $0x410] sm:$0xff] %v5603
        %5860 = vst [vmem:[%s385 + $0x418] sm:$0xff] %v5604
        %5861 = vst [vmem:[%s385 + $0x420] sm:$0xff] %v5605
        %5862 = vst [vmem:[%s385 + $0x428] sm:$0xff] %v5606
        %5863 = vst [vmem:[%s385 + $0x430] sm:$0xff] %v5607
        %5864 = vst [vmem:[%s385 + $0x438] sm:$0xff] %v5608
        %5865 = vst [vmem:[%s385 + $0x440] sm:$0xff] %v5609
        %5866 = vst [vmem:[%s385 + $0x448] sm:$0xff] %v5610
        %5867 = vst [vmem:[%s385 + $0x450] sm:$0xff] %v5611
        %5868 = vst [vmem:[%s385 + $0x458] sm:$0xff] %v5612
        %5869 = vst [vmem:[%s385 + $0x460] sm:$0xff] %v5613
        %5870 = vst [vmem:[%s385 + $0x468] sm:$0xff] %v5614
        %5871 = vst [vmem:[%s385 + $0x470] sm:$0xff] %v5615
        %5872 = vst [vmem:[%s385 + $0x478] sm:$0xff] %v5616
        %5873 = vst [vmem:[%s385 + $0x480] sm:$0xff] %v5617
        %5874 = vst [vmem:[%s385 + $0x488] sm:$0xff] %v5618
        %5875 = vst [vmem:[%s385 + $0x490] sm:$0xff] %v5619
        %5876 = vst [vmem:[%s385 + $0x498] sm:$0xff] %v5620
        %5877 = vst [vmem:[%s385 + $0x4a0] sm:$0xff] %v5621
        %5878 = vst [vmem:[%s385 + $0x4a8] sm:$0xff] %v5622
        %5879 = vst [vmem:[%s385 + $0x4b0] sm:$0xff] %v5623
        %5880 = vst [vmem:[%s385 + $0x4b8] sm:$0xff] %v5624
        %5881 = vst [vmem:[%s385 + $0x4c0] sm:$0xff] %v5625
        %5882 = vst [vmem:[%s385 + $0x4c8] sm:$0xff] %v5626
        %5883 = vst [vmem:[%s385 + $0x4d0] sm:$0xff] %v5627
        %5884 = vst [vmem:[%s385 + $0x4d8] sm:$0xff] %v5628
        %5885 = vst [vmem:[%s385 + $0x4e0] sm:$0xff] %v5629
        %5886 = vst [vmem:[%s385 + $0x4e8] sm:$0xff] %v5630
        %5887 = vst [vmem:[%s385 + $0x4f0] sm:$0xff] %v5631
        %5888 = vst [vmem:[%s385 + $0x4f8] sm:$0xff] %v5632
        %5889 = vst [vmem:[%s385 + $0x500] sm:$0xff] %v5633
        %5890 = vst [vmem:[%s385 + $0x508] sm:$0xff] %v5634
        %5891 = vst [vmem:[%s385 + $0x510] sm:$0xff] %v5635
        %5892 = vst [vmem:[%s385 + $0x518] sm:$0xff] %v5636
        %5893 = vst [vmem:[%s385 + $0x520] sm:$0xff] %v5637
        %5894 = vst [vmem:[%s385 + $0x528] sm:$0xff] %v5638
        %5895 = vst [vmem:[%s385 + $0x530] sm:$0xff] %v5639
        %5896 = vst [vmem:[%s385 + $0x538] sm:$0xff] %v5640
        %5897 = vst [vmem:[%s385 + $0x540] sm:$0xff] %v5641
        %5898 = vst [vmem:[%s385 + $0x548] sm:$0xff] %v5642
        %5899 = vst [vmem:[%s385 + $0x550] sm:$0xff] %v5643
        %5900 = vst [vmem:[%s385 + $0x558] sm:$0xff] %v5644
        %5901 = vst [vmem:[%s385 + $0x560] sm:$0xff] %v5645
        %5902 = vst [vmem:[%s385 + $0x568] sm:$0xff] %v5646
        %5903 = vst [vmem:[%s385 + $0x570] sm:$0xff] %v5647
        %5904 = vst [vmem:[%s385 + $0x578] sm:$0xff] %v5648
        %5905 = vst [vmem:[%s385 + $0x580] sm:$0xff] %v5649
        %5906 = vst [vmem:[%s385 + $0x588] sm:$0xff] %v5650
        %5907 = vst [vmem:[%s385 + $0x590] sm:$0xff] %v5651
        %5908 = vst [vmem:[%s385 + $0x598] sm:$0xff] %v5652
        %5909 = vst [vmem:[%s385 + $0x5a0] sm:$0xff] %v5653
        %5910 = vst [vmem:[%s385 + $0x5a8] sm:$0xff] %v5654
        %5911 = vst [vmem:[%s385 + $0x5b0] sm:$0xff] %v5655
        %5912 = vst [vmem:[%s385 + $0x5b8] sm:$0xff] %v5656
        %5913 = vst [vmem:[%s385 + $0x5c0] sm:$0xff] %v5657
        %5914 = vst [vmem:[%s385 + $0x5c8] sm:$0xff] %v5658
        %5915 = vst [vmem:[%s385 + $0x5d0] sm:$0xff] %v5659
        %5916 = vst [vmem:[%s385 + $0x5d8] sm:$0xff] %v5660
        %5917 = vst [vmem:[%s385 + $0x5e0] sm:$0xff] %v5661
        %5918 = vst [vmem:[%s385 + $0x5e8] sm:$0xff] %v5662
        %5919 = vst [vmem:[%s385 + $0x5f0] sm:$0xff] %v5663
        %5920 = vst [vmem:[%s385 + $0x5f8] sm:$0xff] %v5664
        %5921 = vst [vmem:[%s385 + $0x600] sm:$0xff] %v5665
        %5922 = vst [vmem:[%s385 + $0x608] sm:$0xff] %v5666
        %5923 = vst [vmem:[%s385 + $0x610] sm:$0xff] %v5667
        %5924 = vst [vmem:[%s385 + $0x618] sm:$0xff] %v5668
        %5925 = vst [vmem:[%s385 + $0x620] sm:$0xff] %v5669
        %5926 = vst [vmem:[%s385 + $0x628] sm:$0xff] %v5670
        %5927 = vst [vmem:[%s385 + $0x630] sm:$0xff] %v5671
        %5928 = vst [vmem:[%s385 + $0x638] sm:$0xff] %v5672
        %5929 = vst [vmem:[%s385 + $0x640] sm:$0xff] %v5673
        %5930 = vst [vmem:[%s385 + $0x648] sm:$0xff] %v5674
        %5931 = vst [vmem:[%s385 + $0x650] sm:$0xff] %v5675
        %5932 = vst [vmem:[%s385 + $0x658] sm:$0xff] %v5676
        %5933 = vst [vmem:[%s385 + $0x660] sm:$0xff] %v5677
        %5934 = vst [vmem:[%s385 + $0x668] sm:$0xff] %v5678
        %5935 = vst [vmem:[%s385 + $0x670] sm:$0xff] %v5679
        %5936 = vst [vmem:[%s385 + $0x678] sm:$0xff] %v5680
        %5937 = vst [vmem:[%s385 + $0x680] sm:$0xff] %v5681
        %5938 = vst [vmem:[%s385 + $0x688] sm:$0xff] %v5682
        %5939 = vst [vmem:[%s385 + $0x690] sm:$0xff] %v5683
        %5940 = vst [vmem:[%s385 + $0x698] sm:$0xff] %v5684
        %5941 = vst [vmem:[%s385 + $0x6a0] sm:$0xff] %v5685
        %5942 = vst [vmem:[%s385 + $0x6a8] sm:$0xff] %v5686
        %5943 = vst [vmem:[%s385 + $0x6b0] sm:$0xff] %v5687
        %5944 = vst [vmem:[%s385 + $0x6b8] sm:$0xff] %v5688
        %5945 = vst [vmem:[%s385 + $0x6c0] sm:$0xff] %v5689
        %5946 = vst [vmem:[%s385 + $0x6c8] sm:$0xff] %v5690
        %5947 = vst [vmem:[%s385 + $0x6d0] sm:$0xff] %v5691
        %5948 = vst [vmem:[%s385 + $0x6d8] sm:$0xff] %v5692
        %5949 = vst [vmem:[%s385 + $0x6e0] sm:$0xff] %v5693
        %5950 = vst [vmem:[%s385 + $0x6e8] sm:$0xff] %v5694
        %5951 = vst [vmem:[%s385 + $0x6f0] sm:$0xff] %v5695
        %5952 = vst [vmem:[%s385 + $0x6f8] sm:$0xff] %v5696
        %5953 = vst [vmem:[%s385 + $0x700] sm:$0xff] %v5697
        %5954 = vst [vmem:[%s385 + $0x708] sm:$0xff] %v5698
        %5955 = vst [vmem:[%s385 + $0x710] sm:$0xff] %v5699
        %5956 = vst [vmem:[%s385 + $0x718] sm:$0xff] %v5700
        %5957 = vst [vmem:[%s385 + $0x720] sm:$0xff] %v5701
        %5958 = vst [vmem:[%s385 + $0x728] sm:$0xff] %v5702
        %5959 = vst [vmem:[%s385 + $0x730] sm:$0xff] %v5703
        %5960 = vst [vmem:[%s385 + $0x738] sm:$0xff] %v5704
        %5961 = vst [vmem:[%s385 + $0x740] sm:$0xff] %v5705
        %5962 = vst [vmem:[%s385 + $0x748] sm:$0xff] %v5706
        %5963 = vst [vmem:[%s385 + $0x750] sm:$0xff] %v5707
        %5964 = vst [vmem:[%s385 + $0x758] sm:$0xff] %v5708
        %5965 = vst [vmem:[%s385 + $0x760] sm:$0xff] %v5709
        %5966 = vst [vmem:[%s385 + $0x768] sm:$0xff] %v5710
        %5967 = vst [vmem:[%s385 + $0x770] sm:$0xff] %v5711
        %5968 = vst [vmem:[%s385 + $0x778] sm:$0xff] %v5712
        %5969 = vst [vmem:[%s385 + $0x780] sm:$0xff] %v5713
        %5970 = vst [vmem:[%s385 + $0x788] sm:$0xff] %v5714
        %5971 = vst [vmem:[%s385 + $0x790] sm:$0xff] %v5715
        %5972 = vst [vmem:[%s385 + $0x798] sm:$0xff] %v5716
        %5973 = vst [vmem:[%s385 + $0x7a0] sm:$0xff] %v5717
        %5974 = vst [vmem:[%s385 + $0x7a8] sm:$0xff] %v5718
        %5975 = vst [vmem:[%s385 + $0x7b0] sm:$0xff] %v5719
        %5976 = vst [vmem:[%s385 + $0x7b8] sm:$0xff] %v5720
        %5977 = vst [vmem:[%s385 + $0x7c0] sm:$0xff] %v5721
        %5978 = vst [vmem:[%s385 + $0x7c8] sm:$0xff] %v5722
        %5979 = vst [vmem:[%s385 + $0x7d0] sm:$0xff] %v5723
        %5980 = vst [vmem:[%s385 + $0x7d8] sm:$0xff] %v5724
        %5981 = vst [vmem:[%s385 + $0x7e0] sm:$0xff] %v5725
        %5982 = vst [vmem:[%s385 + $0x7e8] sm:$0xff] %v5726
        %5983 = vst [vmem:[%s385 + $0x7f0] sm:$0xff] %v5727
        %5984 = vst [vmem:[%s385 + $0x7f8] sm:$0xff] %v5728
        %s5985 = sand.u32 %s228, 1
        %s5986 = scalar_lea.sflag [#allocation4], %s5985
        %s5987 = sand.u32 %s228, 1
        %s5988 = smul.addr %s5987, 2048
        %s5989 = scalar_lea.vmem [#allocation10], %s5988
        // Predicated region
        $region73: #{fc3layer_forward.1} parent=55 // pred_check
          %p5990 = pneg %p238
        $region74: #{fc3layer_forward.1} parent=55 // pred_check_branch
          %5992 = sbr.rel (%p5990) target = $region76
        $region75: #{fc3layer_forward.1} parent=55 // pred_region
          %s5993 = smul.u32 128, %s26
          %5995 = vsyncadd %s5986, 0
          %s5996 = smul.addr %s5993, 2
          %s5997 = smul.addr %s5996, 8
          %s5998 = scalar_lea.hbm %s9, %s5997
          %s5999 = sshll.u32 %s5989, 4
          %s6000 = int_to_ptr.vmem [resolvable:$true] %s5999
          %s6001 = sshll.u32 %s5998, 4
          %s6002 = int_to_ptr.hbm [resolvable:$true] %s6001
          %6007 = dma.vmem_to_hbm [thread:$0]  %s6000, 32768, %s6002, %s5986, 256, 256, 16
        $region76: #{fc3layer_forward.1} parent=55 // pred_fallthru
          _
      $region56: #{fc3layer_forward.1} parent=5 // pred_fallthru
        _
      %p6008 = scmp.le.s32.totalorder 2, %s21
      // Predicated region
      $region77: #{fc3layer_forward.1} parent=5 // pred_check
        %p6009 = pneg %p6008
      $region78: #{fc3layer_forward.1} parent=5 // pred_check_branch
        %6011 = sbr.rel (%p6009) target = $region80
      $region79: #{fc3layer_forward.1} parent=5 // pred_region
        %s6012 = ssub.s32 %s21, 2
        // Predicated region
        $region81: #{fc3layer_forward.1} parent=79 // pred_check
          %p6013 = pneg %p244
        $region82: #{fc3layer_forward.1} parent=79 // pred_check_branch
          %6015 = sbr.rel (%p6013) target = $region84
        $region83: #{fc3layer_forward.1} parent=79 // pred_region
          %s6016 = sand.u32 %s229, 1
          %s6017 = scalar_lea.sflag [#allocation4], %s6016
          %s6018 = sand.u32 %s229, 1
          %s6019 = smul.addr %s6018, 2048
          %s6020 = scalar_lea.vmem [#allocation10], %s6019
          %6022 = dma.done %s6017, 32768
        $region84: #{fc3layer_forward.1} parent=79 // pred_fallthru
          _
      $region80: #{fc3layer_forward.1} parent=5 // pred_fallthru
        _
    $region6: #{fc3layer_forward.1} parent=1 // loop_footer
      %s25 = sadd.s32 1, %s21
    $region7: #{fc3layer_forward.1} parent=1 // loop_footer_branch
      %20 = sbr.rel target = $region3
    $region8: #{fc3layer_forward.1} parent=1 // loop_exit
      _
    %6023 = vsyncpa [#allocation3], 1
    %s6024 = scalar_lea.sflag [#allocation3], 1
    %6025 = vsyncpa %s6024, 1
    %6026 = vsyncpa [#allocation6], 1
    %6027 = vsyncpa [#allocation9], 1
    %6028 = vsyncpa [#allocation4], 1
    %s6029 = scalar_lea.sflag [#allocation4], 1
    %6030 = vsyncpa %s6029, 1

</llo_original>
